<compile_context>
chip_gen: v7x
topology: tpu7x:2x2x1
jax: 0.10.0
libtpu: 0.0.40
codegen_flags: <defaults>
</compile_context>

<pallas_src>
import functools

import jax
import jax.numpy as jnp
from jax import lax
from jax.experimental import pallas as pl
from jax.experimental.pallas import tpu as pltpu

_VMEM = pl.BlockSpec(memory_space=pltpu.MemorySpace.VMEM)


# --------------------------- fused forward kernel ---------------------------
def _build_sgcn_kernel(n_deep, e_pos, e_neg, lamb):
    m_total = 3 * (e_pos + e_neg)          # rows of the regression feature matrix

    def dot32(a, b):
        return jnp.dot(a, b, preferred_element_type=jnp.float32)

    def kernel(*refs):
        refs = list(refs)
        assert len(refs) == 28 + 8 * n_deep
        (x_ref, a_pos_ref, a_neg_ref, a_pos_sl_ref, a_neg_sl_ref,
         wbp_agg, wbp_self, bbp, wbn_agg, wbn_self, bbn) = refs[:11]
        pos = 11
        deep_refs = []
        for _ in range(n_deep):
            deep_refs.append(tuple(refs[pos:pos + 8]))
            pos += 8
        (wr_left, wr_right, b_reg,
         oh_ip, oh_jp, oh_kp, oh_in, oh_jn, oh_kn,
         t_pos, t_neg, t_sni, t_snj, t_spi, t_spj,
         loss_ref, z_ref) = refs[pos:]

        def norm_tanh(y):
            # tanh(F.normalize(y, p=2, dim=-1))  (eps = 1e-12)
            ss = jnp.sum(y * y, axis=-1, keepdims=True)
            inv = lax.rsqrt(jnp.maximum(ss, 1e-24))
            return jnp.tanh(y * inv)

        x = x_ref[...]

        # ---- base signed-SAGE layers (mean aggregation, no self loops) ----
        h_pos = norm_tanh(dot32(dot32(a_pos_ref[...], x), wbp_agg[...]) +
                          dot32(x, wbp_self[...]) + bbp[...])
        h_neg = norm_tanh(dot32(dot32(a_neg_ref[...], x), wbn_agg[...]) +
                          dot32(x, wbn_self[...]) + bbn[...])

        # ---- deep signed-SAGE layers (mean aggregation with self loops) ----
        if deep_refs:
            a_pos_sl = a_pos_sl_ref[...]
            a_neg_sl = a_neg_sl_ref[...]
            for (wp1, wp2, wp3, bp, wn1, wn2, wn3, bn) in deep_refs:
                agg_pp = dot32(a_pos_sl, h_pos)   # positive edges on pos embedding
                agg_pn = dot32(a_pos_sl, h_neg)   # positive edges on neg embedding
                agg_np = dot32(a_neg_sl, h_pos)   # negative edges on pos embedding
                agg_nn = dot32(a_neg_sl, h_neg)   # negative edges on neg embedding
                h_pos_new = norm_tanh(dot32(agg_pp, wp1[...]) +
                                      dot32(agg_nn, wp2[...]) +
                                      dot32(h_pos, wp3[...]) + bp[...])
                h_neg_new = norm_tanh(dot32(agg_pn, wn1[...]) +
                                      dot32(agg_np, wn2[...]) +
                                      dot32(h_neg, wn3[...]) + bn[...])
                h_pos, h_neg = h_pos_new, h_neg_new

        # ---- z = [h_pos | h_neg], written once, kept in VMEM for the losses ----
        z = jnp.concatenate([h_pos, h_neg], axis=-1)
        z_ref[...] = z

        # ---- z[i]/z[j]/z[k] gathers as one-hot selection matmuls (in VMEM) ----
        def gather(oh_ref):
            return dot32(oh_ref[...], z)          # (E, 2*d_last)

        zp_i, zp_j, zp_k = gather(oh_ip), gather(oh_jp), gather(oh_kp)
        zn_i, zn_j, zn_k = gather(oh_in), gather(oh_jn), gather(oh_kn)

        def sqd(a, b):                            # ||a - b||^2 per row -> (E,1)
            d = a - b
            return jnp.sum(d * d, axis=-1, keepdims=True)

        # embedding (triplet hinge) losses
        pos_hinge = jnp.maximum(sqd(zp_i, zp_j) - sqd(zp_i, zp_k), 0.0)
        neg_hinge = jnp.maximum(sqd(zn_i, zn_k) - sqd(zn_i, zn_j), 0.0)
        loss_pos = jnp.sum(pos_hinge, axis=0, keepdims=True) / e_pos     # (1,1)
        loss_neg = jnp.sum(neg_hinge, axis=0, keepdims=True) / e_neg     # (1,1)

        # ---- regression head: features = [left | right] rows of z
        #      => logits = left @ W[:2d] + right @ W[2d:] + b
        wl = wr_left[...]
        wr = wr_right[...]
        br = b_reg[...]

        def block_nll(left, right, t_ref):
            logits = dot32(left, wl) + dot32(right, wr) + br
            m = jnp.max(logits, axis=-1, keepdims=True)
            sh = logits - m
            lse = jnp.log(jnp.sum(jnp.exp(sh), axis=-1, keepdims=True))
            logsoft = sh - lse                    # log_softmax(dim=1)
            nll = -jnp.sum(t_ref[...] * logsoft, axis=-1, keepdims=True)
            return jnp.sum(nll, axis=0, keepdims=True)                   # (1,1)

        nll_sum = (block_nll(zp_i, zp_j, t_pos) +     # pos pairs
                   block_nll(zn_i, zn_j, t_neg) +     # neg pairs
                   block_nll(zn_i, zn_k, t_sni) +     # surrogate neg i
                   block_nll(zn_j, zn_k, t_snj) +     # surrogate neg j
                   block_nll(zp_i, zp_k, t_spi) +     # surrogate pos i
                   block_nll(zp_j, zp_k, t_spj))      # surrogate pos j
        reg_loss = nll_sum / m_total                  # NLL mean

        loss_ref[...] = reg_loss + lamb * (loss_pos + loss_neg)

    return kernel


# ------------------------------- glue (JAX) --------------------------------
def _build_adjacencies(edges, num_nodes):
    """Row-normalised dense adjacency: A @ X == scatter_mean(X[col], row).

    Returns (A, A_with_self_loops); the self-loop variant is derived from the
    same scatter (add identity, bump degree) instead of a second scatter."""
    row, col = edges[0], edges[1]
    w = (row != col).astype(jnp.float32)                  # remove_self_loops
    counts = jnp.zeros((num_nodes, num_nodes), jnp.float32).at[row, col].add(w)
    deg = jnp.sum(counts, axis=1, keepdims=True)
    a = counts / jnp.maximum(deg, 1.0)
    a_sl = (counts + jnp.eye(num_nodes, dtype=jnp.float32)) / jnp.maximum(deg + 1.0, 1.0)
    return a, a_sl


@functools.partial(jax.jit, static_argnames=("lamb",))
def sgcn_forward(params, X, positive_edges, negative_edges, target, sampling_key,
                 lamb=1.0):
    N, feat_dim = X.shape
    neurons = [params["w_base_pos"].shape[1]] + [w.shape[1] for w, _ in params["deep_pos"]]
    d_last = neurons[-1]
    n_deep = len(neurons) - 1
    e_pos = positive_edges.shape[1]
    e_neg = negative_edges.shape[1]

    a_pos, a_pos_sl = _build_adjacencies(positive_edges, N)
    a_neg, a_neg_sl = _build_adjacencies(negative_edges, N)

    # structured_negative_sampling (stochastic): i = row, j = col, k = random node.
    # TODO(synk): rejection resampling so that (i, k) is never an existing edge is
    # omitted; the op is random so exact torch reproduction is not possible anyway.
    kp, kn = jax.random.split(sampling_key)
    i_p, j_p = positive_edges[0], positive_edges[1]
    k_p = jax.random.randint(kp, (e_pos,), 0, N)
    i_n, j_n = negative_edges[0], negative_edges[1]
    k_n = jax.random.randint(kn, (e_neg,), 0, N)

    onehot = lambda idx: jax.nn.one_hot(idx, N, dtype=jnp.float32)
    selectors = [onehot(i_p), onehot(j_p), onehot(k_p),
                 onehot(i_n), onehot(j_n), onehot(k_n)]

    # one-hot targets split per feature block (pos, neg, surr_neg_i/j, surr_pos_i/j)
    t_onehot = jax.nn.one_hot(target, 3, dtype=jnp.float32)
    sizes = (e_pos, e_neg, e_neg, e_neg, e_pos, e_pos)
    t_blocks, off = [], 0
    for s in sizes:
        t_blocks.append(t_onehot[off:off + s])
        off += s

    # split every "concat @ W" weight in XLA so the kernel never slices a Ref
    wbp, wbn = params["w_base_pos"], params["w_base_neg"]
    inputs = [X, a_pos, a_neg, a_pos_sl, a_neg_sl,
              wbp[:feat_dim], wbp[feat_dim:], params["b_base_pos"].reshape(1, -1),
              wbn[:feat_dim], wbn[feat_dim:], params["b_base_neg"].reshape(1, -1)]
    for li, ((wp, bp), (wn, bn)) in enumerate(zip(params["deep_pos"], params["deep_neg"])):
        n_prev = neurons[li]
        inputs += [wp[:n_prev], wp[n_prev:2 * n_prev], wp[2 * n_prev:], bp.reshape(1, -1),
                   wn[:n_prev], wn[n_prev:2 * n_prev], wn[2 * n_prev:], bn.reshape(1, -1)]
    w_reg = params["regression_weights"]
    inputs += [w_reg[:2 * d_last], w_reg[2 * d_last:],
               params["regression_bias"].reshape(1, -1)]
    inputs += selectors + t_blocks

    kernel = _build_sgcn_kernel(n_deep, e_pos, e_neg, float(lamb))
    loss, z = pl.pallas_call(
        kernel,
        out_shape=(jax.ShapeDtypeStruct((1, 1), jnp.float32),
                   jax.ShapeDtypeStruct((N, 2 * d_last), jnp.float32)),
        in_specs=[_VMEM] * len(inputs),
        out_specs=(_VMEM, _VMEM),
    )(*inputs)
    return loss[0, 0], z


# ------------------------- deterministic init ------------------------------
def init_params(key, feat_dim, neurons):
    ks = jax.random.split(key, 8)

    def unif(k, shape, size):
        bound = 1.0 / jnp.sqrt(float(size))
        return jax.random.uniform(k, shape, jnp.float32, -bound, bound)

    params = {}
    in_base = 2 * feat_dim
    params["w_base_pos"] = unif(ks[0], (in_base, neurons[0]), in_base)
    params["b_base_pos"] = unif(ks[1], (neurons[0],), in_base)
    params["w_base_neg"] = unif(ks[2], (in_base, neurons[0]), in_base)
    params["b_base_neg"] = unif(ks[3], (neurons[0],), in_base)

    deep_pos, deep_neg = [], []
    dk = jax.random.split(ks[4], 4 * max(len(neurons) - 1, 1))
    for i in range(1, len(neurons)):
        in_d = 3 * neurons[i - 1]
        deep_pos.append((unif(dk[4 * (i - 1) + 0], (in_d, neurons[i]), in_d),
                         unif(dk[4 * (i - 1) + 1], (neurons[i],), in_d)))
        deep_neg.append((unif(dk[4 * (i - 1) + 2], (in_d, neurons[i]), in_d),
                         unif(dk[4 * (i - 1) + 3], (neurons[i],), in_d)))
    params["deep_pos"] = deep_pos
    params["deep_neg"] = deep_neg

    fan_in, fan_out = 4 * neurons[-1], 3
    std = jnp.sqrt(2.0 / (fan_in + fan_out))              # xavier_normal_
    params["regression_weights"] = std * jax.random.normal(
        ks[5], (fan_in, fan_out), jnp.float32)
    params["regression_bias"] = jnp.zeros((3,), jnp.float32)
    return params


if __name__ == "__main__":
    key = jax.random.PRNGKey(0)
    k_x, k_pe, k_ne, k_params, k_samp = jax.random.split(key, 5)

    N, F = 32, 16
    neurons = [32, 16]
    E_pos, E_neg = 20, 16

    X = jax.random.normal(k_x, (N, F), jnp.float32)

    def make_edges(k, e):
        kr, kc = jax.random.split(k)
        row = jax.random.randint(kr, (e,), 0, N)
        col = jax.random.randint(kc, (e,), 0, N)
        col = jnp.where(col == row, (col + 1) % N, col)      # no self loops
        return jnp.stack([row, col]).astype(jnp.int32)

    positive_edges = make_edges(k_pe, E_pos)
    negative_edges = make_edges(k_ne, E_neg)

    # target: 0 for pos pairs, 1 for neg pairs, 2 for all surrogate pairs
    target = jnp.concatenate([
        jnp.zeros((E_pos,), jnp.int32),
        jnp.ones((E_neg,), jnp.int32),
        jnp.full((2 * E_neg + 2 * E_pos,), 2, jnp.int32),
    ])

    params = init_params(k_params, F, neurons)

    loss, z = sgcn_forward(params, X, positive_edges, negative_edges, target,
                           k_samp, lamb=1.0)
    jax.block_until_ready((loss, z))
    assert z.shape == (N, 2 * neurons[-1])
    assert jnp.isfinite(loss)
    print("KERNEL_OK")
</pallas_src>

<mosaic_0001>
module attributes {stable_mosaic.version = 11 : i64} {
  func.func private @main(%arg0: i32) attributes {dimension_semantics = [#tpu.dimension_semantics<core_parallel>], iteration_bounds = array<i64: 2>, tpu.core_type = #tpu.core_type<sc_scalar_subcore>, window_params = []} {
    return
  }
}

module attributes {stable_mosaic.version = 11 : i64} {
  func.func private @main(%arg0: i32) attributes {dimension_semantics = [#tpu.dimension_semantics<core_parallel>], iteration_bounds = array<i64: 2>, tpu.core_type = #tpu.core_type<sc_scalar_subcore>, window_params = []} {
    return
  }
}

module attributes {stable_mosaic.version = 11 : i64} {
  func.func @kernel(%arg0: memref<32x16xf32, #tpu.memory_space<vmem>>, %arg1: memref<32x32xf32, #tpu.memory_space<vmem>>, %arg2: memref<32x32xf32, #tpu.memory_space<vmem>>, %arg3: memref<32x32xf32, #tpu.memory_space<vmem>>, %arg4: memref<32x32xf32, #tpu.memory_space<vmem>>, %arg5: memref<16x32xf32, #tpu.memory_space<vmem>>, %arg6: memref<16x32xf32, #tpu.memory_space<vmem>>, %arg7: memref<1x32xf32, #tpu.memory_space<vmem>>, %arg8: memref<16x32xf32, #tpu.memory_space<vmem>>, %arg9: memref<16x32xf32, #tpu.memory_space<vmem>>, %arg10: memref<1x32xf32, #tpu.memory_space<vmem>>, %arg11: memref<32x16xf32, #tpu.memory_space<vmem>>, %arg12: memref<32x16xf32, #tpu.memory_space<vmem>>, %arg13: memref<32x16xf32, #tpu.memory_space<vmem>>, %arg14: memref<1x16xf32, #tpu.memory_space<vmem>>, %arg15: memref<32x16xf32, #tpu.memory_space<vmem>>, %arg16: memref<32x16xf32, #tpu.memory_space<vmem>>, %arg17: memref<32x16xf32, #tpu.memory_space<vmem>>, %arg18: memref<1x16xf32, #tpu.memory_space<vmem>>, %arg19: memref<32x3xf32, #tpu.memory_space<vmem>>, %arg20: memref<32x3xf32, #tpu.memory_space<vmem>>, %arg21: memref<1x3xf32, #tpu.memory_space<vmem>>, %arg22: memref<20x32xf32, #tpu.memory_space<vmem>>, %arg23: memref<20x32xf32, #tpu.memory_space<vmem>>, %arg24: memref<20x32xf32, #tpu.memory_space<vmem>>, %arg25: memref<16x32xf32, #tpu.memory_space<vmem>>, %arg26: memref<16x32xf32, #tpu.memory_space<vmem>>, %arg27: memref<16x32xf32, #tpu.memory_space<vmem>>, %arg28: memref<20x3xf32, #tpu.memory_space<vmem>>, %arg29: memref<16x3xf32, #tpu.memory_space<vmem>>, %arg30: memref<16x3xf32, #tpu.memory_space<vmem>>, %arg31: memref<16x3xf32, #tpu.memory_space<vmem>>, %arg32: memref<20x3xf32, #tpu.memory_space<vmem>>, %arg33: memref<20x3xf32, #tpu.memory_space<vmem>>, %arg34: memref<1x1xf32, #tpu.memory_space<vmem>>, %arg35: memref<32x32xf32, #tpu.memory_space<vmem>>) attributes {dimension_semantics = [], scalar_prefetch = 0 : i64, scratch_operands = 0 : i64, tpu.core_type = #tpu.core_type<tc>} {
    %c0 = arith.constant 0 : index
    %c0_0 = arith.constant 0 : index
    %0 = vector.load %arg0[%c0, %c0_0] : memref<32x16xf32, #tpu.memory_space<vmem>>, vector<32x16xf32>
    %c0_1 = arith.constant 0 : index
    %c0_2 = arith.constant 0 : index
    %1 = vector.load %arg1[%c0_1, %c0_2] : memref<32x32xf32, #tpu.memory_space<vmem>>, vector<32x32xf32>
    %cst = arith.constant dense<0.000000e+00> : vector<32x16xf32>
    %2 = tpu.matmul %1, %0, %cst {dimension_numbers = #tpu.dot_dimension_numbers<[1], [0], [0], [1], [0, 0, 1, 1], [], []>} : vector<32x32xf32>, vector<32x16xf32>, vector<32x16xf32> -> vector<32x16xf32>
    %c0_3 = arith.constant 0 : index
    %c0_4 = arith.constant 0 : index
    %3 = vector.load %arg5[%c0_3, %c0_4] : memref<16x32xf32, #tpu.memory_space<vmem>>, vector<16x32xf32>
    %cst_5 = arith.constant dense<0.000000e+00> : vector<32x32xf32>
    %4 = tpu.matmul %2, %3, %cst_5 {dimension_numbers = #tpu.dot_dimension_numbers<[1], [0], [0], [1], [0, 0, 1, 1], [], []>} : vector<32x16xf32>, vector<16x32xf32>, vector<32x32xf32> -> vector<32x32xf32>
    %c0_6 = arith.constant 0 : index
    %c0_7 = arith.constant 0 : index
    %5 = vector.load %arg6[%c0_6, %c0_7] : memref<16x32xf32, #tpu.memory_space<vmem>>, vector<16x32xf32>
    %cst_8 = arith.constant dense<0.000000e+00> : vector<32x32xf32>
    %6 = tpu.matmul %0, %5, %cst_8 {dimension_numbers = #tpu.dot_dimension_numbers<[1], [0], [0], [1], [0, 0, 1, 1], [], []>} : vector<32x16xf32>, vector<16x32xf32>, vector<32x32xf32> -> vector<32x32xf32>
    %7 = arith.addf %4, %6 : vector<32x32xf32>
    %c0_9 = arith.constant 0 : index
    %c0_10 = arith.constant 0 : index
    %8 = vector.load %arg7[%c0_9, %c0_10] : memref<1x32xf32, #tpu.memory_space<vmem>>, vector<1x32xf32>
    %9 = vector.broadcast %8 : vector<1x32xf32> to vector<32x32xf32>
    %10 = arith.addf %7, %9 : vector<32x32xf32>
    %11 = arith.mulf %10, %10 : vector<32x32xf32>
    %cst_11 = arith.constant dense<0.000000e+00> : vector<32xf32>
    %12 = vector.multi_reduction <add>, %11, %cst_11 [1] : vector<32x32xf32> to vector<32xf32>
    %13 = vector.shape_cast %12 : vector<32xf32> to vector<32x1xf32>
    %cst_12 = arith.constant 1.000000e-24 : f32
    %14 = vector.broadcast %cst_12 : f32 to vector<32x1xf32>
    %15 = arith.maximumf %13, %14 : vector<32x1xf32>
    %16 = math.rsqrt %15 : vector<32x1xf32>
    %17 = vector.broadcast %16 : vector<32x1xf32> to vector<32x32xf32>
    %18 = arith.mulf %10, %17 : vector<32x32xf32>
    %19 = math.tanh %18 : vector<32x32xf32>
    %c0_13 = arith.constant 0 : index
    %c0_14 = arith.constant 0 : index
    %20 = vector.load %arg2[%c0_13, %c0_14] : memref<32x32xf32, #tpu.memory_space<vmem>>, vector<32x32xf32>
    %cst_15 = arith.constant dense<0.000000e+00> : vector<32x16xf32>
    %21 = tpu.matmul %20, %0, %cst_15 {dimension_numbers = #tpu.dot_dimension_numbers<[1], [0], [0], [1], [0, 0, 1, 1], [], []>} : vector<32x32xf32>, vector<32x16xf32>, vector<32x16xf32> -> vector<32x16xf32>
    %c0_16 = arith.constant 0 : index
    %c0_17 = arith.constant 0 : index
    %22 = vector.load %arg8[%c0_16, %c0_17] : memref<16x32xf32, #tpu.memory_space<vmem>>, vector<16x32xf32>
    %cst_18 = arith.constant dense<0.000000e+00> : vector<32x32xf32>
    %23 = tpu.matmul %21, %22, %cst_18 {dimension_numbers = #tpu.dot_dimension_numbers<[1], [0], [0], [1], [0, 0, 1, 1], [], []>} : vector<32x16xf32>, vector<16x32xf32>, vector<32x32xf32> -> vector<32x32xf32>
    %c0_19 = arith.constant 0 : index
    %c0_20 = arith.constant 0 : index
    %24 = vector.load %arg9[%c0_19, %c0_20] : memref<16x32xf32, #tpu.memory_space<vmem>>, vector<16x32xf32>
    %cst_21 = arith.constant dense<0.000000e+00> : vector<32x32xf32>
    %25 = tpu.matmul %0, %24, %cst_21 {dimension_numbers = #tpu.dot_dimension_numbers<[1], [0], [0], [1], [0, 0, 1, 1], [], []>} : vector<32x16xf32>, vector<16x32xf32>, vector<32x32xf32> -> vector<32x32xf32>
    %26 = arith.addf %23, %25 : vector<32x32xf32>
    %c0_22 = arith.constant 0 : index
    %c0_23 = arith.constant 0 : index
    %27 = vector.load %arg10[%c0_22, %c0_23] : memref<1x32xf32, #tpu.memory_space<vmem>>, vector<1x32xf32>
    %28 = vector.broadcast %27 : vector<1x32xf32> to vector<32x32xf32>
    %29 = arith.addf %26, %28 : vector<32x32xf32>
    %30 = arith.mulf %29, %29 : vector<32x32xf32>
    %cst_24 = arith.constant dense<0.000000e+00> : vector<32xf32>
    %31 = vector.multi_reduction <add>, %30, %cst_24 [1] : vector<32x32xf32> to vector<32xf32>
    %32 = vector.shape_cast %31 : vector<32xf32> to vector<32x1xf32>
    %cst_25 = arith.constant 1.000000e-24 : f32
    %33 = vector.broadcast %cst_25 : f32 to vector<32x1xf32>
    %34 = arith.maximumf %32, %33 : vector<32x1xf32>
    %35 = math.rsqrt %34 : vector<32x1xf32>
    %36 = vector.broadcast %35 : vector<32x1xf32> to vector<32x32xf32>
    %37 = arith.mulf %29, %36 : vector<32x32xf32>
    %38 = math.tanh %37 : vector<32x32xf32>
    %c0_26 = arith.constant 0 : index
    %c0_27 = arith.constant 0 : index
    %39 = vector.load %arg3[%c0_26, %c0_27] : memref<32x32xf32, #tpu.memory_space<vmem>>, vector<32x32xf32>
    %c0_28 = arith.constant 0 : index
    %c0_29 = arith.constant 0 : index
    %40 = vector.load %arg4[%c0_28, %c0_29] : memref<32x32xf32, #tpu.memory_space<vmem>>, vector<32x32xf32>
    %cst_30 = arith.constant dense<0.000000e+00> : vector<32x32xf32>
    %41 = tpu.matmul %39, %19, %cst_30 {dimension_numbers = #tpu.dot_dimension_numbers<[1], [0], [0], [1], [0, 0, 1, 1], [], []>} : vector<32x32xf32>, vector<32x32xf32>, vector<32x32xf32> -> vector<32x32xf32>
    %cst_31 = arith.constant dense<0.000000e+00> : vector<32x32xf32>
    %42 = tpu.matmul %39, %38, %cst_31 {dimension_numbers = #tpu.dot_dimension_numbers<[1], [0], [0], [1], [0, 0, 1, 1], [], []>} : vector<32x32xf32>, vector<32x32xf32>, vector<32x32xf32> -> vector<32x32xf32>
    %cst_32 = arith.constant dense<0.000000e+00> : vector<32x32xf32>
    %43 = tpu.matmul %40, %19, %cst_32 {dimension_numbers = #tpu.dot_dimension_numbers<[1], [0], [0], [1], [0, 0, 1, 1], [], []>} : vector<32x32xf32>, vector<32x32xf32>, vector<32x32xf32> -> vector<32x32xf32>
    %cst_33 = arith.constant dense<0.000000e+00> : vector<32x32xf32>
    %44 = tpu.matmul %40, %38, %cst_33 {dimension_numbers = #tpu.dot_dimension_numbers<[1], [0], [0], [1], [0, 0, 1, 1], [], []>} : vector<32x32xf32>, vector<32x32xf32>, vector<32x32xf32> -> vector<32x32xf32>
    %c0_34 = arith.constant 0 : index
    %c0_35 = arith.constant 0 : index
    %45 = vector.load %arg11[%c0_34, %c0_35] : memref<32x16xf32, #tpu.memory_space<vmem>>, vector<32x16xf32>
    %cst_36 = arith.constant dense<0.000000e+00> : vector<32x16xf32>
    %46 = tpu.matmul %41, %45, %cst_36 {dimension_numbers = #tpu.dot_dimension_numbers<[1], [0], [0], [1], [0, 0, 1, 1], [], []>} : vector<32x32xf32>, vector<32x16xf32>, vector<32x16xf32> -> vector<32x16xf32>
    %c0_37 = arith.constant 0 : index
    %c0_38 = arith.constant 0 : index
    %47 = vector.load %arg12[%c0_37, %c0_38] : memref<32x16xf32, #tpu.memory_space<vmem>>, vector<32x16xf32>
    %cst_39 = arith.constant dense<0.000000e+00> : vector<32x16xf32>
    %48 = tpu.matmul %44, %47, %cst_39 {dimension_numbers = #tpu.dot_dimension_numbers<[1], [0], [0], [1], [0, 0, 1, 1], [], []>} : vector<32x32xf32>, vector<32x16xf32>, vector<32x16xf32> -> vector<32x16xf32>
    %49 = arith.addf %46, %48 : vector<32x16xf32>
    %c0_40 = arith.constant 0 : index
    %c0_41 = arith.constant 0 : index
    %50 = vector.load %arg13[%c0_40, %c0_41] : memref<32x16xf32, #tpu.memory_space<vmem>>, vector<32x16xf32>
    %cst_42 = arith.constant dense<0.000000e+00> : vector<32x16xf32>
    %51 = tpu.matmul %19, %50, %cst_42 {dimension_numbers = #tpu.dot_dimension_numbers<[1], [0], [0], [1], [0, 0, 1, 1], [], []>} : vector<32x32xf32>, vector<32x16xf32>, vector<32x16xf32> -> vector<32x16xf32>
    %52 = arith.addf %49, %51 : vector<32x16xf32>
    %c0_43 = arith.constant 0 : index
    %c0_44 = arith.constant 0 : index
    %53 = vector.load %arg14[%c0_43, %c0_44] : memref<1x16xf32, #tpu.memory_space<vmem>>, vector<1x16xf32>
    %54 = vector.broadcast %53 : vector<1x16xf32> to vector<32x16xf32>
    %55 = arith.addf %52, %54 : vector<32x16xf32>
    %56 = arith.mulf %55, %55 : vector<32x16xf32>
    %cst_45 = arith.constant dense<0.000000e+00> : vector<32xf32>
    %57 = vector.multi_reduction <add>, %56, %cst_45 [1] : vector<32x16xf32> to vector<32xf32>
    %58 = vector.shape_cast %57 : vector<32xf32> to vector<32x1xf32>
    %cst_46 = arith.constant 1.000000e-24 : f32
    %59 = vector.broadcast %cst_46 : f32 to vector<32x1xf32>
    %60 = arith.maximumf %58, %59 : vector<32x1xf32>
    %61 = math.rsqrt %60 : vector<32x1xf32>
    %62 = vector.broadcast %61 : vector<32x1xf32> to vector<32x16xf32>
    %63 = arith.mulf %55, %62 : vector<32x16xf32>
    %64 = math.tanh %63 : vector<32x16xf32>
    %c0_47 = arith.constant 0 : index
    %c0_48 = arith.constant 0 : index
    %65 = vector.load %arg15[%c0_47, %c0_48] : memref<32x16xf32, #tpu.memory_space<vmem>>, vector<32x16xf32>
    %cst_49 = arith.constant dense<0.000000e+00> : vector<32x16xf32>
    %66 = tpu.matmul %42, %65, %cst_49 {dimension_numbers = #tpu.dot_dimension_numbers<[1], [0], [0], [1], [0, 0, 1, 1], [], []>} : vector<32x32xf32>, vector<32x16xf32>, vector<32x16xf32> -> vector<32x16xf32>
    %c0_50 = arith.constant 0 : index
    %c0_51 = arith.constant 0 : index
    %67 = vector.load %arg16[%c0_50, %c0_51] : memref<32x16xf32, #tpu.memory_space<vmem>>, vector<32x16xf32>
    %cst_52 = arith.constant dense<0.000000e+00> : vector<32x16xf32>
    %68 = tpu.matmul %43, %67, %cst_52 {dimension_numbers = #tpu.dot_dimension_numbers<[1], [0], [0], [1], [0, 0, 1, 1], [], []>} : vector<32x32xf32>, vector<32x16xf32>, vector<32x16xf32> -> vector<32x16xf32>
    %69 = arith.addf %66, %68 : vector<32x16xf32>
    %c0_53 = arith.constant 0 : index
    %c0_54 = arith.constant 0 : index
    %70 = vector.load %arg17[%c0_53, %c0_54] : memref<32x16xf32, #tpu.memory_space<vmem>>, vector<32x16xf32>
    %cst_55 = arith.constant dense<0.000000e+00> : vector<32x16xf32>
    %71 = tpu.matmul %38, %70, %cst_55 {dimension_numbers = #tpu.dot_dimension_numbers<[1], [0], [0], [1], [0, 0, 1, 1], [], []>} : vector<32x32xf32>, vector<32x16xf32>, vector<32x16xf32> -> vector<32x16xf32>
    %72 = arith.addf %69, %71 : vector<32x16xf32>
    %c0_56 = arith.constant 0 : index
    %c0_57 = arith.constant 0 : index
    %73 = vector.load %arg18[%c0_56, %c0_57] : memref<1x16xf32, #tpu.memory_space<vmem>>, vector<1x16xf32>
    %74 = vector.broadcast %73 : vector<1x16xf32> to vector<32x16xf32>
    %75 = arith.addf %72, %74 : vector<32x16xf32>
    %76 = arith.mulf %75, %75 : vector<32x16xf32>
    %cst_58 = arith.constant dense<0.000000e+00> : vector<32xf32>
    %77 = vector.multi_reduction <add>, %76, %cst_58 [1] : vector<32x16xf32> to vector<32xf32>
    %78 = vector.shape_cast %77 : vector<32xf32> to vector<32x1xf32>
    %cst_59 = arith.constant 1.000000e-24 : f32
    %79 = vector.broadcast %cst_59 : f32 to vector<32x1xf32>
    %80 = arith.maximumf %78, %79 : vector<32x1xf32>
    %81 = math.rsqrt %80 : vector<32x1xf32>
    %82 = vector.broadcast %81 : vector<32x1xf32> to vector<32x16xf32>
    %83 = arith.mulf %75, %82 : vector<32x16xf32>
    %84 = math.tanh %83 : vector<32x16xf32>
    %85 = tpu.concatenate %64, %84 in 1 : vector<32x16xf32>, vector<32x16xf32> -> vector<32x32xf32>
    %c0_60 = arith.constant 0 : index
    %c0_61 = arith.constant 0 : index
    %86 = vector.load %arg35[%c0_60, %c0_61] : memref<32x32xf32, #tpu.memory_space<vmem>>, vector<32x32xf32>
    tpu.vector_store %arg35[%c0_60, %c0_61], %85 {strides = array<i32>} : memref<32x32xf32, #tpu.memory_space<vmem>>, vector<32x32xf32>,
    %c0_62 = arith.constant 0 : index
    %c0_63 = arith.constant 0 : index
    %87 = vector.load %arg22[%c0_62, %c0_63] : memref<20x32xf32, #tpu.memory_space<vmem>>, vector<20x32xf32>
    %cst_64 = arith.constant dense<0.000000e+00> : vector<20x32xf32>
    %88 = tpu.matmul %87, %85, %cst_64 {dimension_numbers = #tpu.dot_dimension_numbers<[1], [0], [0], [1], [0, 0, 1, 1], [], []>} : vector<20x32xf32>, vector<32x32xf32>, vector<20x32xf32> -> vector<20x32xf32>
    %c0_65 = arith.constant 0 : index
    %c0_66 = arith.constant 0 : index
    %89 = vector.load %arg23[%c0_65, %c0_66] : memref<20x32xf32, #tpu.memory_space<vmem>>, vector<20x32xf32>
    %cst_67 = arith.constant dense<0.000000e+00> : vector<20x32xf32>
    %90 = tpu.matmul %89, %85, %cst_67 {dimension_numbers = #tpu.dot_dimension_numbers<[1], [0], [0], [1], [0, 0, 1, 1], [], []>} : vector<20x32xf32>, vector<32x32xf32>, vector<20x32xf32> -> vector<20x32xf32>
    %c0_68 = arith.constant 0 : index
    %c0_69 = arith.constant 0 : index
    %91 = vector.load %arg24[%c0_68, %c0_69] : memref<20x32xf32, #tpu.memory_space<vmem>>, vector<20x32xf32>
    %cst_70 = arith.constant dense<0.000000e+00> : vector<20x32xf32>
    %92 = tpu.matmul %91, %85, %cst_70 {dimension_numbers = #tpu.dot_dimension_numbers<[1], [0], [0], [1], [0, 0, 1, 1], [], []>} : vector<20x32xf32>, vector<32x32xf32>, vector<20x32xf32> -> vector<20x32xf32>
    %c0_71 = arith.constant 0 : index
    %c0_72 = arith.constant 0 : index
    %93 = vector.load %arg25[%c0_71, %c0_72] : memref<16x32xf32, #tpu.memory_space<vmem>>, vector<16x32xf32>
    %cst_73 = arith.constant dense<0.000000e+00> : vector<16x32xf32>
    %94 = tpu.matmul %93, %85, %cst_73 {dimension_numbers = #tpu.dot_dimension_numbers<[1], [0], [0], [1], [0, 0, 1, 1], [], []>} : vector<16x32xf32>, vector<32x32xf32>, vector<16x32xf32> -> vector<16x32xf32>
    %c0_74 = arith.constant 0 : index
    %c0_75 = arith.constant 0 : index
    %95 = vector.load %arg26[%c0_74, %c0_75] : memref<16x32xf32, #tpu.memory_space<vmem>>, vector<16x32xf32>
    %cst_76 = arith.constant dense<0.000000e+00> : vector<16x32xf32>
    %96 = tpu.matmul %95, %85, %cst_76 {dimension_numbers = #tpu.dot_dimension_numbers<[1], [0], [0], [1], [0, 0, 1, 1], [], []>} : vector<16x32xf32>, vector<32x32xf32>, vector<16x32xf32> -> vector<16x32xf32>
    %c0_77 = arith.constant 0 : index
    %c0_78 = arith.constant 0 : index
    %97 = vector.load %arg27[%c0_77, %c0_78] : memref<16x32xf32, #tpu.memory_space<vmem>>, vector<16x32xf32>
    %cst_79 = arith.constant dense<0.000000e+00> : vector<16x32xf32>
    %98 = tpu.matmul %97, %85, %cst_79 {dimension_numbers = #tpu.dot_dimension_numbers<[1], [0], [0], [1], [0, 0, 1, 1], [], []>} : vector<16x32xf32>, vector<32x32xf32>, vector<16x32xf32> -> vector<16x32xf32>
    %99 = arith.subf %88, %90 : vector<20x32xf32>
    %100 = arith.mulf %99, %99 : vector<20x32xf32>
    %cst_80 = arith.constant dense<0.000000e+00> : vector<20xf32>
    %101 = vector.multi_reduction <add>, %100, %cst_80 [1] : vector<20x32xf32> to vector<20xf32>
    %102 = vector.shape_cast %101 : vector<20xf32> to vector<20x1xf32>
    %103 = arith.subf %88, %92 : vector<20x32xf32>
    %104 = arith.mulf %103, %103 : vector<20x32xf32>
    %cst_81 = arith.constant dense<0.000000e+00> : vector<20xf32>
    %105 = vector.multi_reduction <add>, %104, %cst_81 [1] : vector<20x32xf32> to vector<20xf32>
    %106 = vector.shape_cast %105 : vector<20xf32> to vector<20x1xf32>
    %107 = arith.subf %102, %106 : vector<20x1xf32>
    %cst_82 = arith.constant 0.000000e+00 : f32
    %108 = vector.broadcast %cst_82 : f32 to vector<20x1xf32>
    %109 = arith.maximumf %107, %108 : vector<20x1xf32>
    %110 = arith.subf %94, %98 : vector<16x32xf32>
    %111 = arith.mulf %110, %110 : vector<16x32xf32>
    %cst_83 = arith.constant dense<0.000000e+00> : vector<16xf32>
    %112 = vector.multi_reduction <add>, %111, %cst_83 [1] : vector<16x32xf32> to vector<16xf32>
    %113 = vector.shape_cast %112 : vector<16xf32> to vector<16x1xf32>
    %114 = arith.subf %94, %96 : vector<16x32xf32>
    %115 = arith.mulf %114, %114 : vector<16x32xf32>
    %cst_84 = arith.constant dense<0.000000e+00> : vector<16xf32>
    %116 = vector.multi_reduction <add>, %115, %cst_84 [1] : vector<16x32xf32> to vector<16xf32>
    %117 = vector.shape_cast %116 : vector<16xf32> to vector<16x1xf32>
    %118 = arith.subf %113, %117 : vector<16x1xf32>
    %cst_85 = arith.constant 0.000000e+00 : f32
    %119 = vector.broadcast %cst_85 : f32 to vector<16x1xf32>
    %120 = arith.maximumf %118, %119 : vector<16x1xf32>
    %cst_86 = arith.constant dense<0.000000e+00> : vector<1xf32>
    %121 = vector.multi_reduction <add>, %109, %cst_86 [0] : vector<20x1xf32> to vector<1xf32>
    %122 = vector.shape_cast %121 : vector<1xf32> to vector<1x1xf32>
    %cst_87 = arith.constant 2.000000e+01 : f32
    %123 = vector.broadcast %cst_87 : f32 to vector<1x1xf32>
    %124 = arith.divf %122, %123 : vector<1x1xf32>
    %cst_88 = arith.constant dense<0.000000e+00> : vector<1xf32>
    %125 = vector.multi_reduction <add>, %120, %cst_88 [0] : vector<16x1xf32> to vector<1xf32>
    %126 = vector.shape_cast %125 : vector<1xf32> to vector<1x1xf32>
    %cst_89 = arith.constant 1.600000e+01 : f32
    %127 = vector.broadcast %cst_89 : f32 to vector<1x1xf32>
    %128 = arith.divf %126, %127 : vector<1x1xf32>
    %c0_90 = arith.constant 0 : index
    %c0_91 = arith.constant 0 : index
    %129 = vector.load %arg19[%c0_90, %c0_91] : memref<32x3xf32, #tpu.memory_space<vmem>>, vector<32x3xf32>
    %c0_92 = arith.constant 0 : index
    %c0_93 = arith.constant 0 : index
    %130 = vector.load %arg20[%c0_92, %c0_93] : memref<32x3xf32, #tpu.memory_space<vmem>>, vector<32x3xf32>
    %c0_94 = arith.constant 0 : index
    %c0_95 = arith.constant 0 : index
    %131 = vector.load %arg21[%c0_94, %c0_95] : memref<1x3xf32, #tpu.memory_space<vmem>>, vector<1x3xf32>
    %cst_96 = arith.constant dense<0.000000e+00> : vector<20x3xf32>
    %132 = tpu.matmul %88, %129, %cst_96 {dimension_numbers = #tpu.dot_dimension_numbers<[1], [0], [0], [1], [0, 0, 1, 1], [], []>} : vector<20x32xf32>, vector<32x3xf32>, vector<20x3xf32> -> vector<20x3xf32>
    %cst_97 = arith.constant dense<0.000000e+00> : vector<20x3xf32>
    %133 = tpu.matmul %90, %130, %cst_97 {dimension_numbers = #tpu.dot_dimension_numbers<[1], [0], [0], [1], [0, 0, 1, 1], [], []>} : vector<20x32xf32>, vector<32x3xf32>, vector<20x3xf32> -> vector<20x3xf32>
    %134 = arith.addf %132, %133 : vector<20x3xf32>
    %135 = vector.broadcast %131 : vector<1x3xf32> to vector<20x3xf32>
    %136 = arith.addf %134, %135 : vector<20x3xf32>
    %cst_98 = arith.constant dense<0xFF800000> : vector<20xf32>
    %137 = vector.multi_reduction <maximumf>, %136, %cst_98 [1] : vector<20x3xf32> to vector<20xf32>
    %138 = vector.shape_cast %137 : vector<20xf32> to vector<20x1xf32>
    %139 = vector.broadcast %138 : vector<20x1xf32> to vector<20x3xf32>
    %140 = arith.subf %136, %139 : vector<20x3xf32>
    %141 = math.exp %140 : vector<20x3xf32>
    %cst_99 = arith.constant dense<0.000000e+00> : vector<20xf32>
    %142 = vector.multi_reduction <add>, %141, %cst_99 [1] : vector<20x3xf32> to vector<20xf32>
    %143 = vector.shape_cast %142 : vector<20xf32> to vector<20x1xf32>
    %144 = math.log %143 : vector<20x1xf32>
    %145 = vector.broadcast %144 : vector<20x1xf32> to vector<20x3xf32>
    %146 = arith.subf %140, %145 : vector<20x3xf32>
    %c0_100 = arith.constant 0 : index
    %c0_101 = arith.constant 0 : index
    %147 = vector.load %arg28[%c0_100, %c0_101] : memref<20x3xf32, #tpu.memory_space<vmem>>, vector<20x3xf32>
    %148 = arith.mulf %147, %146 : vector<20x3xf32>
    %cst_102 = arith.constant dense<0.000000e+00> : vector<20xf32>
    %149 = vector.multi_reduction <add>, %148, %cst_102 [1] : vector<20x3xf32> to vector<20xf32>
    %150 = vector.shape_cast %149 : vector<20xf32> to vector<20x1xf32>
    %cst_103 = arith.constant 0.000000e+00 : f32
    %151 = vector.broadcast %cst_103 : f32 to vector<20x1xf32>
    %152 = arith.subf %151, %150 : vector<20x1xf32>
    %cst_104 = arith.constant dense<0.000000e+00> : vector<1xf32>
    %153 = vector.multi_reduction <add>, %152, %cst_104 [0] : vector<20x1xf32> to vector<1xf32>
    %154 = vector.shape_cast %153 : vector<1xf32> to vector<1x1xf32>
    %cst_105 = arith.constant dense<0.000000e+00> : vector<16x3xf32>
    %155 = tpu.matmul %94, %129, %cst_105 {dimension_numbers = #tpu.dot_dimension_numbers<[1], [0], [0], [1], [0, 0, 1, 1], [], []>} : vector<16x32xf32>, vector<32x3xf32>, vector<16x3xf32> -> vector<16x3xf32>
    %cst_106 = arith.constant dense<0.000000e+00> : vector<16x3xf32>
    %156 = tpu.matmul %96, %130, %cst_106 {dimension_numbers = #tpu.dot_dimension_numbers<[1], [0], [0], [1], [0, 0, 1, 1], [], []>} : vector<16x32xf32>, vector<32x3xf32>, vector<16x3xf32> -> vector<16x3xf32>
    %157 = arith.addf %155, %156 : vector<16x3xf32>
    %158 = vector.broadcast %131 : vector<1x3xf32> to vector<16x3xf32>
    %159 = arith.addf %157, %158 : vector<16x3xf32>
    %cst_107 = arith.constant dense<0xFF800000> : vector<16xf32>
    %160 = vector.multi_reduction <maximumf>, %159, %cst_107 [1] : vector<16x3xf32> to vector<16xf32>
    %161 = vector.shape_cast %160 : vector<16xf32> to vector<16x1xf32>
    %162 = vector.broadcast %161 : vector<16x1xf32> to vector<16x3xf32>
    %163 = arith.subf %159, %162 : vector<16x3xf32>
    %164 = math.exp %163 : vector<16x3xf32>
    %cst_108 = arith.constant dense<0.000000e+00> : vector<16xf32>
    %165 = vector.multi_reduction <add>, %164, %cst_108 [1] : vector<16x3xf32> to vector<16xf32>
    %166 = vector.shape_cast %165 : vector<16xf32> to vector<16x1xf32>
    %167 = math.log %166 : vector<16x1xf32>
    %168 = vector.broadcast %167 : vector<16x1xf32> to vector<16x3xf32>
    %169 = arith.subf %163, %168 : vector<16x3xf32>
    %c0_109 = arith.constant 0 : index
    %c0_110 = arith.constant 0 : index
    %170 = vector.load %arg29[%c0_109, %c0_110] : memref<16x3xf32, #tpu.memory_space<vmem>>, vector<16x3xf32>
    %171 = arith.mulf %170, %169 : vector<16x3xf32>
    %cst_111 = arith.constant dense<0.000000e+00> : vector<16xf32>
    %172 = vector.multi_reduction <add>, %171, %cst_111 [1] : vector<16x3xf32> to vector<16xf32>
    %173 = vector.shape_cast %172 : vector<16xf32> to vector<16x1xf32>
    %cst_112 = arith.constant 0.000000e+00 : f32
    %174 = vector.broadcast %cst_112 : f32 to vector<16x1xf32>
    %175 = arith.subf %174, %173 : vector<16x1xf32>
    %cst_113 = arith.constant dense<0.000000e+00> : vector<1xf32>
    %176 = vector.multi_reduction <add>, %175, %cst_113 [0] : vector<16x1xf32> to vector<1xf32>
    %177 = vector.shape_cast %176 : vector<1xf32> to vector<1x1xf32>
    %178 = arith.addf %154, %177 : vector<1x1xf32>
    %cst_114 = arith.constant dense<0.000000e+00> : vector<16x3xf32>
    %179 = tpu.matmul %94, %129, %cst_114 {dimension_numbers = #tpu.dot_dimension_numbers<[1], [0], [0], [1], [0, 0, 1, 1], [], []>} : vector<16x32xf32>, vector<32x3xf32>, vector<16x3xf32> -> vector<16x3xf32>
    %cst_115 = arith.constant dense<0.000000e+00> : vector<16x3xf32>
    %180 = tpu.matmul %98, %130, %cst_115 {dimension_numbers = #tpu.dot_dimension_numbers<[1], [0], [0], [1], [0, 0, 1, 1], [], []>} : vector<16x32xf32>, vector<32x3xf32>, vector<16x3xf32> -> vector<16x3xf32>
    %181 = arith.addf %179, %180 : vector<16x3xf32>
    %182 = vector.broadcast %131 : vector<1x3xf32> to vector<16x3xf32>
    %183 = arith.addf %181, %182 : vector<16x3xf32>
    %cst_116 = arith.constant dense<0xFF800000> : vector<16xf32>
    %184 = vector.multi_reduction <maximumf>, %183, %cst_116 [1] : vector<16x3xf32> to vector<16xf32>
    %185 = vector.shape_cast %184 : vector<16xf32> to vector<16x1xf32>
    %186 = vector.broadcast %185 : vector<16x1xf32> to vector<16x3xf32>
    %187 = arith.subf %183, %186 : vector<16x3xf32>
    %188 = math.exp %187 : vector<16x3xf32>
    %cst_117 = arith.constant dense<0.000000e+00> : vector<16xf32>
    %189 = vector.multi_reduction <add>, %188, %cst_117 [1] : vector<16x3xf32> to vector<16xf32>
    %190 = vector.shape_cast %189 : vector<16xf32> to vector<16x1xf32>
    %191 = math.log %190 : vector<16x1xf32>
    %192 = vector.broadcast %191 : vector<16x1xf32> to vector<16x3xf32>
    %193 = arith.subf %187, %192 : vector<16x3xf32>
    %c0_118 = arith.constant 0 : index
    %c0_119 = arith.constant 0 : index
    %194 = vector.load %arg30[%c0_118, %c0_119] : memref<16x3xf32, #tpu.memory_space<vmem>>, vector<16x3xf32>
    %195 = arith.mulf %194, %193 : vector<16x3xf32>
    %cst_120 = arith.constant dense<0.000000e+00> : vector<16xf32>
    %196 = vector.multi_reduction <add>, %195, %cst_120 [1] : vector<16x3xf32> to vector<16xf32>
    %197 = vector.shape_cast %196 : vector<16xf32> to vector<16x1xf32>
    %cst_121 = arith.constant 0.000000e+00 : f32
    %198 = vector.broadcast %cst_121 : f32 to vector<16x1xf32>
    %199 = arith.subf %198, %197 : vector<16x1xf32>
    %cst_122 = arith.constant dense<0.000000e+00> : vector<1xf32>
    %200 = vector.multi_reduction <add>, %199, %cst_122 [0] : vector<16x1xf32> to vector<1xf32>
    %201 = vector.shape_cast %200 : vector<1xf32> to vector<1x1xf32>
    %202 = arith.addf %178, %201 : vector<1x1xf32>
    %cst_123 = arith.constant dense<0.000000e+00> : vector<16x3xf32>
    %203 = tpu.matmul %96, %129, %cst_123 {dimension_numbers = #tpu.dot_dimension_numbers<[1], [0], [0], [1], [0, 0, 1, 1], [], []>} : vector<16x32xf32>, vector<32x3xf32>, vector<16x3xf32> -> vector<16x3xf32>
    %cst_124 = arith.constant dense<0.000000e+00> : vector<16x3xf32>
    %204 = tpu.matmul %98, %130, %cst_124 {dimension_numbers = #tpu.dot_dimension_numbers<[1], [0], [0], [1], [0, 0, 1, 1], [], []>} : vector<16x32xf32>, vector<32x3xf32>, vector<16x3xf32> -> vector<16x3xf32>
    %205 = arith.addf %203, %204 : vector<16x3xf32>
    %206 = vector.broadcast %131 : vector<1x3xf32> to vector<16x3xf32>
    %207 = arith.addf %205, %206 : vector<16x3xf32>
    %cst_125 = arith.constant dense<0xFF800000> : vector<16xf32>
    %208 = vector.multi_reduction <maximumf>, %207, %cst_125 [1] : vector<16x3xf32> to vector<16xf32>
    %209 = vector.shape_cast %208 : vector<16xf32> to vector<16x1xf32>
    %210 = vector.broadcast %209 : vector<16x1xf32> to vector<16x3xf32>
    %211 = arith.subf %207, %210 : vector<16x3xf32>
    %212 = math.exp %211 : vector<16x3xf32>
    %cst_126 = arith.constant dense<0.000000e+00> : vector<16xf32>
    %213 = vector.multi_reduction <add>, %212, %cst_126 [1] : vector<16x3xf32> to vector<16xf32>
    %214 = vector.shape_cast %213 : vector<16xf32> to vector<16x1xf32>
    %215 = math.log %214 : vector<16x1xf32>
    %216 = vector.broadcast %215 : vector<16x1xf32> to vector<16x3xf32>
    %217 = arith.subf %211, %216 : vector<16x3xf32>
    %c0_127 = arith.constant 0 : index
    %c0_128 = arith.constant 0 : index
    %218 = vector.load %arg31[%c0_127, %c0_128] : memref<16x3xf32, #tpu.memory_space<vmem>>, vector<16x3xf32>
    %219 = arith.mulf %218, %217 : vector<16x3xf32>
    %cst_129 = arith.constant dense<0.000000e+00> : vector<16xf32>
    %220 = vector.multi_reduction <add>, %219, %cst_129 [1] : vector<16x3xf32> to vector<16xf32>
    %221 = vector.shape_cast %220 : vector<16xf32> to vector<16x1xf32>
    %cst_130 = arith.constant 0.000000e+00 : f32
    %222 = vector.broadcast %cst_130 : f32 to vector<16x1xf32>
    %223 = arith.subf %222, %221 : vector<16x1xf32>
    %cst_131 = arith.constant dense<0.000000e+00> : vector<1xf32>
    %224 = vector.multi_reduction <add>, %223, %cst_131 [0] : vector<16x1xf32> to vector<1xf32>
    %225 = vector.shape_cast %224 : vector<1xf32> to vector<1x1xf32>
    %226 = arith.addf %202, %225 : vector<1x1xf32>
    %cst_132 = arith.constant dense<0.000000e+00> : vector<20x3xf32>
    %227 = tpu.matmul %88, %129, %cst_132 {dimension_numbers = #tpu.dot_dimension_numbers<[1], [0], [0], [1], [0, 0, 1, 1], [], []>} : vector<20x32xf32>, vector<32x3xf32>, vector<20x3xf32> -> vector<20x3xf32>
    %cst_133 = arith.constant dense<0.000000e+00> : vector<20x3xf32>
    %228 = tpu.matmul %92, %130, %cst_133 {dimension_numbers = #tpu.dot_dimension_numbers<[1], [0], [0], [1], [0, 0, 1, 1], [], []>} : vector<20x32xf32>, vector<32x3xf32>, vector<20x3xf32> -> vector<20x3xf32>
    %229 = arith.addf %227, %228 : vector<20x3xf32>
    %230 = vector.broadcast %131 : vector<1x3xf32> to vector<20x3xf32>
    %231 = arith.addf %229, %230 : vector<20x3xf32>
    %cst_134 = arith.constant dense<0xFF800000> : vector<20xf32>
    %232 = vector.multi_reduction <maximumf>, %231, %cst_134 [1] : vector<20x3xf32> to vector<20xf32>
    %233 = vector.shape_cast %232 : vector<20xf32> to vector<20x1xf32>
    %234 = vector.broadcast %233 : vector<20x1xf32> to vector<20x3xf32>
    %235 = arith.subf %231, %234 : vector<20x3xf32>
    %236 = math.exp %235 : vector<20x3xf32>
    %cst_135 = arith.constant dense<0.000000e+00> : vector<20xf32>
    %237 = vector.multi_reduction <add>, %236, %cst_135 [1] : vector<20x3xf32> to vector<20xf32>
    %238 = vector.shape_cast %237 : vector<20xf32> to vector<20x1xf32>
    %239 = math.log %238 : vector<20x1xf32>
    %240 = vector.broadcast %239 : vector<20x1xf32> to vector<20x3xf32>
    %241 = arith.subf %235, %240 : vector<20x3xf32>
    %c0_136 = arith.constant 0 : index
    %c0_137 = arith.constant 0 : index
    %242 = vector.load %arg32[%c0_136, %c0_137] : memref<20x3xf32, #tpu.memory_space<vmem>>, vector<20x3xf32>
    %243 = arith.mulf %242, %241 : vector<20x3xf32>
    %cst_138 = arith.constant dense<0.000000e+00> : vector<20xf32>
    %244 = vector.multi_reduction <add>, %243, %cst_138 [1] : vector<20x3xf32> to vector<20xf32>
    %245 = vector.shape_cast %244 : vector<20xf32> to vector<20x1xf32>
    %cst_139 = arith.constant 0.000000e+00 : f32
    %246 = vector.broadcast %cst_139 : f32 to vector<20x1xf32>
    %247 = arith.subf %246, %245 : vector<20x1xf32>
    %cst_140 = arith.constant dense<0.000000e+00> : vector<1xf32>
    %248 = vector.multi_reduction <add>, %247, %cst_140 [0] : vector<20x1xf32> to vector<1xf32>
    %249 = vector.shape_cast %248 : vector<1xf32> to vector<1x1xf32>
    %250 = arith.addf %226, %249 : vector<1x1xf32>
    %cst_141 = arith.constant dense<0.000000e+00> : vector<20x3xf32>
    %251 = tpu.matmul %90, %129, %cst_141 {dimension_numbers = #tpu.dot_dimension_numbers<[1], [0], [0], [1], [0, 0, 1, 1], [], []>} : vector<20x32xf32>, vector<32x3xf32>, vector<20x3xf32> -> vector<20x3xf32>
    %cst_142 = arith.constant dense<0.000000e+00> : vector<20x3xf32>
    %252 = tpu.matmul %92, %130, %cst_142 {dimension_numbers = #tpu.dot_dimension_numbers<[1], [0], [0], [1], [0, 0, 1, 1], [], []>} : vector<20x32xf32>, vector<32x3xf32>, vector<20x3xf32> -> vector<20x3xf32>
    %253 = arith.addf %251, %252 : vector<20x3xf32>
    %254 = vector.broadcast %131 : vector<1x3xf32> to vector<20x3xf32>
    %255 = arith.addf %253, %254 : vector<20x3xf32>
    %cst_143 = arith.constant dense<0xFF800000> : vector<20xf32>
    %256 = vector.multi_reduction <maximumf>, %255, %cst_143 [1] : vector<20x3xf32> to vector<20xf32>
    %257 = vector.shape_cast %256 : vector<20xf32> to vector<20x1xf32>
    %258 = vector.broadcast %257 : vector<20x1xf32> to vector<20x3xf32>
    %259 = arith.subf %255, %258 : vector<20x3xf32>
    %260 = math.exp %259 : vector<20x3xf32>
    %cst_144 = arith.constant dense<0.000000e+00> : vector<20xf32>
    %261 = vector.multi_reduction <add>, %260, %cst_144 [1] : vector<20x3xf32> to vector<20xf32>
    %262 = vector.shape_cast %261 : vector<20xf32> to vector<20x1xf32>
    %263 = math.log %262 : vector<20x1xf32>
    %264 = vector.broadcast %263 : vector<20x1xf32> to vector<20x3xf32>
    %265 = arith.subf %259, %264 : vector<20x3xf32>
    %c0_145 = arith.constant 0 : index
    %c0_146 = arith.constant 0 : index
    %266 = vector.load %arg33[%c0_145, %c0_146] : memref<20x3xf32, #tpu.memory_space<vmem>>, vector<20x3xf32>
    %267 = arith.mulf %266, %265 : vector<20x3xf32>
    %cst_147 = arith.constant dense<0.000000e+00> : vector<20xf32>
    %268 = vector.multi_reduction <add>, %267, %cst_147 [1] : vector<20x3xf32> to vector<20xf32>
    %269 = vector.shape_cast %268 : vector<20xf32> to vector<20x1xf32>
    %cst_148 = arith.constant 0.000000e+00 : f32
    %270 = vector.broadcast %cst_148 : f32 to vector<20x1xf32>
    %271 = arith.subf %270, %269 : vector<20x1xf32>
    %cst_149 = arith.constant dense<0.000000e+00> : vector<1xf32>
    %272 = vector.multi_reduction <add>, %271, %cst_149 [0] : vector<20x1xf32> to vector<1xf32>
    %273 = vector.shape_cast %272 : vector<1xf32> to vector<1x1xf32>
    %274 = arith.addf %250, %273 : vector<1x1xf32>
    %cst_150 = arith.constant 1.080000e+02 : f32
    %275 = vector.broadcast %cst_150 : f32 to vector<1x1xf32>
    %276 = arith.divf %274, %275 : vector<1x1xf32>
    %277 = arith.addf %124, %128 : vector<1x1xf32>
    %cst_151 = arith.constant 1.000000e+00 : f32
    %278 = vector.broadcast %cst_151 : f32 to vector<1x1xf32>
    %279 = arith.mulf %278, %277 : vector<1x1xf32>
    %280 = arith.addf %276, %279 : vector<1x1xf32>
    %c0_152 = arith.constant 0 : index
    %c0_153 = arith.constant 0 : index
    %281 = vector.load %arg34[%c0_152, %c0_153] : memref<1x1xf32, #tpu.memory_space<vmem>>, vector<1x1xf32>
    tpu.vector_store %arg34[%c0_152, %c0_153], %280 {strides = array<i32>} : memref<1x1xf32, #tpu.memory_space<vmem>>, vector<1x1xf32>,
    return
  }
}

</mosaic_0001>

<llo_original>
// kernel: sgcn_forward.1
$region0: #{sgcn_forward.1}
  #allocation0 [shape = 'u32[]', space=smem, size = 0x4, offset = 0x4, fixed_abs, tag = 'smem constant byte address 0x4 - core index']
  #allocation1 [shape = 'u32[144,128]{1,0:T(1,128)}', space=vmem, size = 0x12000, scoped, tag = 'internal scratch']
  %s0 = inlined_call_operand.smem [shape: u32[36], index: -1, kind: input, shape index: {}]
  %s1 = sld [smem:[%s0]]
  %s2 = scalar_lea.smem %s0, 1
  %s3 = sld [smem:[%s2]]
  %s4 = scalar_lea.smem %s0, 2
  %s5 = sld [smem:[%s4]]
  %s6 = scalar_lea.smem %s0, 3
  %s7 = sld [smem:[%s6]]
  %s8 = scalar_lea.smem %s0, 4
  %s9 = sld [smem:[%s8]]
  %s10 = scalar_lea.smem %s0, 5
  %s11 = sld [smem:[%s10]]
  %s12 = scalar_lea.smem %s0, 6
  %s13 = sld [smem:[%s12]]
  %s14 = scalar_lea.smem %s0, 7
  %s15 = sld [smem:[%s14]]
  %s16 = scalar_lea.smem %s0, 8
  %s17 = sld [smem:[%s16]]
  %s18 = scalar_lea.smem %s0, 9
  %s19 = sld [smem:[%s18]]
  %s20 = scalar_lea.smem %s0, 10
  %s21 = sld [smem:[%s20]]
  %s22 = scalar_lea.smem %s0, 11
  %s23 = sld [smem:[%s22]]
  %s24 = scalar_lea.smem %s0, 12
  %s25 = sld [smem:[%s24]]
  %s26 = scalar_lea.smem %s0, 13
  %s27 = sld [smem:[%s26]]
  %s28 = scalar_lea.smem %s0, 14
  %s29 = sld [smem:[%s28]]
  %s30 = scalar_lea.smem %s0, 15
  %s31 = sld [smem:[%s30]]
  %s32 = scalar_lea.smem %s0, 16
  %s33 = sld [smem:[%s32]]
  %s34 = scalar_lea.smem %s0, 17
  %s35 = sld [smem:[%s34]]
  %s36 = scalar_lea.smem %s0, 18
  %s37 = sld [smem:[%s36]]
  %s38 = scalar_lea.smem %s0, 19
  %s39 = sld [smem:[%s38]]
  %s40 = scalar_lea.smem %s0, 20
  %s41 = sld [smem:[%s40]]
  %s42 = scalar_lea.smem %s0, 21
  %s43 = sld [smem:[%s42]]
  %s44 = scalar_lea.smem %s0, 22
  %s45 = sld [smem:[%s44]]
  %s46 = scalar_lea.smem %s0, 23
  %s47 = sld [smem:[%s46]]
  %s48 = scalar_lea.smem %s0, 24
  %s49 = sld [smem:[%s48]]
  %s50 = scalar_lea.smem %s0, 25
  %s51 = sld [smem:[%s50]]
  %s52 = scalar_lea.smem %s0, 26
  %s53 = sld [smem:[%s52]]
  %s54 = scalar_lea.smem %s0, 27
  %s55 = sld [smem:[%s54]]
  %s56 = scalar_lea.smem %s0, 28
  %s57 = sld [smem:[%s56]]
  %s58 = scalar_lea.smem %s0, 29
  %s59 = sld [smem:[%s58]]
  %s60 = scalar_lea.smem %s0, 30
  %s61 = sld [smem:[%s60]]
  %s62 = scalar_lea.smem %s0, 31
  %s63 = sld [smem:[%s62]]
  %s64 = scalar_lea.smem %s0, 32
  %s65 = sld [smem:[%s64]]
  %s66 = scalar_lea.smem %s0, 33
  %s67 = sld [smem:[%s66]]
  %s68 = scalar_lea.smem %s0, 34
  %s69 = sld [smem:[%s68]]
  %s70 = scalar_lea.smem %s0, 35
  %s71 = sld [smem:[%s70]]
  %72 = xla_tuple %s69, %s71
  %s73 = sld [smem:[#allocation0]]
  $region154: #{sgcn_forward.1} parent=0
    _
  %s75 = ssub.s32 1, %s73
  %s76 = scalar_select 0, %s75, %s73
  $region1: #{sgcn_forward.1} parent=0
    #allocation2 [shape = 'u8[512]{0}', space=vmem, size = 0x400, scoped, tag = 'output window, operand 0, single buffered']
    #allocation3 [shape = 's32[1]{0}', space=sflag, size = 0x4, scoped, tag = 'scoped memory for sgcn_forward.1']
    #allocation4 [shape = 'u8[16384]{0}', space=vmem, size = 0x4000, scoped, tag = 'output window, operand 1, single buffered']
    #allocation5 [shape = 's32[1]{0}', space=sflag, size = 0x4, scoped, tag = 'scoped memory for sgcn_forward.1']
    %77 = vsyncpa [#allocation3], 0
    %78 = vsyncpa [#allocation5], 0
    // Predicated region
    $region2: #{sgcn_forward.1} parent=1 // pred_check
      _
    $region3: #{sgcn_forward.1} parent=1 // pred_check_branch
      %80 = sbr.rel (0) target = $region5
    $region4: #{sgcn_forward.1} parent=1 // pred_region
      _
    $region5: #{sgcn_forward.1} parent=1 // pred_fallthru
      _
    // Predicated region
    $region6: #{sgcn_forward.1} parent=1 // pred_check
      _
    $region7: #{sgcn_forward.1} parent=1 // pred_check_branch
      %82 = sbr.rel (0) target = $region9
    $region8: #{sgcn_forward.1} parent=1 // pred_region
      _
    $region9: #{sgcn_forward.1} parent=1 // pred_fallthru
      _
    // Predicated region
    $region10: #{sgcn_forward.1} parent=1 // pred_check
      _
    $region11: #{sgcn_forward.1} parent=1 // pred_check_branch
      %84 = sbr.rel (0) target = $region13
    $region12: #{sgcn_forward.1} parent=1 // pred_region
      _
    $region13: #{sgcn_forward.1} parent=1 // pred_fallthru
      _
    // Predicated region
    $region14: #{sgcn_forward.1} parent=1 // pred_check
      _
    $region15: #{sgcn_forward.1} parent=1 // pred_check_branch
      %86 = sbr.rel (0) target = $region17
    $region16: #{sgcn_forward.1} parent=1 // pred_region
      _
    $region17: #{sgcn_forward.1} parent=1 // pred_fallthru
      _
    // Predicated region
    $region18: #{sgcn_forward.1} parent=1 // pred_check
      _
    $region19: #{sgcn_forward.1} parent=1 // pred_check_branch
      %88 = sbr.rel (0) target = $region21
    $region20: #{sgcn_forward.1} parent=1 // pred_region
      _
    $region21: #{sgcn_forward.1} parent=1 // pred_fallthru
      _
    // Predicated region
    $region22: #{sgcn_forward.1} parent=1 // pred_check
      _
    $region23: #{sgcn_forward.1} parent=1 // pred_check_branch
      %90 = sbr.rel (0) target = $region25
    $region24: #{sgcn_forward.1} parent=1 // pred_region
      _
    $region25: #{sgcn_forward.1} parent=1 // pred_fallthru
      _
    // Predicated region
    $region26: #{sgcn_forward.1} parent=1 // pred_check
      _
    $region27: #{sgcn_forward.1} parent=1 // pred_check_branch
      %92 = sbr.rel (0) target = $region29
    $region28: #{sgcn_forward.1} parent=1 // pred_region
      _
    $region29: #{sgcn_forward.1} parent=1 // pred_fallthru
      _
    // Predicated region
    $region30: #{sgcn_forward.1} parent=1 // pred_check
      _
    $region31: #{sgcn_forward.1} parent=1 // pred_check_branch
      %94 = sbr.rel (0) target = $region33
    $region32: #{sgcn_forward.1} parent=1 // pred_region
      _
    $region33: #{sgcn_forward.1} parent=1 // pred_fallthru
      _
    // Predicated region
    $region34: #{sgcn_forward.1} parent=1 // pred_check
      _
    $region35: #{sgcn_forward.1} parent=1 // pred_check_branch
      %96 = sbr.rel (0) target = $region37
    $region36: #{sgcn_forward.1} parent=1 // pred_region
      _
    $region37: #{sgcn_forward.1} parent=1 // pred_fallthru
      _
    // Predicated region
    $region38: #{sgcn_forward.1} parent=1 // pred_check
      _
    $region39: #{sgcn_forward.1} parent=1 // pred_check_branch
      %98 = sbr.rel (0) target = $region41
    $region40: #{sgcn_forward.1} parent=1 // pred_region
      _
    $region41: #{sgcn_forward.1} parent=1 // pred_fallthru
      _
    // Predicated region
    $region42: #{sgcn_forward.1} parent=1 // pred_check
      _
    $region43: #{sgcn_forward.1} parent=1 // pred_check_branch
      %100 = sbr.rel (0) target = $region45
    $region44: #{sgcn_forward.1} parent=1 // pred_region
      _
    $region45: #{sgcn_forward.1} parent=1 // pred_fallthru
      _
    // Predicated region
    $region46: #{sgcn_forward.1} parent=1 // pred_check
      _
    $region47: #{sgcn_forward.1} parent=1 // pred_check_branch
      %102 = sbr.rel (0) target = $region49
    $region48: #{sgcn_forward.1} parent=1 // pred_region
      _
    $region49: #{sgcn_forward.1} parent=1 // pred_fallthru
      _
    // Predicated region
    $region50: #{sgcn_forward.1} parent=1 // pred_check
      _
    $region51: #{sgcn_forward.1} parent=1 // pred_check_branch
      %104 = sbr.rel (0) target = $region53
    $region52: #{sgcn_forward.1} parent=1 // pred_region
      _
    $region53: #{sgcn_forward.1} parent=1 // pred_fallthru
      _
    // Predicated region
    $region54: #{sgcn_forward.1} parent=1 // pred_check
      _
    $region55: #{sgcn_forward.1} parent=1 // pred_check_branch
      %106 = sbr.rel (0) target = $region57
    $region56: #{sgcn_forward.1} parent=1 // pred_region
      _
    $region57: #{sgcn_forward.1} parent=1 // pred_fallthru
      _
    // Predicated region
    $region58: #{sgcn_forward.1} parent=1 // pred_check
      _
    $region59: #{sgcn_forward.1} parent=1 // pred_check_branch
      %108 = sbr.rel (0) target = $region61
    $region60: #{sgcn_forward.1} parent=1 // pred_region
      _
    $region61: #{sgcn_forward.1} parent=1 // pred_fallthru
      _
    // Predicated region
    $region62: #{sgcn_forward.1} parent=1 // pred_check
      _
    $region63: #{sgcn_forward.1} parent=1 // pred_check_branch
      %110 = sbr.rel (0) target = $region65
    $region64: #{sgcn_forward.1} parent=1 // pred_region
      _
    $region65: #{sgcn_forward.1} parent=1 // pred_fallthru
      _
    // Predicated region
    $region66: #{sgcn_forward.1} parent=1 // pred_check
      _
    $region67: #{sgcn_forward.1} parent=1 // pred_check_branch
      %112 = sbr.rel (0) target = $region69
    $region68: #{sgcn_forward.1} parent=1 // pred_region
      _
    $region69: #{sgcn_forward.1} parent=1 // pred_fallthru
      _
    // Predicated region
    $region70: #{sgcn_forward.1} parent=1 // pred_check
      _
    $region71: #{sgcn_forward.1} parent=1 // pred_check_branch
      %114 = sbr.rel (0) target = $region73
    $region72: #{sgcn_forward.1} parent=1 // pred_region
      _
    $region73: #{sgcn_forward.1} parent=1 // pred_fallthru
      _
    // Predicated region
    $region74: #{sgcn_forward.1} parent=1 // pred_check
      _
    $region75: #{sgcn_forward.1} parent=1 // pred_check_branch
      %116 = sbr.rel (0) target = $region77
    $region76: #{sgcn_forward.1} parent=1 // pred_region
      _
    $region77: #{sgcn_forward.1} parent=1 // pred_fallthru
      _
    // Predicated region
    $region78: #{sgcn_forward.1} parent=1 // pred_check
      _
    $region79: #{sgcn_forward.1} parent=1 // pred_check_branch
      %118 = sbr.rel (0) target = $region81
    $region80: #{sgcn_forward.1} parent=1 // pred_region
      _
    $region81: #{sgcn_forward.1} parent=1 // pred_fallthru
      _
    // Predicated region
    $region82: #{sgcn_forward.1} parent=1 // pred_check
      _
    $region83: #{sgcn_forward.1} parent=1 // pred_check_branch
      %120 = sbr.rel (0) target = $region85
    $region84: #{sgcn_forward.1} parent=1 // pred_region
      _
    $region85: #{sgcn_forward.1} parent=1 // pred_fallthru
      _
    // Predicated region
    $region86: #{sgcn_forward.1} parent=1 // pred_check
      _
    $region87: #{sgcn_forward.1} parent=1 // pred_check_branch
      %122 = sbr.rel (0) target = $region89
    $region88: #{sgcn_forward.1} parent=1 // pred_region
      _
    $region89: #{sgcn_forward.1} parent=1 // pred_fallthru
      _
    // Predicated region
    $region90: #{sgcn_forward.1} parent=1 // pred_check
      _
    $region91: #{sgcn_forward.1} parent=1 // pred_check_branch
      %124 = sbr.rel (0) target = $region93
    $region92: #{sgcn_forward.1} parent=1 // pred_region
      _
    $region93: #{sgcn_forward.1} parent=1 // pred_fallthru
      _
    // Predicated region
    $region94: #{sgcn_forward.1} parent=1 // pred_check
      _
    $region95: #{sgcn_forward.1} parent=1 // pred_check_branch
      %126 = sbr.rel (0) target = $region97
    $region96: #{sgcn_forward.1} parent=1 // pred_region
      _
    $region97: #{sgcn_forward.1} parent=1 // pred_fallthru
      _
    // Predicated region
    $region98: #{sgcn_forward.1} parent=1 // pred_check
      _
    $region99: #{sgcn_forward.1} parent=1 // pred_check_branch
      %128 = sbr.rel (0) target = $region101
    $region100: #{sgcn_forward.1} parent=1 // pred_region
      _
    $region101: #{sgcn_forward.1} parent=1 // pred_fallthru
      _
    // Predicated region
    $region102: #{sgcn_forward.1} parent=1 // pred_check
      _
    $region103: #{sgcn_forward.1} parent=1 // pred_check_branch
      %130 = sbr.rel (0) target = $region105
    $region104: #{sgcn_forward.1} parent=1 // pred_region
      _
    $region105: #{sgcn_forward.1} parent=1 // pred_fallthru
      _
    // Predicated region
    $region106: #{sgcn_forward.1} parent=1 // pred_check
      _
    $region107: #{sgcn_forward.1} parent=1 // pred_check_branch
      %132 = sbr.rel (0) target = $region109
    $region108: #{sgcn_forward.1} parent=1 // pred_region
      _
    $region109: #{sgcn_forward.1} parent=1 // pred_fallthru
      _
    // Predicated region
    $region110: #{sgcn_forward.1} parent=1 // pred_check
      _
    $region111: #{sgcn_forward.1} parent=1 // pred_check_branch
      %134 = sbr.rel (0) target = $region113
    $region112: #{sgcn_forward.1} parent=1 // pred_region
      _
    $region113: #{sgcn_forward.1} parent=1 // pred_fallthru
      _
    // Predicated region
    $region114: #{sgcn_forward.1} parent=1 // pred_check
      _
    $region115: #{sgcn_forward.1} parent=1 // pred_check_branch
      %136 = sbr.rel (0) target = $region117
    $region116: #{sgcn_forward.1} parent=1 // pred_region
      _
    $region117: #{sgcn_forward.1} parent=1 // pred_fallthru
      _
    // Predicated region
    $region118: #{sgcn_forward.1} parent=1 // pred_check
      _
    $region119: #{sgcn_forward.1} parent=1 // pred_check_branch
      %138 = sbr.rel (0) target = $region121
    $region120: #{sgcn_forward.1} parent=1 // pred_region
      _
    $region121: #{sgcn_forward.1} parent=1 // pred_fallthru
      _
    // Predicated region
    $region122: #{sgcn_forward.1} parent=1 // pred_check
      _
    $region123: #{sgcn_forward.1} parent=1 // pred_check_branch
      %140 = sbr.rel (0) target = $region125
    $region124: #{sgcn_forward.1} parent=1 // pred_region
      _
    $region125: #{sgcn_forward.1} parent=1 // pred_fallthru
      _
    // Predicated region
    $region126: #{sgcn_forward.1} parent=1 // pred_check
      _
    $region127: #{sgcn_forward.1} parent=1 // pred_check_branch
      %142 = sbr.rel (0) target = $region129
    $region128: #{sgcn_forward.1} parent=1 // pred_region
      _
    $region129: #{sgcn_forward.1} parent=1 // pred_fallthru
      _
    // Predicated region
    $region130: #{sgcn_forward.1} parent=1 // pred_check
      _
    $region131: #{sgcn_forward.1} parent=1 // pred_check_branch
      %144 = sbr.rel (0) target = $region133
    $region132: #{sgcn_forward.1} parent=1 // pred_region
      _
    $region133: #{sgcn_forward.1} parent=1 // pred_fallthru
      _
    // Predicated region
    $region134: #{sgcn_forward.1} parent=1 // pred_check
      _
    $region135: #{sgcn_forward.1} parent=1 // pred_check_branch
      %146 = sbr.rel (0) target = $region137
    $region136: #{sgcn_forward.1} parent=1 // pred_region
      _
    $region137: #{sgcn_forward.1} parent=1 // pred_fallthru
      _
    %v147 = vld [vmem:[%s1] sm:$0xff]
    %v148 = vld [vmem:[%s1 + $0x8] sm:$0xff]
    %v149 = vld [vmem:[%s1 + $0x10] sm:$0xff]
    %v150 = vld [vmem:[%s1 + $0x18] sm:$0xff]
    %v151 = vld [vmem:[%s3] sm:$0xff]
    %v152 = vld [vmem:[%s3 + $0x8] sm:$0xff]
    %v153 = vld [vmem:[%s3 + $0x10] sm:$0xff]
    %v154 = vld [vmem:[%s3 + $0x18] sm:$0xff]
    %vm155 = vcmask 261120
    %v157 = vsel %vm155, %v151, 0
    %v160 = vsel %vm155, %v152, 0
    %v163 = vsel %vm155, %v153, 0
    %v166 = vsel %vm155, %v154, 0
    %168 = vmatprep.subr.mxu0 0.0
    %169 = vmatpush1.msra.mxu0 %v147
    %170 = vmatprep.subr.mxu0 0.0
    %171 = vmatpush1.msra.mxu0 %v148
    %172 = vmatprep.subr.mxu0 0.0
    %173 = vmatpush1.msra.mxu0 %v149
    %174 = vmatprep.subr.mxu0 0.0
    %175 = vmatpush1.msra.mxu0 %v150
    %176 = vmatprep.subr.mxu0 0.0
    %177 = vmatpush1.msra.mxu0 0.0
    %178 = vmatprep.subr.mxu0 0.0
    %179 = vmatpush1.msra.mxu0 0.0
    %180 = vmatprep.subr.mxu0 0.0
    %181 = vmatpush1.msra.mxu0 0.0
    %182 = vmatprep.subr.mxu0 0.0
    %183 = vmatpush1.msra.mxu0 0.0
    %184 = vmatprep.subr.mxu0 0.0
    %185 = vmatpush1.msra.mxu0 0.0
    %186 = vmatprep.subr.mxu0 0.0
    %187 = vmatpush1.msra.mxu0 0.0
    %188 = vmatprep.subr.mxu0 0.0
    %189 = vmatpush1.msra.mxu0 0.0
    %190 = vmatprep.subr.mxu0 0.0
    %191 = vmatpush1.msra.mxu0 0.0
    %192 = vmatprep.subr.mxu0 0.0
    %193 = vmatpush1.msra.mxu0 0.0
    %194 = vmatprep.subr.mxu0 0.0
    %195 = vmatpush1.msra.mxu0 0.0
    %196 = vmatprep.subr.mxu0 0.0
    %197 = vmatpush1.msra.mxu0 0.0
    %198 = vmatprep.subr.mxu0 0.0
    %199 = vmatpush1.msra.mxu0 0.0
    %200 = vmatprep.subr.mxu0 0.0
    %201 = vmatpush1.msra.mxu0 0.0
    %202 = vmatprep.subr.mxu0 0.0
    %203 = vmatpush1.msra.mxu0 0.0
    %204 = vmatprep.subr.mxu0 0.0
    %205 = vmatpush1.msra.mxu0 0.0
    %206 = vmatprep.subr.mxu0 0.0
    %207 = vmatpush1.msra.mxu0 0.0
    %208 = vmatprep.subr.mxu0 0.0
    %209 = vmatpush1.msra.mxu0 0.0
    %210 = vmatprep.subr.mxu0 0.0
    %211 = vmatpush1.msra.mxu0 0.0
    %212 = vmatprep.subr.mxu0 0.0
    %213 = vmatpush1.msra.mxu0 0.0
    %214 = vmatprep.subr.mxu0 0.0
    %215 = vmatpush1.msra.mxu0 0.0
    %216 = vmatprep.subr.mxu0 0.0
    %217 = vmatpush1.msra.mxu0 0.0
    %218 = vmatprep.subr.mxu0 0.0
    %219 = vmatpush1.msra.mxu0 0.0
    %220 = vmatprep.subr.mxu0 0.0
    %221 = vmatpush1.msra.mxu0 0.0
    %222 = vmatprep.subr.mxu0 0.0
    %223 = vmatpush1.msra.mxu0 0.0
    %224 = vmatprep.subr.mxu0 0.0
    %225 = vmatpush1.msra.mxu0 0.0
    %226 = vmatprep.subr.mxu0 0.0
    %227 = vmatpush1.msra.mxu0 0.0
    %228 = vmatprep.subr.mxu0 0.0
    %229 = vmatpush1.msra.mxu0 0.0
    %230 = vmatprep.subr.mxu0 0.0
    %231 = vmatpush1.msra.mxu0 0.0
    %232 = vmatprep.mubr.f32.mxu0 0.0
    %233 = vmatmul.mubr.f32.gmra.mrb[0].mxu0 %v157
    %v234 = vpop.f32.mrb[0].mxu0
    %v235 = vadd.f32 0.0, %v234
    %v236 = vpop.f32.mrb[0].mxu0
    %237 = vmatprep.mubr.f32.mxu0 0.0
    %238 = vmatmul.mubr.f32.gmra.mrb[0].mxu0 %v160
    %v239 = vpop.f32.mrb[0].mxu0
    %v240 = vadd.f32 0.0, %v239
    %v241 = vpop.f32.mrb[0].mxu0
    %242 = vmatprep.mubr.f32.mxu0 0.0
    %243 = vmatmul.mubr.f32.gmra.mrb[0].mxu0 %v163
    %v244 = vpop.f32.mrb[0].mxu0
    %v245 = vadd.f32 0.0, %v244
    %v246 = vpop.f32.mrb[0].mxu0
    %247 = vmatprep.mubr.f32.mxu0 0.0
    %248 = vmatmul.mubr.f32.gmra.mrb[0].mxu0 %v166
    %v249 = vpop.f32.mrb[0].mxu0
    %v250 = vadd.f32 0.0, %v249
    %v251 = vpop.f32.mrb[0].mxu0
    %252 = vdwg.mxu0
    %v253 = vld [vmem:[%s11] sm:$0xff]
    %v254 = vld [vmem:[%s11 + $0x8] sm:$0xff]
    %v255 = vld [vmem:[%s13] sm:$0xff]
    %v256 = vld [vmem:[%s13 + $0x8] sm:$0xff]
    %vm257 = vcmask 130048
    %v259 = vsel %vm257, %v147, 0
    %v262 = vsel %vm257, %v148, 0
    %v265 = vsel %vm257, %v149, 0
    %v268 = vsel %vm257, %v150, 0
    %270 = vmatprep.subr.mxu0 0.0
    %271 = vmatpush1.msra.mxu0 %v255
    %272 = vmatprep.subr.mxu0 0.0
    %273 = vmatpush1.msra.mxu0 %v256
    %274 = vmatprep.subr.mxu0 0.0
    %275 = vmatpush1.msra.mxu0 0.0
    %276 = vmatprep.subr.mxu0 0.0
    %277 = vmatpush1.msra.mxu0 0.0
    %278 = vmatprep.subr.mxu0 0.0
    %279 = vmatpush1.msra.mxu0 0.0
    %280 = vmatprep.subr.mxu0 0.0
    %281 = vmatpush1.msra.mxu0 0.0
    %282 = vmatprep.subr.mxu0 0.0
    %283 = vmatpush1.msra.mxu0 0.0
    %284 = vmatprep.subr.mxu0 0.0
    %285 = vmatpush1.msra.mxu0 0.0
    %286 = vmatprep.subr.mxu0 0.0
    %287 = vmatpush1.msra.mxu0 0.0
    %288 = vmatprep.subr.mxu0 0.0
    %289 = vmatpush1.msra.mxu0 0.0
    %290 = vmatprep.subr.mxu0 0.0
    %291 = vmatpush1.msra.mxu0 0.0
    %292 = vmatprep.subr.mxu0 0.0
    %293 = vmatpush1.msra.mxu0 0.0
    %294 = vmatprep.subr.mxu0 0.0
    %295 = vmatpush1.msra.mxu0 0.0
    %296 = vmatprep.subr.mxu0 0.0
    %297 = vmatpush1.msra.mxu0 0.0
    %298 = vmatprep.subr.mxu0 0.0
    %299 = vmatpush1.msra.mxu0 0.0
    %300 = vmatprep.subr.mxu0 0.0
    %301 = vmatpush1.msra.mxu0 0.0
    %302 = vmatprep.subr.mxu0 0.0
    %303 = vmatpush1.msra.mxu0 0.0
    %304 = vmatprep.subr.mxu0 0.0
    %305 = vmatpush1.msra.mxu0 0.0
    %306 = vmatprep.subr.mxu0 0.0
    %307 = vmatpush1.msra.mxu0 0.0
    %308 = vmatprep.subr.mxu0 0.0
    %309 = vmatpush1.msra.mxu0 0.0
    %310 = vmatprep.subr.mxu0 0.0
    %311 = vmatpush1.msra.mxu0 0.0
    %312 = vmatprep.subr.mxu0 0.0
    %313 = vmatpush1.msra.mxu0 0.0
    %314 = vmatprep.subr.mxu0 0.0
    %315 = vmatpush1.msra.mxu0 0.0
    %316 = vmatprep.subr.mxu0 0.0
    %317 = vmatpush1.msra.mxu0 0.0
    %318 = vmatprep.subr.mxu0 0.0
    %319 = vmatpush1.msra.mxu0 0.0
    %320 = vmatprep.subr.mxu0 0.0
    %321 = vmatpush1.msra.mxu0 0.0
    %322 = vmatprep.subr.mxu0 0.0
    %323 = vmatpush1.msra.mxu0 0.0
    %324 = vmatprep.subr.mxu0 0.0
    %325 = vmatpush1.msra.mxu0 0.0
    %326 = vmatprep.subr.mxu0 0.0
    %327 = vmatpush1.msra.mxu0 0.0
    %328 = vmatprep.subr.mxu0 0.0
    %329 = vmatpush1.msra.mxu0 0.0
    %330 = vmatprep.subr.mxu0 0.0
    %331 = vmatpush1.msra.mxu0 0.0
    %332 = vmatprep.subr.mxu0 0.0
    %333 = vmatpush1.msra.mxu0 0.0
    %334 = vmatprep.mubr.f32.mxu0 0.0
    %335 = vmatmul.mubr.f32.gmra.mrb[0].mxu0 %v259
    %v336 = vpop.f32.mrb[0].mxu0
    %v337 = vadd.f32 0.0, %v336
    %v338 = vpop.f32.mrb[0].mxu0
    %339 = vmatprep.mubr.f32.mxu0 0.0
    %340 = vmatmul.mubr.f32.gmra.mrb[0].mxu0 %v262
    %v341 = vpop.f32.mrb[0].mxu0
    %v342 = vadd.f32 0.0, %v341
    %v343 = vpop.f32.mrb[0].mxu0
    %344 = vmatprep.mubr.f32.mxu0 0.0
    %345 = vmatmul.mubr.f32.gmra.mrb[0].mxu0 %v265
    %v346 = vpop.f32.mrb[0].mxu0
    %v347 = vadd.f32 0.0, %v346
    %v348 = vpop.f32.mrb[0].mxu0
    %349 = vmatprep.mubr.f32.mxu0 0.0
    %350 = vmatmul.mubr.f32.gmra.mrb[0].mxu0 %v268
    %v351 = vpop.f32.mrb[0].mxu0
    %v352 = vadd.f32 0.0, %v351
    %v353 = vpop.f32.mrb[0].mxu0
    %354 = vdwg.mxu0
    %v356 = vsel %vm257, %v235, 0
    %v359 = vsel %vm257, %v240, 0
    %v362 = vsel %vm257, %v245, 0
    %v365 = vsel %vm257, %v250, 0
    %367 = vmatprep.subr.mxu0 0.0
    %368 = vmatpush1.msra.mxu0 %v253
    %369 = vmatprep.subr.mxu0 0.0
    %370 = vmatpush1.msra.mxu0 %v254
    %371 = vmatprep.subr.mxu0 0.0
    %372 = vmatpush1.msra.mxu0 0.0
    %373 = vmatprep.subr.mxu0 0.0
    %374 = vmatpush1.msra.mxu0 0.0
    %375 = vmatprep.subr.mxu0 0.0
    %376 = vmatpush1.msra.mxu0 0.0
    %377 = vmatprep.subr.mxu0 0.0
    %378 = vmatpush1.msra.mxu0 0.0
    %379 = vmatprep.subr.mxu0 0.0
    %380 = vmatpush1.msra.mxu0 0.0
    %381 = vmatprep.subr.mxu0 0.0
    %382 = vmatpush1.msra.mxu0 0.0
    %383 = vmatprep.subr.mxu0 0.0
    %384 = vmatpush1.msra.mxu0 0.0
    %385 = vmatprep.subr.mxu0 0.0
    %386 = vmatpush1.msra.mxu0 0.0
    %387 = vmatprep.subr.mxu0 0.0
    %388 = vmatpush1.msra.mxu0 0.0
    %389 = vmatprep.subr.mxu0 0.0
    %390 = vmatpush1.msra.mxu0 0.0
    %391 = vmatprep.subr.mxu0 0.0
    %392 = vmatpush1.msra.mxu0 0.0
    %393 = vmatprep.subr.mxu0 0.0
    %394 = vmatpush1.msra.mxu0 0.0
    %395 = vmatprep.subr.mxu0 0.0
    %396 = vmatpush1.msra.mxu0 0.0
    %397 = vmatprep.subr.mxu0 0.0
    %398 = vmatpush1.msra.mxu0 0.0
    %399 = vmatprep.subr.mxu0 0.0
    %400 = vmatpush1.msra.mxu0 0.0
    %401 = vmatprep.subr.mxu0 0.0
    %402 = vmatpush1.msra.mxu0 0.0
    %403 = vmatprep.subr.mxu0 0.0
    %404 = vmatpush1.msra.mxu0 0.0
    %405 = vmatprep.subr.mxu0 0.0
    %406 = vmatpush1.msra.mxu0 0.0
    %407 = vmatprep.subr.mxu0 0.0
    %408 = vmatpush1.msra.mxu0 0.0
    %409 = vmatprep.subr.mxu0 0.0
    %410 = vmatpush1.msra.mxu0 0.0
    %411 = vmatprep.subr.mxu0 0.0
    %412 = vmatpush1.msra.mxu0 0.0
    %413 = vmatprep.subr.mxu0 0.0
    %414 = vmatpush1.msra.mxu0 0.0
    %415 = vmatprep.subr.mxu0 0.0
    %416 = vmatpush1.msra.mxu0 0.0
    %417 = vmatprep.subr.mxu0 0.0
    %418 = vmatpush1.msra.mxu0 0.0
    %419 = vmatprep.subr.mxu0 0.0
    %420 = vmatpush1.msra.mxu0 0.0
    %421 = vmatprep.subr.mxu0 0.0
    %422 = vmatpush1.msra.mxu0 0.0
    %423 = vmatprep.subr.mxu0 0.0
    %424 = vmatpush1.msra.mxu0 0.0
    %425 = vmatprep.subr.mxu0 0.0
    %426 = vmatpush1.msra.mxu0 0.0
    %427 = vmatprep.subr.mxu0 0.0
    %428 = vmatpush1.msra.mxu0 0.0
    %429 = vmatprep.subr.mxu0 0.0
    %430 = vmatpush1.msra.mxu0 0.0
    %431 = vmatprep.mubr.f32.mxu0 0.0
    %432 = vmatmul.mubr.f32.gmra.mrb[0].mxu0 %v356
    %v433 = vpop.f32.mrb[0].mxu0
    %v434 = vadd.f32 %v337, %v433
    %v435 = vpop.f32.mrb[0].mxu0
    %436 = vmatprep.mubr.f32.mxu0 0.0
    %437 = vmatmul.mubr.f32.gmra.mrb[0].mxu0 %v359
    %v438 = vpop.f32.mrb[0].mxu0
    %v439 = vadd.f32 %v342, %v438
    %v440 = vpop.f32.mrb[0].mxu0
    %441 = vmatprep.mubr.f32.mxu0 0.0
    %442 = vmatmul.mubr.f32.gmra.mrb[0].mxu0 %v362
    %v443 = vpop.f32.mrb[0].mxu0
    %v444 = vadd.f32 %v347, %v443
    %v445 = vpop.f32.mrb[0].mxu0
    %446 = vmatprep.mubr.f32.mxu0 0.0
    %447 = vmatmul.mubr.f32.gmra.mrb[0].mxu0 %v365
    %v448 = vpop.f32.mrb[0].mxu0
    %v449 = vadd.f32 %v352, %v448
    %v450 = vpop.f32.mrb[0].mxu0
    %451 = vdwg.mxu0
    %v452 = vld [vmem:[%s15] sm:$0x1]
    %v454 = vlaneseq
    %v455 = vshrl.u32 %v454, 7
    %v456 = vsub.s32 0, %v455
    %v457 = vrot.slane %v452, %v456
    %v459 = vadd.f32 %v434, %v457
    %v460 = vadd.f32 %v439, %v457
    %v461 = vadd.f32 %v444, %v457
    %v462 = vadd.f32 %v449, %v457
    %v463 = vmul.f32 %v459, %v459
    %v464 = vmul.f32 %v460, %v460
    %v465 = vmul.f32 %v461, %v461
    %v466 = vmul.f32 %v462, %v462
    %v467 = vsel %vm155, %v463, 0.0
    %468 = vadd.xlane.f32.xlu0 %v467
    %v469 = vpop.xlane.xlu0 %468
    %v470 = vsel %vm155, %v464, 0.0
    %471 = vadd.xlane.f32.xlu0 %v470
    %v472 = vpop.xlane.xlu0 %471
    %v473 = vsel %vm155, %v465, 0.0
    %474 = vadd.xlane.f32.xlu0 %v473
    %v475 = vpop.xlane.xlu0 %474
    %v476 = vsel %vm155, %v466, 0.0
    %477 = vadd.xlane.f32.xlu0 %v476
    %v478 = vpop.xlane.xlu0 %477
    %v479 = vmax.f32 %v469, 1e-24
    %v480 = vmax.f32 %v472, 1e-24
    %v481 = vmax.f32 %v475, 1e-24
    %v482 = vmax.f32 %v478, 1e-24
    %v483 = vrsqrt.pop %v479
    %v484 = vrsqrt.pop %v480
    %v485 = vrsqrt.pop %v481
    %v486 = vrsqrt.pop %v482
    %v487 = vmul.f32 %v459, %v483
    %v488 = vmul.f32 %v460, %v484
    %v489 = vmul.f32 %v461, %v485
    %v490 = vmul.f32 %v462, %v486
    %v491 = vtanh.pop %v487
    %v492 = vtanh.pop %v488
    %v493 = vtanh.pop %v489
    %v494 = vtanh.pop %v490
    %v495 = vld [vmem:[%s5] sm:$0xff]
    %v496 = vld [vmem:[%s5 + $0x8] sm:$0xff]
    %v497 = vld [vmem:[%s5 + $0x10] sm:$0xff]
    %v498 = vld [vmem:[%s5 + $0x18] sm:$0xff]
    %v500 = vsel %vm155, %v495, 0
    %v503 = vsel %vm155, %v496, 0
    %v506 = vsel %vm155, %v497, 0
    %v509 = vsel %vm155, %v498, 0
    %511 = vmatprep.subr.mxu0 0.0
    %512 = vmatpush1.msra.mxu0 %v147
    %513 = vmatprep.subr.mxu0 0.0
    %514 = vmatpush1.msra.mxu0 %v148
    %515 = vmatprep.subr.mxu0 0.0
    %516 = vmatpush1.msra.mxu0 %v149
    %517 = vmatprep.subr.mxu0 0.0
    %518 = vmatpush1.msra.mxu0 %v150
    %519 = vmatprep.subr.mxu0 0.0
    %520 = vmatpush1.msra.mxu0 0.0
    %521 = vmatprep.subr.mxu0 0.0
    %522 = vmatpush1.msra.mxu0 0.0
    %523 = vmatprep.subr.mxu0 0.0
    %524 = vmatpush1.msra.mxu0 0.0
    %525 = vmatprep.subr.mxu0 0.0
    %526 = vmatpush1.msra.mxu0 0.0
    %527 = vmatprep.subr.mxu0 0.0
    %528 = vmatpush1.msra.mxu0 0.0
    %529 = vmatprep.subr.mxu0 0.0
    %530 = vmatpush1.msra.mxu0 0.0
    %531 = vmatprep.subr.mxu0 0.0
    %532 = vmatpush1.msra.mxu0 0.0
    %533 = vmatprep.subr.mxu0 0.0
    %534 = vmatpush1.msra.mxu0 0.0
    %535 = vmatprep.subr.mxu0 0.0
    %536 = vmatpush1.msra.mxu0 0.0
    %537 = vmatprep.subr.mxu0 0.0
    %538 = vmatpush1.msra.mxu0 0.0
    %539 = vmatprep.subr.mxu0 0.0
    %540 = vmatpush1.msra.mxu0 0.0
    %541 = vmatprep.subr.mxu0 0.0
    %542 = vmatpush1.msra.mxu0 0.0
    %543 = vmatprep.subr.mxu0 0.0
    %544 = vmatpush1.msra.mxu0 0.0
    %545 = vmatprep.subr.mxu0 0.0
    %546 = vmatpush1.msra.mxu0 0.0
    %547 = vmatprep.subr.mxu0 0.0
    %548 = vmatpush1.msra.mxu0 0.0
    %549 = vmatprep.subr.mxu0 0.0
    %550 = vmatpush1.msra.mxu0 0.0
    %551 = vmatprep.subr.mxu0 0.0
    %552 = vmatpush1.msra.mxu0 0.0
    %553 = vmatprep.subr.mxu0 0.0
    %554 = vmatpush1.msra.mxu0 0.0
    %555 = vmatprep.subr.mxu0 0.0
    %556 = vmatpush1.msra.mxu0 0.0
    %557 = vmatprep.subr.mxu0 0.0
    %558 = vmatpush1.msra.mxu0 0.0
    %559 = vmatprep.subr.mxu0 0.0
    %560 = vmatpush1.msra.mxu0 0.0
    %561 = vmatprep.subr.mxu0 0.0
    %562 = vmatpush1.msra.mxu0 0.0
    %563 = vmatprep.subr.mxu0 0.0
    %564 = vmatpush1.msra.mxu0 0.0
    %565 = vmatprep.subr.mxu0 0.0
    %566 = vmatpush1.msra.mxu0 0.0
    %567 = vmatprep.subr.mxu0 0.0
    %568 = vmatpush1.msra.mxu0 0.0
    %569 = vmatprep.subr.mxu0 0.0
    %570 = vmatpush1.msra.mxu0 0.0
    %571 = vmatprep.subr.mxu0 0.0
    %572 = vmatpush1.msra.mxu0 0.0
    %573 = vmatprep.subr.mxu0 0.0
    %574 = vmatpush1.msra.mxu0 0.0
    %575 = vmatprep.mubr.f32.mxu0 0.0
    %576 = vmatmul.mubr.f32.gmra.mrb[0].mxu0 %v500
    %v577 = vpop.f32.mrb[0].mxu0
    %v578 = vadd.f32 0.0, %v577
    %v579 = vpop.f32.mrb[0].mxu0
    %580 = vmatprep.mubr.f32.mxu0 0.0
    %581 = vmatmul.mubr.f32.gmra.mrb[0].mxu0 %v503
    %v582 = vpop.f32.mrb[0].mxu0
    %v583 = vadd.f32 0.0, %v582
    %v584 = vpop.f32.mrb[0].mxu0
    %585 = vmatprep.mubr.f32.mxu0 0.0
    %586 = vmatmul.mubr.f32.gmra.mrb[0].mxu0 %v506
    %v587 = vpop.f32.mrb[0].mxu0
    %v588 = vadd.f32 0.0, %v587
    %v589 = vpop.f32.mrb[0].mxu0
    %590 = vmatprep.mubr.f32.mxu0 0.0
    %591 = vmatmul.mubr.f32.gmra.mrb[0].mxu0 %v509
    %v592 = vpop.f32.mrb[0].mxu0
    %v593 = vadd.f32 0.0, %v592
    %v594 = vpop.f32.mrb[0].mxu0
    %595 = vdwg.mxu0
    %v596 = vld [vmem:[%s17] sm:$0xff]
    %v597 = vld [vmem:[%s17 + $0x8] sm:$0xff]
    %v598 = vld [vmem:[%s19] sm:$0xff]
    %v599 = vld [vmem:[%s19 + $0x8] sm:$0xff]
    %600 = vmatprep.subr.mxu0 0.0
    %601 = vmatpush1.msra.mxu0 %v598
    %602 = vmatprep.subr.mxu0 0.0
    %603 = vmatpush1.msra.mxu0 %v599
    %604 = vmatprep.subr.mxu0 0.0
    %605 = vmatpush1.msra.mxu0 0.0
    %606 = vmatprep.subr.mxu0 0.0
    %607 = vmatpush1.msra.mxu0 0.0
    %608 = vmatprep.subr.mxu0 0.0
    %609 = vmatpush1.msra.mxu0 0.0
    %610 = vmatprep.subr.mxu0 0.0
    %611 = vmatpush1.msra.mxu0 0.0
    %612 = vmatprep.subr.mxu0 0.0
    %613 = vmatpush1.msra.mxu0 0.0
    %614 = vmatprep.subr.mxu0 0.0
    %615 = vmatpush1.msra.mxu0 0.0
    %616 = vmatprep.subr.mxu0 0.0
    %617 = vmatpush1.msra.mxu0 0.0
    %618 = vmatprep.subr.mxu0 0.0
    %619 = vmatpush1.msra.mxu0 0.0
    %620 = vmatprep.subr.mxu0 0.0
    %621 = vmatpush1.msra.mxu0 0.0
    %622 = vmatprep.subr.mxu0 0.0
    %623 = vmatpush1.msra.mxu0 0.0
    %624 = vmatprep.subr.mxu0 0.0
    %625 = vmatpush1.msra.mxu0 0.0
    %626 = vmatprep.subr.mxu0 0.0
    %627 = vmatpush1.msra.mxu0 0.0
    %628 = vmatprep.subr.mxu0 0.0
    %629 = vmatpush1.msra.mxu0 0.0
    %630 = vmatprep.subr.mxu0 0.0
    %631 = vmatpush1.msra.mxu0 0.0
    %632 = vmatprep.subr.mxu0 0.0
    %633 = vmatpush1.msra.mxu0 0.0
    %634 = vmatprep.subr.mxu0 0.0
    %635 = vmatpush1.msra.mxu0 0.0
    %636 = vmatprep.subr.mxu0 0.0
    %637 = vmatpush1.msra.mxu0 0.0
    %638 = vmatprep.subr.mxu0 0.0
    %639 = vmatpush1.msra.mxu0 0.0
    %640 = vmatprep.subr.mxu0 0.0
    %641 = vmatpush1.msra.mxu0 0.0
    %642 = vmatprep.subr.mxu0 0.0
    %643 = vmatpush1.msra.mxu0 0.0
    %644 = vmatprep.subr.mxu0 0.0
    %645 = vmatpush1.msra.mxu0 0.0
    %646 = vmatprep.subr.mxu0 0.0
    %647 = vmatpush1.msra.mxu0 0.0
    %648 = vmatprep.subr.mxu0 0.0
    %649 = vmatpush1.msra.mxu0 0.0
    %650 = vmatprep.subr.mxu0 0.0
    %651 = vmatpush1.msra.mxu0 0.0
    %652 = vmatprep.subr.mxu0 0.0
    %653 = vmatpush1.msra.mxu0 0.0
    %654 = vmatprep.subr.mxu0 0.0
    %655 = vmatpush1.msra.mxu0 0.0
    %656 = vmatprep.subr.mxu0 0.0
    %657 = vmatpush1.msra.mxu0 0.0
    %658 = vmatprep.subr.mxu0 0.0
    %659 = vmatpush1.msra.mxu0 0.0
    %660 = vmatprep.subr.mxu0 0.0
    %661 = vmatpush1.msra.mxu0 0.0
    %662 = vmatprep.subr.mxu0 0.0
    %663 = vmatpush1.msra.mxu0 0.0
    %664 = vmatprep.mubr.f32.mxu0 0.0
    %665 = vmatmul.mubr.f32.gmra.mrb[0].mxu0 %v259
    %v666 = vpop.f32.mrb[0].mxu0
    %v667 = vadd.f32 0.0, %v666
    %v668 = vpop.f32.mrb[0].mxu0
    %669 = vmatprep.mubr.f32.mxu0 0.0
    %670 = vmatmul.mubr.f32.gmra.mrb[0].mxu0 %v262
    %v671 = vpop.f32.mrb[0].mxu0
    %v672 = vadd.f32 0.0, %v671
    %v673 = vpop.f32.mrb[0].mxu0
    %674 = vmatprep.mubr.f32.mxu0 0.0
    %675 = vmatmul.mubr.f32.gmra.mrb[0].mxu0 %v265
    %v676 = vpop.f32.mrb[0].mxu0
    %v677 = vadd.f32 0.0, %v676
    %v678 = vpop.f32.mrb[0].mxu0
    %679 = vmatprep.mubr.f32.mxu0 0.0
    %680 = vmatmul.mubr.f32.gmra.mrb[0].mxu0 %v268
    %v681 = vpop.f32.mrb[0].mxu0
    %v682 = vadd.f32 0.0, %v681
    %v683 = vpop.f32.mrb[0].mxu0
    %684 = vdwg.mxu0
    %v686 = vsel %vm257, %v578, 0
    %v689 = vsel %vm257, %v583, 0
    %v692 = vsel %vm257, %v588, 0
    %v695 = vsel %vm257, %v593, 0
    %697 = vmatprep.subr.mxu0 0.0
    %698 = vmatpush1.msra.mxu0 %v596
    %699 = vmatprep.subr.mxu0 0.0
    %700 = vmatpush1.msra.mxu0 %v597
    %701 = vmatprep.subr.mxu0 0.0
    %702 = vmatpush1.msra.mxu0 0.0
    %703 = vmatprep.subr.mxu0 0.0
    %704 = vmatpush1.msra.mxu0 0.0
    %705 = vmatprep.subr.mxu0 0.0
    %706 = vmatpush1.msra.mxu0 0.0
    %707 = vmatprep.subr.mxu0 0.0
    %708 = vmatpush1.msra.mxu0 0.0
    %709 = vmatprep.subr.mxu0 0.0
    %710 = vmatpush1.msra.mxu0 0.0
    %711 = vmatprep.subr.mxu0 0.0
    %712 = vmatpush1.msra.mxu0 0.0
    %713 = vmatprep.subr.mxu0 0.0
    %714 = vmatpush1.msra.mxu0 0.0
    %715 = vmatprep.subr.mxu0 0.0
    %716 = vmatpush1.msra.mxu0 0.0
    %717 = vmatprep.subr.mxu0 0.0
    %718 = vmatpush1.msra.mxu0 0.0
    %719 = vmatprep.subr.mxu0 0.0
    %720 = vmatpush1.msra.mxu0 0.0
    %721 = vmatprep.subr.mxu0 0.0
    %722 = vmatpush1.msra.mxu0 0.0
    %723 = vmatprep.subr.mxu0 0.0
    %724 = vmatpush1.msra.mxu0 0.0
    %725 = vmatprep.subr.mxu0 0.0
    %726 = vmatpush1.msra.mxu0 0.0
    %727 = vmatprep.subr.mxu0 0.0
    %728 = vmatpush1.msra.mxu0 0.0
    %729 = vmatprep.subr.mxu0 0.0
    %730 = vmatpush1.msra.mxu0 0.0
    %731 = vmatprep.subr.mxu0 0.0
    %732 = vmatpush1.msra.mxu0 0.0
    %733 = vmatprep.subr.mxu0 0.0
    %734 = vmatpush1.msra.mxu0 0.0
    %735 = vmatprep.subr.mxu0 0.0
    %736 = vmatpush1.msra.mxu0 0.0
    %737 = vmatprep.subr.mxu0 0.0
    %738 = vmatpush1.msra.mxu0 0.0
    %739 = vmatprep.subr.mxu0 0.0
    %740 = vmatpush1.msra.mxu0 0.0
    %741 = vmatprep.subr.mxu0 0.0
    %742 = vmatpush1.msra.mxu0 0.0
    %743 = vmatprep.subr.mxu0 0.0
    %744 = vmatpush1.msra.mxu0 0.0
    %745 = vmatprep.subr.mxu0 0.0
    %746 = vmatpush1.msra.mxu0 0.0
    %747 = vmatprep.subr.mxu0 0.0
    %748 = vmatpush1.msra.mxu0 0.0
    %749 = vmatprep.subr.mxu0 0.0
    %750 = vmatpush1.msra.mxu0 0.0
    %751 = vmatprep.subr.mxu0 0.0
    %752 = vmatpush1.msra.mxu0 0.0
    %753 = vmatprep.subr.mxu0 0.0
    %754 = vmatpush1.msra.mxu0 0.0
    %755 = vmatprep.subr.mxu0 0.0
    %756 = vmatpush1.msra.mxu0 0.0
    %757 = vmatprep.subr.mxu0 0.0
    %758 = vmatpush1.msra.mxu0 0.0
    %759 = vmatprep.subr.mxu0 0.0
    %760 = vmatpush1.msra.mxu0 0.0
    %761 = vmatprep.mubr.f32.mxu0 0.0
    %762 = vmatmul.mubr.f32.gmra.mrb[0].mxu0 %v686
    %v763 = vpop.f32.mrb[0].mxu0
    %v764 = vadd.f32 %v667, %v763
    %v765 = vpop.f32.mrb[0].mxu0
    %766 = vmatprep.mubr.f32.mxu0 0.0
    %767 = vmatmul.mubr.f32.gmra.mrb[0].mxu0 %v689
    %v768 = vpop.f32.mrb[0].mxu0
    %v769 = vadd.f32 %v672, %v768
    %v770 = vpop.f32.mrb[0].mxu0
    %771 = vmatprep.mubr.f32.mxu0 0.0
    %772 = vmatmul.mubr.f32.gmra.mrb[0].mxu0 %v692
    %v773 = vpop.f32.mrb[0].mxu0
    %v774 = vadd.f32 %v677, %v773
    %v775 = vpop.f32.mrb[0].mxu0
    %776 = vmatprep.mubr.f32.mxu0 0.0
    %777 = vmatmul.mubr.f32.gmra.mrb[0].mxu0 %v695
    %v778 = vpop.f32.mrb[0].mxu0
    %v779 = vadd.f32 %v682, %v778
    %v780 = vpop.f32.mrb[0].mxu0
    %781 = vdwg.mxu0
    %v782 = vld [vmem:[%s21] sm:$0x1]
    %v784 = vlaneseq
    %v785 = vshrl.u32 %v784, 7
    %v786 = vsub.s32 0, %v785
    %v787 = vrot.slane %v782, %v786
    %v789 = vadd.f32 %v764, %v787
    %v790 = vadd.f32 %v769, %v787
    %v791 = vadd.f32 %v774, %v787
    %v792 = vadd.f32 %v779, %v787
    %v793 = vmul.f32 %v789, %v789
    %v794 = vmul.f32 %v790, %v790
    %v795 = vmul.f32 %v791, %v791
    %v796 = vmul.f32 %v792, %v792
    %v797 = vsel %vm155, %v793, 0.0
    %798 = vadd.xlane.f32.xlu0 %v797
    %v799 = vpop.xlane.xlu0 %798
    %v800 = vsel %vm155, %v794, 0.0
    %801 = vadd.xlane.f32.xlu0 %v800
    %v802 = vpop.xlane.xlu0 %801
    %v803 = vsel %vm155, %v795, 0.0
    %804 = vadd.xlane.f32.xlu0 %v803
    %v805 = vpop.xlane.xlu0 %804
    %v806 = vsel %vm155, %v796, 0.0
    %807 = vadd.xlane.f32.xlu0 %v806
    %v808 = vpop.xlane.xlu0 %807
    %v809 = vmax.f32 %v799, 1e-24
    %v810 = vmax.f32 %v802, 1e-24
    %v811 = vmax.f32 %v805, 1e-24
    %v812 = vmax.f32 %v808, 1e-24
    %v813 = vrsqrt.pop %v809
    %v814 = vrsqrt.pop %v810
    %v815 = vrsqrt.pop %v811
    %v816 = vrsqrt.pop %v812
    %v817 = vmul.f32 %v789, %v813
    %v818 = vmul.f32 %v790, %v814
    %v819 = vmul.f32 %v791, %v815
    %v820 = vmul.f32 %v792, %v816
    %v821 = vtanh.pop %v817
    %v822 = vtanh.pop %v818
    %v823 = vtanh.pop %v819
    %v824 = vtanh.pop %v820
    %v825 = vld [vmem:[%s7] sm:$0xff]
    %v826 = vld [vmem:[%s7 + $0x8] sm:$0xff]
    %v827 = vld [vmem:[%s7 + $0x10] sm:$0xff]
    %v828 = vld [vmem:[%s7 + $0x18] sm:$0xff]
    %v829 = vld [vmem:[%s9] sm:$0xff]
    %v830 = vld [vmem:[%s9 + $0x8] sm:$0xff]
    %v831 = vld [vmem:[%s9 + $0x10] sm:$0xff]
    %v832 = vld [vmem:[%s9 + $0x18] sm:$0xff]
    %v834 = vsel %vm155, %v825, 0
    %v837 = vsel %vm155, %v826, 0
    %v840 = vsel %vm155, %v827, 0
    %v843 = vsel %vm155, %v828, 0
    %845 = vmatprep.subr.mxu0 0.0
    %846 = vmatpush1.msra.mxu0 %v491
    %847 = vmatprep.subr.mxu0 0.0
    %848 = vmatpush1.msra.mxu0 %v492
    %849 = vmatprep.subr.mxu0 0.0
    %850 = vmatpush1.msra.mxu0 %v493
    %851 = vmatprep.subr.mxu0 0.0
    %852 = vmatpush1.msra.mxu0 %v494
    %853 = vmatprep.subr.mxu0 0.0
    %854 = vmatpush1.msra.mxu0 0.0
    %855 = vmatprep.subr.mxu0 0.0
    %856 = vmatpush1.msra.mxu0 0.0
    %857 = vmatprep.subr.mxu0 0.0
    %858 = vmatpush1.msra.mxu0 0.0
    %859 = vmatprep.subr.mxu0 0.0
    %860 = vmatpush1.msra.mxu0 0.0
    %861 = vmatprep.subr.mxu0 0.0
    %862 = vmatpush1.msra.mxu0 0.0
    %863 = vmatprep.subr.mxu0 0.0
    %864 = vmatpush1.msra.mxu0 0.0
    %865 = vmatprep.subr.mxu0 0.0
    %866 = vmatpush1.msra.mxu0 0.0
    %867 = vmatprep.subr.mxu0 0.0
    %868 = vmatpush1.msra.mxu0 0.0
    %869 = vmatprep.subr.mxu0 0.0
    %870 = vmatpush1.msra.mxu0 0.0
    %871 = vmatprep.subr.mxu0 0.0
    %872 = vmatpush1.msra.mxu0 0.0
    %873 = vmatprep.subr.mxu0 0.0
    %874 = vmatpush1.msra.mxu0 0.0
    %875 = vmatprep.subr.mxu0 0.0
    %876 = vmatpush1.msra.mxu0 0.0
    %877 = vmatprep.subr.mxu0 0.0
    %878 = vmatpush1.msra.mxu0 0.0
    %879 = vmatprep.subr.mxu0 0.0
    %880 = vmatpush1.msra.mxu0 0.0
    %881 = vmatprep.subr.mxu0 0.0
    %882 = vmatpush1.msra.mxu0 0.0
    %883 = vmatprep.subr.mxu0 0.0
    %884 = vmatpush1.msra.mxu0 0.0
    %885 = vmatprep.subr.mxu0 0.0
    %886 = vmatpush1.msra.mxu0 0.0
    %887 = vmatprep.subr.mxu0 0.0
    %888 = vmatpush1.msra.mxu0 0.0
    %889 = vmatprep.subr.mxu0 0.0
    %890 = vmatpush1.msra.mxu0 0.0
    %891 = vmatprep.subr.mxu0 0.0
    %892 = vmatpush1.msra.mxu0 0.0
    %893 = vmatprep.subr.mxu0 0.0
    %894 = vmatpush1.msra.mxu0 0.0
    %895 = vmatprep.subr.mxu0 0.0
    %896 = vmatpush1.msra.mxu0 0.0
    %897 = vmatprep.subr.mxu0 0.0
    %898 = vmatpush1.msra.mxu0 0.0
    %899 = vmatprep.subr.mxu0 0.0
    %900 = vmatpush1.msra.mxu0 0.0
    %901 = vmatprep.subr.mxu0 0.0
    %902 = vmatpush1.msra.mxu0 0.0
    %903 = vmatprep.subr.mxu0 0.0
    %904 = vmatpush1.msra.mxu0 0.0
    %905 = vmatprep.subr.mxu0 0.0
    %906 = vmatpush1.msra.mxu0 0.0
    %907 = vmatprep.subr.mxu0 0.0
    %908 = vmatpush1.msra.mxu0 0.0
    %909 = vmatprep.mubr.f32.mxu0 0.0
    %910 = vmatmul.mubr.f32.gmra.mrb[0].mxu0 %v834
    %v911 = vpop.f32.mrb[0].mxu0
    %v912 = vadd.f32 0.0, %v911
    %v913 = vpop.f32.mrb[0].mxu0
    %914 = vmatprep.mubr.f32.mxu0 0.0
    %915 = vmatmul.mubr.f32.gmra.mrb[0].mxu0 %v837
    %v916 = vpop.f32.mrb[0].mxu0
    %v917 = vadd.f32 0.0, %v916
    %v918 = vpop.f32.mrb[0].mxu0
    %919 = vmatprep.mubr.f32.mxu0 0.0
    %920 = vmatmul.mubr.f32.gmra.mrb[0].mxu0 %v840
    %v921 = vpop.f32.mrb[0].mxu0
    %v922 = vadd.f32 0.0, %v921
    %v923 = vpop.f32.mrb[0].mxu0
    %924 = vmatprep.mubr.f32.mxu0 0.0
    %925 = vmatmul.mubr.f32.gmra.mrb[0].mxu0 %v843
    %v926 = vpop.f32.mrb[0].mxu0
    %v927 = vadd.f32 0.0, %v926
    %v928 = vpop.f32.mrb[0].mxu0
    %929 = vdwg.mxu0
    %930 = vmatprep.subr.mxu0 0.0
    %931 = vmatpush1.msra.mxu0 %v821
    %932 = vmatprep.subr.mxu0 0.0
    %933 = vmatpush1.msra.mxu0 %v822
    %934 = vmatprep.subr.mxu0 0.0
    %935 = vmatpush1.msra.mxu0 %v823
    %936 = vmatprep.subr.mxu0 0.0
    %937 = vmatpush1.msra.mxu0 %v824
    %938 = vmatprep.subr.mxu0 0.0
    %939 = vmatpush1.msra.mxu0 0.0
    %940 = vmatprep.subr.mxu0 0.0
    %941 = vmatpush1.msra.mxu0 0.0
    %942 = vmatprep.subr.mxu0 0.0
    %943 = vmatpush1.msra.mxu0 0.0
    %944 = vmatprep.subr.mxu0 0.0
    %945 = vmatpush1.msra.mxu0 0.0
    %946 = vmatprep.subr.mxu0 0.0
    %947 = vmatpush1.msra.mxu0 0.0
    %948 = vmatprep.subr.mxu0 0.0
    %949 = vmatpush1.msra.mxu0 0.0
    %950 = vmatprep.subr.mxu0 0.0
    %951 = vmatpush1.msra.mxu0 0.0
    %952 = vmatprep.subr.mxu0 0.0
    %953 = vmatpush1.msra.mxu0 0.0
    %954 = vmatprep.subr.mxu0 0.0
    %955 = vmatpush1.msra.mxu0 0.0
    %956 = vmatprep.subr.mxu0 0.0
    %957 = vmatpush1.msra.mxu0 0.0
    %958 = vmatprep.subr.mxu0 0.0
    %959 = vmatpush1.msra.mxu0 0.0
    %960 = vmatprep.subr.mxu0 0.0
    %961 = vmatpush1.msra.mxu0 0.0
    %962 = vmatprep.subr.mxu0 0.0
    %963 = vmatpush1.msra.mxu0 0.0
    %964 = vmatprep.subr.mxu0 0.0
    %965 = vmatpush1.msra.mxu0 0.0
    %966 = vmatprep.subr.mxu0 0.0
    %967 = vmatpush1.msra.mxu0 0.0
    %968 = vmatprep.subr.mxu0 0.0
    %969 = vmatpush1.msra.mxu0 0.0
    %970 = vmatprep.subr.mxu0 0.0
    %971 = vmatpush1.msra.mxu0 0.0
    %972 = vmatprep.subr.mxu0 0.0
    %973 = vmatpush1.msra.mxu0 0.0
    %974 = vmatprep.subr.mxu0 0.0
    %975 = vmatpush1.msra.mxu0 0.0
    %976 = vmatprep.subr.mxu0 0.0
    %977 = vmatpush1.msra.mxu0 0.0
    %978 = vmatprep.subr.mxu0 0.0
    %979 = vmatpush1.msra.mxu0 0.0
    %980 = vmatprep.subr.mxu0 0.0
    %981 = vmatpush1.msra.mxu0 0.0
    %982 = vmatprep.subr.mxu0 0.0
    %983 = vmatpush1.msra.mxu0 0.0
    %984 = vmatprep.subr.mxu0 0.0
    %985 = vmatpush1.msra.mxu0 0.0
    %986 = vmatprep.subr.mxu0 0.0
    %987 = vmatpush1.msra.mxu0 0.0
    %988 = vmatprep.subr.mxu0 0.0
    %989 = vmatpush1.msra.mxu0 0.0
    %990 = vmatprep.subr.mxu0 0.0
    %991 = vmatpush1.msra.mxu0 0.0
    %992 = vmatprep.subr.mxu0 0.0
    %993 = vmatpush1.msra.mxu0 0.0
    %994 = vmatprep.mubr.f32.mxu0 0.0
    %995 = vmatmul.mubr.f32.gmra.mrb[0].mxu0 %v834
    %v996 = vpop.f32.mrb[0].mxu0
    %v997 = vadd.f32 0.0, %v996
    %v998 = vpop.f32.mrb[0].mxu0
    %999 = vmatprep.mubr.f32.mxu0 0.0
    %1000 = vmatmul.mubr.f32.gmra.mrb[0].mxu0 %v837
    %v1001 = vpop.f32.mrb[0].mxu0
    %v1002 = vadd.f32 0.0, %v1001
    %v1003 = vpop.f32.mrb[0].mxu0
    %1004 = vmatprep.mubr.f32.mxu0 0.0
    %1005 = vmatmul.mubr.f32.gmra.mrb[0].mxu0 %v840
    %v1006 = vpop.f32.mrb[0].mxu0
    %v1007 = vadd.f32 0.0, %v1006
    %v1008 = vpop.f32.mrb[0].mxu0
    %1009 = vmatprep.mubr.f32.mxu0 0.0
    %1010 = vmatmul.mubr.f32.gmra.mrb[0].mxu0 %v843
    %v1011 = vpop.f32.mrb[0].mxu0
    %v1012 = vadd.f32 0.0, %v1011
    %v1013 = vpop.f32.mrb[0].mxu0
    %1014 = vdwg.mxu0
    %v1016 = vsel %vm155, %v829, 0
    %v1019 = vsel %vm155, %v830, 0
    %v1022 = vsel %vm155, %v831, 0
    %v1025 = vsel %vm155, %v832, 0
    %1027 = vmatprep.subr.mxu0 0.0
    %1028 = vmatpush1.msra.mxu0 %v491
    %1029 = vmatprep.subr.mxu0 0.0
    %1030 = vmatpush1.msra.mxu0 %v492
    %1031 = vmatprep.subr.mxu0 0.0
    %1032 = vmatpush1.msra.mxu0 %v493
    %1033 = vmatprep.subr.mxu0 0.0
    %1034 = vmatpush1.msra.mxu0 %v494
    %1035 = vmatprep.subr.mxu0 0.0
    %1036 = vmatpush1.msra.mxu0 0.0
    %1037 = vmatprep.subr.mxu0 0.0
    %1038 = vmatpush1.msra.mxu0 0.0
    %1039 = vmatprep.subr.mxu0 0.0
    %1040 = vmatpush1.msra.mxu0 0.0
    %1041 = vmatprep.subr.mxu0 0.0
    %1042 = vmatpush1.msra.mxu0 0.0
    %1043 = vmatprep.subr.mxu0 0.0
    %1044 = vmatpush1.msra.mxu0 0.0
    %1045 = vmatprep.subr.mxu0 0.0
    %1046 = vmatpush1.msra.mxu0 0.0
    %1047 = vmatprep.subr.mxu0 0.0
    %1048 = vmatpush1.msra.mxu0 0.0
    %1049 = vmatprep.subr.mxu0 0.0
    %1050 = vmatpush1.msra.mxu0 0.0
    %1051 = vmatprep.subr.mxu0 0.0
    %1052 = vmatpush1.msra.mxu0 0.0
    %1053 = vmatprep.subr.mxu0 0.0
    %1054 = vmatpush1.msra.mxu0 0.0
    %1055 = vmatprep.subr.mxu0 0.0
    %1056 = vmatpush1.msra.mxu0 0.0
    %1057 = vmatprep.subr.mxu0 0.0
    %1058 = vmatpush1.msra.mxu0 0.0
    %1059 = vmatprep.subr.mxu0 0.0
    %1060 = vmatpush1.msra.mxu0 0.0
    %1061 = vmatprep.subr.mxu0 0.0
    %1062 = vmatpush1.msra.mxu0 0.0
    %1063 = vmatprep.subr.mxu0 0.0
    %1064 = vmatpush1.msra.mxu0 0.0
    %1065 = vmatprep.subr.mxu0 0.0
    %1066 = vmatpush1.msra.mxu0 0.0
    %1067 = vmatprep.subr.mxu0 0.0
    %1068 = vmatpush1.msra.mxu0 0.0
    %1069 = vmatprep.subr.mxu0 0.0
    %1070 = vmatpush1.msra.mxu0 0.0
    %1071 = vmatprep.subr.mxu0 0.0
    %1072 = vmatpush1.msra.mxu0 0.0
    %1073 = vmatprep.subr.mxu0 0.0
    %1074 = vmatpush1.msra.mxu0 0.0
    %1075 = vmatprep.subr.mxu0 0.0
    %1076 = vmatpush1.msra.mxu0 0.0
    %1077 = vmatprep.subr.mxu0 0.0
    %1078 = vmatpush1.msra.mxu0 0.0
    %1079 = vmatprep.subr.mxu0 0.0
    %1080 = vmatpush1.msra.mxu0 0.0
    %1081 = vmatprep.subr.mxu0 0.0
    %1082 = vmatpush1.msra.mxu0 0.0
    %1083 = vmatprep.subr.mxu0 0.0
    %1084 = vmatpush1.msra.mxu0 0.0
    %1085 = vmatprep.subr.mxu0 0.0
    %1086 = vmatpush1.msra.mxu0 0.0
    %1087 = vmatprep.subr.mxu0 0.0
    %1088 = vmatpush1.msra.mxu0 0.0
    %1089 = vmatprep.subr.mxu0 0.0
    %1090 = vmatpush1.msra.mxu0 0.0
    %1091 = vmatprep.mubr.f32.mxu0 0.0
    %1092 = vmatmul.mubr.f32.gmra.mrb[0].mxu0 %v1016
    %v1093 = vpop.f32.mrb[0].mxu0
    %v1094 = vadd.f32 0.0, %v1093
    %v1095 = vpop.f32.mrb[0].mxu0
    %1096 = vmatprep.mubr.f32.mxu0 0.0
    %1097 = vmatmul.mubr.f32.gmra.mrb[0].mxu0 %v1019
    %v1098 = vpop.f32.mrb[0].mxu0
    %v1099 = vadd.f32 0.0, %v1098
    %v1100 = vpop.f32.mrb[0].mxu0
    %1101 = vmatprep.mubr.f32.mxu0 0.0
    %1102 = vmatmul.mubr.f32.gmra.mrb[0].mxu0 %v1022
    %v1103 = vpop.f32.mrb[0].mxu0
    %v1104 = vadd.f32 0.0, %v1103
    %v1105 = vpop.f32.mrb[0].mxu0
    %1106 = vmatprep.mubr.f32.mxu0 0.0
    %1107 = vmatmul.mubr.f32.gmra.mrb[0].mxu0 %v1025
    %v1108 = vpop.f32.mrb[0].mxu0
    %v1109 = vadd.f32 0.0, %v1108
    %v1110 = vpop.f32.mrb[0].mxu0
    %1111 = vdwg.mxu0
    %1112 = vmatprep.subr.mxu0 0.0
    %1113 = vmatpush1.msra.mxu0 %v821
    %1114 = vmatprep.subr.mxu0 0.0
    %1115 = vmatpush1.msra.mxu0 %v822
    %1116 = vmatprep.subr.mxu0 0.0
    %1117 = vmatpush1.msra.mxu0 %v823
    %1118 = vmatprep.subr.mxu0 0.0
    %1119 = vmatpush1.msra.mxu0 %v824
    %1120 = vmatprep.subr.mxu0 0.0
    %1121 = vmatpush1.msra.mxu0 0.0
    %1122 = vmatprep.subr.mxu0 0.0
    %1123 = vmatpush1.msra.mxu0 0.0
    %1124 = vmatprep.subr.mxu0 0.0
    %1125 = vmatpush1.msra.mxu0 0.0
    %1126 = vmatprep.subr.mxu0 0.0
    %1127 = vmatpush1.msra.mxu0 0.0
    %1128 = vmatprep.subr.mxu0 0.0
    %1129 = vmatpush1.msra.mxu0 0.0
    %1130 = vmatprep.subr.mxu0 0.0
    %1131 = vmatpush1.msra.mxu0 0.0
    %1132 = vmatprep.subr.mxu0 0.0
    %1133 = vmatpush1.msra.mxu0 0.0
    %1134 = vmatprep.subr.mxu0 0.0
    %1135 = vmatpush1.msra.mxu0 0.0
    %1136 = vmatprep.subr.mxu0 0.0
    %1137 = vmatpush1.msra.mxu0 0.0
    %1138 = vmatprep.subr.mxu0 0.0
    %1139 = vmatpush1.msra.mxu0 0.0
    %1140 = vmatprep.subr.mxu0 0.0
    %1141 = vmatpush1.msra.mxu0 0.0
    %1142 = vmatprep.subr.mxu0 0.0
    %1143 = vmatpush1.msra.mxu0 0.0
    %1144 = vmatprep.subr.mxu0 0.0
    %1145 = vmatpush1.msra.mxu0 0.0
    %1146 = vmatprep.subr.mxu0 0.0
    %1147 = vmatpush1.msra.mxu0 0.0
    %1148 = vmatprep.subr.mxu0 0.0
    %1149 = vmatpush1.msra.mxu0 0.0
    %1150 = vmatprep.subr.mxu0 0.0
    %1151 = vmatpush1.msra.mxu0 0.0
    %1152 = vmatprep.subr.mxu0 0.0
    %1153 = vmatpush1.msra.mxu0 0.0
    %1154 = vmatprep.subr.mxu0 0.0
    %1155 = vmatpush1.msra.mxu0 0.0
    %1156 = vmatprep.subr.mxu0 0.0
    %1157 = vmatpush1.msra.mxu0 0.0
    %1158 = vmatprep.subr.mxu0 0.0
    %1159 = vmatpush1.msra.mxu0 0.0
    %1160 = vmatprep.subr.mxu0 0.0
    %1161 = vmatpush1.msra.mxu0 0.0
    %1162 = vmatprep.subr.mxu0 0.0
    %1163 = vmatpush1.msra.mxu0 0.0
    %1164 = vmatprep.subr.mxu0 0.0
    %1165 = vmatpush1.msra.mxu0 0.0
    %1166 = vmatprep.subr.mxu0 0.0
    %1167 = vmatpush1.msra.mxu0 0.0
    %1168 = vmatprep.subr.mxu0 0.0
    %1169 = vmatpush1.msra.mxu0 0.0
    %1170 = vmatprep.subr.mxu0 0.0
    %1171 = vmatpush1.msra.mxu0 0.0
    %1172 = vmatprep.subr.mxu0 0.0
    %1173 = vmatpush1.msra.mxu0 0.0
    %1174 = vmatprep.subr.mxu0 0.0
    %1175 = vmatpush1.msra.mxu0 0.0
    %1176 = vmatprep.mubr.f32.mxu0 0.0
    %1177 = vmatmul.mubr.f32.gmra.mrb[0].mxu0 %v1016
    %v1178 = vpop.f32.mrb[0].mxu0
    %v1179 = vadd.f32 0.0, %v1178
    %v1180 = vpop.f32.mrb[0].mxu0
    %1181 = vmatprep.mubr.f32.mxu0 0.0
    %1182 = vmatmul.mubr.f32.gmra.mrb[0].mxu0 %v1019
    %v1183 = vpop.f32.mrb[0].mxu0
    %v1184 = vadd.f32 0.0, %v1183
    %v1185 = vpop.f32.mrb[0].mxu0
    %1186 = vmatprep.mubr.f32.mxu0 0.0
    %1187 = vmatmul.mubr.f32.gmra.mrb[0].mxu0 %v1022
    %v1188 = vpop.f32.mrb[0].mxu0
    %v1189 = vadd.f32 0.0, %v1188
    %v1190 = vpop.f32.mrb[0].mxu0
    %1191 = vmatprep.mubr.f32.mxu0 0.0
    %1192 = vmatmul.mubr.f32.gmra.mrb[0].mxu0 %v1025
    %v1193 = vpop.f32.mrb[0].mxu0
    %v1194 = vadd.f32 0.0, %v1193
    %v1195 = vpop.f32.mrb[0].mxu0
    %1196 = vdwg.mxu0
    %v1197 = vld [vmem:[%s23] sm:$0xff]
    %v1198 = vld [vmem:[%s23 + $0x8] sm:$0xff]
    %v1199 = vld [vmem:[%s23 + $0x10] sm:$0xff]
    %v1200 = vld [vmem:[%s23 + $0x18] sm:$0xff]
    %v1201 = vld [vmem:[%s25] sm:$0xff]
    %v1202 = vld [vmem:[%s25 + $0x8] sm:$0xff]
    %v1203 = vld [vmem:[%s25 + $0x10] sm:$0xff]
    %v1204 = vld [vmem:[%s25 + $0x18] sm:$0xff]
    %v1206 = vsel %vm155, %v1179, 0
    %v1209 = vsel %vm155, %v1184, 0
    %v1212 = vsel %vm155, %v1189, 0
    %v1215 = vsel %vm155, %v1194, 0
    %1217 = vmatprep.subr.mxu0 0.0
    %1218 = vmatpush1.msra.mxu0 %v1201
    %1219 = vmatprep.subr.mxu0 0.0
    %1220 = vmatpush1.msra.mxu0 %v1202
    %1221 = vmatprep.subr.mxu0 0.0
    %1222 = vmatpush1.msra.mxu0 %v1203
    %1223 = vmatprep.subr.mxu0 0.0
    %1224 = vmatpush1.msra.mxu0 %v1204
    %1225 = vmatprep.subr.mxu0 0.0
    %1226 = vmatpush1.msra.mxu0 0.0
    %1227 = vmatprep.subr.mxu0 0.0
    %1228 = vmatpush1.msra.mxu0 0.0
    %1229 = vmatprep.subr.mxu0 0.0
    %1230 = vmatpush1.msra.mxu0 0.0
    %1231 = vmatprep.subr.mxu0 0.0
    %1232 = vmatpush1.msra.mxu0 0.0
    %1233 = vmatprep.subr.mxu0 0.0
    %1234 = vmatpush1.msra.mxu0 0.0
    %1235 = vmatprep.subr.mxu0 0.0
    %1236 = vmatpush1.msra.mxu0 0.0
    %1237 = vmatprep.subr.mxu0 0.0
    %1238 = vmatpush1.msra.mxu0 0.0
    %1239 = vmatprep.subr.mxu0 0.0
    %1240 = vmatpush1.msra.mxu0 0.0
    %1241 = vmatprep.subr.mxu0 0.0
    %1242 = vmatpush1.msra.mxu0 0.0
    %1243 = vmatprep.subr.mxu0 0.0
    %1244 = vmatpush1.msra.mxu0 0.0
    %1245 = vmatprep.subr.mxu0 0.0
    %1246 = vmatpush1.msra.mxu0 0.0
    %1247 = vmatprep.subr.mxu0 0.0
    %1248 = vmatpush1.msra.mxu0 0.0
    %1249 = vmatprep.subr.mxu0 0.0
    %1250 = vmatpush1.msra.mxu0 0.0
    %1251 = vmatprep.subr.mxu0 0.0
    %1252 = vmatpush1.msra.mxu0 0.0
    %1253 = vmatprep.subr.mxu0 0.0
    %1254 = vmatpush1.msra.mxu0 0.0
    %1255 = vmatprep.subr.mxu0 0.0
    %1256 = vmatpush1.msra.mxu0 0.0
    %1257 = vmatprep.subr.mxu0 0.0
    %1258 = vmatpush1.msra.mxu0 0.0
    %1259 = vmatprep.subr.mxu0 0.0
    %1260 = vmatpush1.msra.mxu0 0.0
    %1261 = vmatprep.subr.mxu0 0.0
    %1262 = vmatpush1.msra.mxu0 0.0
    %1263 = vmatprep.subr.mxu0 0.0
    %1264 = vmatpush1.msra.mxu0 0.0
    %1265 = vmatprep.subr.mxu0 0.0
    %1266 = vmatpush1.msra.mxu0 0.0
    %1267 = vmatprep.subr.mxu0 0.0
    %1268 = vmatpush1.msra.mxu0 0.0
    %1269 = vmatprep.subr.mxu0 0.0
    %1270 = vmatpush1.msra.mxu0 0.0
    %1271 = vmatprep.subr.mxu0 0.0
    %1272 = vmatpush1.msra.mxu0 0.0
    %1273 = vmatprep.subr.mxu0 0.0
    %1274 = vmatpush1.msra.mxu0 0.0
    %1275 = vmatprep.subr.mxu0 0.0
    %1276 = vmatpush1.msra.mxu0 0.0
    %1277 = vmatprep.subr.mxu0 0.0
    %1278 = vmatpush1.msra.mxu0 0.0
    %1279 = vmatprep.subr.mxu0 0.0
    %1280 = vmatpush1.msra.mxu0 0.0
    %1281 = vmatprep.mubr.f32.mxu0 0.0
    %1282 = vmatmul.mubr.f32.gmra.mrb[0].mxu0 %v1206
    %v1283 = vpop.f32.mrb[0].mxu0
    %v1284 = vadd.f32 0.0, %v1283
    %v1285 = vpop.f32.mrb[0].mxu0
    %1286 = vmatprep.mubr.f32.mxu0 0.0
    %1287 = vmatmul.mubr.f32.gmra.mrb[0].mxu0 %v1209
    %v1288 = vpop.f32.mrb[0].mxu0
    %v1289 = vadd.f32 0.0, %v1288
    %v1290 = vpop.f32.mrb[0].mxu0
    %1291 = vmatprep.mubr.f32.mxu0 0.0
    %1292 = vmatmul.mubr.f32.gmra.mrb[0].mxu0 %v1212
    %v1293 = vpop.f32.mrb[0].mxu0
    %v1294 = vadd.f32 0.0, %v1293
    %v1295 = vpop.f32.mrb[0].mxu0
    %1296 = vmatprep.mubr.f32.mxu0 0.0
    %1297 = vmatmul.mubr.f32.gmra.mrb[0].mxu0 %v1215
    %v1298 = vpop.f32.mrb[0].mxu0
    %v1299 = vadd.f32 0.0, %v1298
    %v1300 = vpop.f32.mrb[0].mxu0
    %1301 = vdwg.mxu0
    %v1303 = vsel %vm155, %v912, 0
    %v1306 = vsel %vm155, %v917, 0
    %v1309 = vsel %vm155, %v922, 0
    %v1312 = vsel %vm155, %v927, 0
    %1314 = vmatprep.subr.mxu0 0.0
    %1315 = vmatpush1.msra.mxu0 %v1197
    %1316 = vmatprep.subr.mxu0 0.0
    %1317 = vmatpush1.msra.mxu0 %v1198
    %1318 = vmatprep.subr.mxu0 0.0
    %1319 = vmatpush1.msra.mxu0 %v1199
    %1320 = vmatprep.subr.mxu0 0.0
    %1321 = vmatpush1.msra.mxu0 %v1200
    %1322 = vmatprep.subr.mxu0 0.0
    %1323 = vmatpush1.msra.mxu0 0.0
    %1324 = vmatprep.subr.mxu0 0.0
    %1325 = vmatpush1.msra.mxu0 0.0
    %1326 = vmatprep.subr.mxu0 0.0
    %1327 = vmatpush1.msra.mxu0 0.0
    %1328 = vmatprep.subr.mxu0 0.0
    %1329 = vmatpush1.msra.mxu0 0.0
    %1330 = vmatprep.subr.mxu0 0.0
    %1331 = vmatpush1.msra.mxu0 0.0
    %1332 = vmatprep.subr.mxu0 0.0
    %1333 = vmatpush1.msra.mxu0 0.0
    %1334 = vmatprep.subr.mxu0 0.0
    %1335 = vmatpush1.msra.mxu0 0.0
    %1336 = vmatprep.subr.mxu0 0.0
    %1337 = vmatpush1.msra.mxu0 0.0
    %1338 = vmatprep.subr.mxu0 0.0
    %1339 = vmatpush1.msra.mxu0 0.0
    %1340 = vmatprep.subr.mxu0 0.0
    %1341 = vmatpush1.msra.mxu0 0.0
    %1342 = vmatprep.subr.mxu0 0.0
    %1343 = vmatpush1.msra.mxu0 0.0
    %1344 = vmatprep.subr.mxu0 0.0
    %1345 = vmatpush1.msra.mxu0 0.0
    %1346 = vmatprep.subr.mxu0 0.0
    %1347 = vmatpush1.msra.mxu0 0.0
    %1348 = vmatprep.subr.mxu0 0.0
    %1349 = vmatpush1.msra.mxu0 0.0
    %1350 = vmatprep.subr.mxu0 0.0
    %1351 = vmatpush1.msra.mxu0 0.0
    %1352 = vmatprep.subr.mxu0 0.0
    %1353 = vmatpush1.msra.mxu0 0.0
    %1354 = vmatprep.subr.mxu0 0.0
    %1355 = vmatpush1.msra.mxu0 0.0
    %1356 = vmatprep.subr.mxu0 0.0
    %1357 = vmatpush1.msra.mxu0 0.0
    %1358 = vmatprep.subr.mxu0 0.0
    %1359 = vmatpush1.msra.mxu0 0.0
    %1360 = vmatprep.subr.mxu0 0.0
    %1361 = vmatpush1.msra.mxu0 0.0
    %1362 = vmatprep.subr.mxu0 0.0
    %1363 = vmatpush1.msra.mxu0 0.0
    %1364 = vmatprep.subr.mxu0 0.0
    %1365 = vmatpush1.msra.mxu0 0.0
    %1366 = vmatprep.subr.mxu0 0.0
    %1367 = vmatpush1.msra.mxu0 0.0
    %1368 = vmatprep.subr.mxu0 0.0
    %1369 = vmatpush1.msra.mxu0 0.0
    %1370 = vmatprep.subr.mxu0 0.0
    %1371 = vmatpush1.msra.mxu0 0.0
    %1372 = vmatprep.subr.mxu0 0.0
    %1373 = vmatpush1.msra.mxu0 0.0
    %1374 = vmatprep.subr.mxu0 0.0
    %1375 = vmatpush1.msra.mxu0 0.0
    %1376 = vmatprep.subr.mxu0 0.0
    %1377 = vmatpush1.msra.mxu0 0.0
    %1378 = vmatprep.mubr.f32.mxu0 0.0
    %1379 = vmatmul.mubr.f32.gmra.mrb[0].mxu0 %v1303
    %v1380 = vpop.f32.mrb[0].mxu0
    %v1381 = vadd.f32 %v1284, %v1380
    %v1382 = vpop.f32.mrb[0].mxu0
    %1383 = vmatprep.mubr.f32.mxu0 0.0
    %1384 = vmatmul.mubr.f32.gmra.mrb[0].mxu0 %v1306
    %v1385 = vpop.f32.mrb[0].mxu0
    %v1386 = vadd.f32 %v1289, %v1385
    %v1387 = vpop.f32.mrb[0].mxu0
    %1388 = vmatprep.mubr.f32.mxu0 0.0
    %1389 = vmatmul.mubr.f32.gmra.mrb[0].mxu0 %v1309
    %v1390 = vpop.f32.mrb[0].mxu0
    %v1391 = vadd.f32 %v1294, %v1390
    %v1392 = vpop.f32.mrb[0].mxu0
    %1393 = vmatprep.mubr.f32.mxu0 0.0
    %1394 = vmatmul.mubr.f32.gmra.mrb[0].mxu0 %v1312
    %v1395 = vpop.f32.mrb[0].mxu0
    %v1396 = vadd.f32 %v1299, %v1395
    %v1397 = vpop.f32.mrb[0].mxu0
    %1398 = vdwg.mxu0
    %v1399 = vld [vmem:[%s27] sm:$0xff]
    %v1400 = vld [vmem:[%s27 + $0x8] sm:$0xff]
    %v1401 = vld [vmem:[%s27 + $0x10] sm:$0xff]
    %v1402 = vld [vmem:[%s27 + $0x18] sm:$0xff]
    %v1404 = vsel %vm155, %v491, 0
    %v1407 = vsel %vm155, %v492, 0
    %v1410 = vsel %vm155, %v493, 0
    %v1413 = vsel %vm155, %v494, 0
    %1415 = vmatprep.subr.mxu0 0.0
    %1416 = vmatpush1.msra.mxu0 %v1399
    %1417 = vmatprep.subr.mxu0 0.0
    %1418 = vmatpush1.msra.mxu0 %v1400
    %1419 = vmatprep.subr.mxu0 0.0
    %1420 = vmatpush1.msra.mxu0 %v1401
    %1421 = vmatprep.subr.mxu0 0.0
    %1422 = vmatpush1.msra.mxu0 %v1402
    %1423 = vmatprep.subr.mxu0 0.0
    %1424 = vmatpush1.msra.mxu0 0.0
    %1425 = vmatprep.subr.mxu0 0.0
    %1426 = vmatpush1.msra.mxu0 0.0
    %1427 = vmatprep.subr.mxu0 0.0
    %1428 = vmatpush1.msra.mxu0 0.0
    %1429 = vmatprep.subr.mxu0 0.0
    %1430 = vmatpush1.msra.mxu0 0.0
    %1431 = vmatprep.subr.mxu0 0.0
    %1432 = vmatpush1.msra.mxu0 0.0
    %1433 = vmatprep.subr.mxu0 0.0
    %1434 = vmatpush1.msra.mxu0 0.0
    %1435 = vmatprep.subr.mxu0 0.0
    %1436 = vmatpush1.msra.mxu0 0.0
    %1437 = vmatprep.subr.mxu0 0.0
    %1438 = vmatpush1.msra.mxu0 0.0
    %1439 = vmatprep.subr.mxu0 0.0
    %1440 = vmatpush1.msra.mxu0 0.0
    %1441 = vmatprep.subr.mxu0 0.0
    %1442 = vmatpush1.msra.mxu0 0.0
    %1443 = vmatprep.subr.mxu0 0.0
    %1444 = vmatpush1.msra.mxu0 0.0
    %1445 = vmatprep.subr.mxu0 0.0
    %1446 = vmatpush1.msra.mxu0 0.0
    %1447 = vmatprep.subr.mxu0 0.0
    %1448 = vmatpush1.msra.mxu0 0.0
    %1449 = vmatprep.subr.mxu0 0.0
    %1450 = vmatpush1.msra.mxu0 0.0
    %1451 = vmatprep.subr.mxu0 0.0
    %1452 = vmatpush1.msra.mxu0 0.0
    %1453 = vmatprep.subr.mxu0 0.0
    %1454 = vmatpush1.msra.mxu0 0.0
    %1455 = vmatprep.subr.mxu0 0.0
    %1456 = vmatpush1.msra.mxu0 0.0
    %1457 = vmatprep.subr.mxu0 0.0
    %1458 = vmatpush1.msra.mxu0 0.0
    %1459 = vmatprep.subr.mxu0 0.0
    %1460 = vmatpush1.msra.mxu0 0.0
    %1461 = vmatprep.subr.mxu0 0.0
    %1462 = vmatpush1.msra.mxu0 0.0
    %1463 = vmatprep.subr.mxu0 0.0
    %1464 = vmatpush1.msra.mxu0 0.0
    %1465 = vmatprep.subr.mxu0 0.0
    %1466 = vmatpush1.msra.mxu0 0.0
    %1467 = vmatprep.subr.mxu0 0.0
    %1468 = vmatpush1.msra.mxu0 0.0
    %1469 = vmatprep.subr.mxu0 0.0
    %1470 = vmatpush1.msra.mxu0 0.0
    %1471 = vmatprep.subr.mxu0 0.0
    %1472 = vmatpush1.msra.mxu0 0.0
    %1473 = vmatprep.subr.mxu0 0.0
    %1474 = vmatpush1.msra.mxu0 0.0
    %1475 = vmatprep.subr.mxu0 0.0
    %1476 = vmatpush1.msra.mxu0 0.0
    %1477 = vmatprep.subr.mxu0 0.0
    %1478 = vmatpush1.msra.mxu0 0.0
    %1479 = vmatprep.mubr.f32.mxu0 0.0
    %1480 = vmatmul.mubr.f32.gmra.mrb[0].mxu0 %v1404
    %v1481 = vpop.f32.mrb[0].mxu0
    %v1482 = vadd.f32 0.0, %v1481
    %v1483 = vpop.f32.mrb[0].mxu0
    %1484 = vmatprep.mubr.f32.mxu0 0.0
    %1485 = vmatmul.mubr.f32.gmra.mrb[0].mxu0 %v1407
    %v1486 = vpop.f32.mrb[0].mxu0
    %v1487 = vadd.f32 0.0, %v1486
    %v1488 = vpop.f32.mrb[0].mxu0
    %1489 = vmatprep.mubr.f32.mxu0 0.0
    %1490 = vmatmul.mubr.f32.gmra.mrb[0].mxu0 %v1410
    %v1491 = vpop.f32.mrb[0].mxu0
    %v1492 = vadd.f32 0.0, %v1491
    %v1493 = vpop.f32.mrb[0].mxu0
    %1494 = vmatprep.mubr.f32.mxu0 0.0
    %1495 = vmatmul.mubr.f32.gmra.mrb[0].mxu0 %v1413
    %v1496 = vpop.f32.mrb[0].mxu0
    %v1497 = vadd.f32 0.0, %v1496
    %v1498 = vpop.f32.mrb[0].mxu0
    %1499 = vdwg.mxu0
    %v1500 = vadd.f32 %v1381, %v1482
    %v1501 = vadd.f32 %v1386, %v1487
    %v1502 = vadd.f32 %v1391, %v1492
    %v1503 = vadd.f32 %v1396, %v1497
    %v1504 = vld [vmem:[%s29] sm:$0x1]
    %v1506 = vlaneseq
    %v1507 = vshrl.u32 %v1506, 7
    %v1508 = vsub.s32 0, %v1507
    %v1509 = vrot.slane %v1504, %v1508
    %v1511 = vadd.f32 %v1500, %v1509
    %v1512 = vadd.f32 %v1501, %v1509
    %v1513 = vadd.f32 %v1502, %v1509
    %v1514 = vadd.f32 %v1503, %v1509
    %v1515 = vmul.f32 %v1511, %v1511
    %v1516 = vmul.f32 %v1512, %v1512
    %v1517 = vmul.f32 %v1513, %v1513
    %v1518 = vmul.f32 %v1514, %v1514
    %v1519 = vsel %vm257, %v1515, 0.0
    %1520 = vadd.xlane.f32.xlu0 %v1519
    %v1521 = vpop.xlane.xlu0 %1520
    %v1522 = vsel %vm257, %v1516, 0.0
    %1523 = vadd.xlane.f32.xlu0 %v1522
    %v1524 = vpop.xlane.xlu0 %1523
    %v1525 = vsel %vm257, %v1517, 0.0
    %1526 = vadd.xlane.f32.xlu0 %v1525
    %v1527 = vpop.xlane.xlu0 %1526
    %v1528 = vsel %vm257, %v1518, 0.0
    %1529 = vadd.xlane.f32.xlu0 %v1528
    %v1530 = vpop.xlane.xlu0 %1529
    %v1531 = vmax.f32 %v1521, 1e-24
    %v1532 = vmax.f32 %v1524, 1e-24
    %v1533 = vmax.f32 %v1527, 1e-24
    %v1534 = vmax.f32 %v1530, 1e-24
    %v1535 = vrsqrt.pop %v1531
    %v1536 = vrsqrt.pop %v1532
    %v1537 = vrsqrt.pop %v1533
    %v1538 = vrsqrt.pop %v1534
    %v1539 = vmul.f32 %v1511, %v1535
    %v1540 = vmul.f32 %v1512, %v1536
    %v1541 = vmul.f32 %v1513, %v1537
    %v1542 = vmul.f32 %v1514, %v1538
    %v1543 = vtanh.pop %v1539
    %v1544 = vtanh.pop %v1540
    %v1545 = vtanh.pop %v1541
    %v1546 = vtanh.pop %v1542
    %v1547 = vld [vmem:[%s31] sm:$0xff]
    %v1548 = vld [vmem:[%s31 + $0x8] sm:$0xff]
    %v1549 = vld [vmem:[%s31 + $0x10] sm:$0xff]
    %v1550 = vld [vmem:[%s31 + $0x18] sm:$0xff]
    %v1551 = vld [vmem:[%s33] sm:$0xff]
    %v1552 = vld [vmem:[%s33 + $0x8] sm:$0xff]
    %v1553 = vld [vmem:[%s33 + $0x10] sm:$0xff]
    %v1554 = vld [vmem:[%s33 + $0x18] sm:$0xff]
    %v1556 = vsel %vm155, %v1094, 0
    %v1559 = vsel %vm155, %v1099, 0
    %v1562 = vsel %vm155, %v1104, 0
    %v1565 = vsel %vm155, %v1109, 0
    %1567 = vmatprep.subr.mxu0 0.0
    %1568 = vmatpush1.msra.mxu0 %v1551
    %1569 = vmatprep.subr.mxu0 0.0
    %1570 = vmatpush1.msra.mxu0 %v1552
    %1571 = vmatprep.subr.mxu0 0.0
    %1572 = vmatpush1.msra.mxu0 %v1553
    %1573 = vmatprep.subr.mxu0 0.0
    %1574 = vmatpush1.msra.mxu0 %v1554
    %1575 = vmatprep.subr.mxu0 0.0
    %1576 = vmatpush1.msra.mxu0 0.0
    %1577 = vmatprep.subr.mxu0 0.0
    %1578 = vmatpush1.msra.mxu0 0.0
    %1579 = vmatprep.subr.mxu0 0.0
    %1580 = vmatpush1.msra.mxu0 0.0
    %1581 = vmatprep.subr.mxu0 0.0
    %1582 = vmatpush1.msra.mxu0 0.0
    %1583 = vmatprep.subr.mxu0 0.0
    %1584 = vmatpush1.msra.mxu0 0.0
    %1585 = vmatprep.subr.mxu0 0.0
    %1586 = vmatpush1.msra.mxu0 0.0
    %1587 = vmatprep.subr.mxu0 0.0
    %1588 = vmatpush1.msra.mxu0 0.0
    %1589 = vmatprep.subr.mxu0 0.0
    %1590 = vmatpush1.msra.mxu0 0.0
    %1591 = vmatprep.subr.mxu0 0.0
    %1592 = vmatpush1.msra.mxu0 0.0
    %1593 = vmatprep.subr.mxu0 0.0
    %1594 = vmatpush1.msra.mxu0 0.0
    %1595 = vmatprep.subr.mxu0 0.0
    %1596 = vmatpush1.msra.mxu0 0.0
    %1597 = vmatprep.subr.mxu0 0.0
    %1598 = vmatpush1.msra.mxu0 0.0
    %1599 = vmatprep.subr.mxu0 0.0
    %1600 = vmatpush1.msra.mxu0 0.0
    %1601 = vmatprep.subr.mxu0 0.0
    %1602 = vmatpush1.msra.mxu0 0.0
    %1603 = vmatprep.subr.mxu0 0.0
    %1604 = vmatpush1.msra.mxu0 0.0
    %1605 = vmatprep.subr.mxu0 0.0
    %1606 = vmatpush1.msra.mxu0 0.0
    %1607 = vmatprep.subr.mxu0 0.0
    %1608 = vmatpush1.msra.mxu0 0.0
    %1609 = vmatprep.subr.mxu0 0.0
    %1610 = vmatpush1.msra.mxu0 0.0
    %1611 = vmatprep.subr.mxu0 0.0
    %1612 = vmatpush1.msra.mxu0 0.0
    %1613 = vmatprep.subr.mxu0 0.0
    %1614 = vmatpush1.msra.mxu0 0.0
    %1615 = vmatprep.subr.mxu0 0.0
    %1616 = vmatpush1.msra.mxu0 0.0
    %1617 = vmatprep.subr.mxu0 0.0
    %1618 = vmatpush1.msra.mxu0 0.0
    %1619 = vmatprep.subr.mxu0 0.0
    %1620 = vmatpush1.msra.mxu0 0.0
    %1621 = vmatprep.subr.mxu0 0.0
    %1622 = vmatpush1.msra.mxu0 0.0
    %1623 = vmatprep.subr.mxu0 0.0
    %1624 = vmatpush1.msra.mxu0 0.0
    %1625 = vmatprep.subr.mxu0 0.0
    %1626 = vmatpush1.msra.mxu0 0.0
    %1627 = vmatprep.subr.mxu0 0.0
    %1628 = vmatpush1.msra.mxu0 0.0
    %1629 = vmatprep.subr.mxu0 0.0
    %1630 = vmatpush1.msra.mxu0 0.0
    %1631 = vmatprep.mubr.f32.mxu0 0.0
    %1632 = vmatmul.mubr.f32.gmra.mrb[0].mxu0 %v1556
    %v1633 = vpop.f32.mrb[0].mxu0
    %v1634 = vadd.f32 0.0, %v1633
    %v1635 = vpop.f32.mrb[0].mxu0
    %1636 = vmatprep.mubr.f32.mxu0 0.0
    %1637 = vmatmul.mubr.f32.gmra.mrb[0].mxu0 %v1559
    %v1638 = vpop.f32.mrb[0].mxu0
    %v1639 = vadd.f32 0.0, %v1638
    %v1640 = vpop.f32.mrb[0].mxu0
    %1641 = vmatprep.mubr.f32.mxu0 0.0
    %1642 = vmatmul.mubr.f32.gmra.mrb[0].mxu0 %v1562
    %v1643 = vpop.f32.mrb[0].mxu0
    %v1644 = vadd.f32 0.0, %v1643
    %v1645 = vpop.f32.mrb[0].mxu0
    %1646 = vmatprep.mubr.f32.mxu0 0.0
    %1647 = vmatmul.mubr.f32.gmra.mrb[0].mxu0 %v1565
    %v1648 = vpop.f32.mrb[0].mxu0
    %v1649 = vadd.f32 0.0, %v1648
    %v1650 = vpop.f32.mrb[0].mxu0
    %1651 = vdwg.mxu0
    %v1653 = vsel %vm155, %v997, 0
    %v1656 = vsel %vm155, %v1002, 0
    %v1659 = vsel %vm155, %v1007, 0
    %v1662 = vsel %vm155, %v1012, 0
    %1664 = vmatprep.subr.mxu0 0.0
    %1665 = vmatpush1.msra.mxu0 %v1547
    %1666 = vmatprep.subr.mxu0 0.0
    %1667 = vmatpush1.msra.mxu0 %v1548
    %1668 = vmatprep.subr.mxu0 0.0
    %1669 = vmatpush1.msra.mxu0 %v1549
    %1670 = vmatprep.subr.mxu0 0.0
    %1671 = vmatpush1.msra.mxu0 %v1550
    %1672 = vmatprep.subr.mxu0 0.0
    %1673 = vmatpush1.msra.mxu0 0.0
    %1674 = vmatprep.subr.mxu0 0.0
    %1675 = vmatpush1.msra.mxu0 0.0
    %1676 = vmatprep.subr.mxu0 0.0
    %1677 = vmatpush1.msra.mxu0 0.0
    %1678 = vmatprep.subr.mxu0 0.0
    %1679 = vmatpush1.msra.mxu0 0.0
    %1680 = vmatprep.subr.mxu0 0.0
    %1681 = vmatpush1.msra.mxu0 0.0
    %1682 = vmatprep.subr.mxu0 0.0
    %1683 = vmatpush1.msra.mxu0 0.0
    %1684 = vmatprep.subr.mxu0 0.0
    %1685 = vmatpush1.msra.mxu0 0.0
    %1686 = vmatprep.subr.mxu0 0.0
    %1687 = vmatpush1.msra.mxu0 0.0
    %1688 = vmatprep.subr.mxu0 0.0
    %1689 = vmatpush1.msra.mxu0 0.0
    %1690 = vmatprep.subr.mxu0 0.0
    %1691 = vmatpush1.msra.mxu0 0.0
    %1692 = vmatprep.subr.mxu0 0.0
    %1693 = vmatpush1.msra.mxu0 0.0
    %1694 = vmatprep.subr.mxu0 0.0
    %1695 = vmatpush1.msra.mxu0 0.0
    %1696 = vmatprep.subr.mxu0 0.0
    %1697 = vmatpush1.msra.mxu0 0.0
    %1698 = vmatprep.subr.mxu0 0.0
    %1699 = vmatpush1.msra.mxu0 0.0
    %1700 = vmatprep.subr.mxu0 0.0
    %1701 = vmatpush1.msra.mxu0 0.0
    %1702 = vmatprep.subr.mxu0 0.0
    %1703 = vmatpush1.msra.mxu0 0.0
    %1704 = vmatprep.subr.mxu0 0.0
    %1705 = vmatpush1.msra.mxu0 0.0
    %1706 = vmatprep.subr.mxu0 0.0
    %1707 = vmatpush1.msra.mxu0 0.0
    %1708 = vmatprep.subr.mxu0 0.0
    %1709 = vmatpush1.msra.mxu0 0.0
    %1710 = vmatprep.subr.mxu0 0.0
    %1711 = vmatpush1.msra.mxu0 0.0
    %1712 = vmatprep.subr.mxu0 0.0
    %1713 = vmatpush1.msra.mxu0 0.0
    %1714 = vmatprep.subr.mxu0 0.0
    %1715 = vmatpush1.msra.mxu0 0.0
    %1716 = vmatprep.subr.mxu0 0.0
    %1717 = vmatpush1.msra.mxu0 0.0
    %1718 = vmatprep.subr.mxu0 0.0
    %1719 = vmatpush1.msra.mxu0 0.0
    %1720 = vmatprep.subr.mxu0 0.0
    %1721 = vmatpush1.msra.mxu0 0.0
    %1722 = vmatprep.subr.mxu0 0.0
    %1723 = vmatpush1.msra.mxu0 0.0
    %1724 = vmatprep.subr.mxu0 0.0
    %1725 = vmatpush1.msra.mxu0 0.0
    %1726 = vmatprep.subr.mxu0 0.0
    %1727 = vmatpush1.msra.mxu0 0.0
    %1728 = vmatprep.mubr.f32.mxu0 0.0
    %1729 = vmatmul.mubr.f32.gmra.mrb[0].mxu0 %v1653
    %v1730 = vpop.f32.mrb[0].mxu0
    %v1731 = vadd.f32 %v1634, %v1730
    %v1732 = vpop.f32.mrb[0].mxu0
    %1733 = vmatprep.mubr.f32.mxu0 0.0
    %1734 = vmatmul.mubr.f32.gmra.mrb[0].mxu0 %v1656
    %v1735 = vpop.f32.mrb[0].mxu0
    %v1736 = vadd.f32 %v1639, %v1735
    %v1737 = vpop.f32.mrb[0].mxu0
    %1738 = vmatprep.mubr.f32.mxu0 0.0
    %1739 = vmatmul.mubr.f32.gmra.mrb[0].mxu0 %v1659
    %v1740 = vpop.f32.mrb[0].mxu0
    %v1741 = vadd.f32 %v1644, %v1740
    %v1742 = vpop.f32.mrb[0].mxu0
    %1743 = vmatprep.mubr.f32.mxu0 0.0
    %1744 = vmatmul.mubr.f32.gmra.mrb[0].mxu0 %v1662
    %v1745 = vpop.f32.mrb[0].mxu0
    %v1746 = vadd.f32 %v1649, %v1745
    %v1747 = vpop.f32.mrb[0].mxu0
    %1748 = vdwg.mxu0
    %v1749 = vld [vmem:[%s35] sm:$0xff]
    %v1750 = vld [vmem:[%s35 + $0x8] sm:$0xff]
    %v1751 = vld [vmem:[%s35 + $0x10] sm:$0xff]
    %v1752 = vld [vmem:[%s35 + $0x18] sm:$0xff]
    %v1754 = vsel %vm155, %v821, 0
    %v1757 = vsel %vm155, %v822, 0
    %v1760 = vsel %vm155, %v823, 0
    %v1763 = vsel %vm155, %v824, 0
    %1765 = vmatprep.subr.mxu0 0.0
    %1766 = vmatpush1.msra.mxu0 %v1749
    %1767 = vmatprep.subr.mxu0 0.0
    %1768 = vmatpush1.msra.mxu0 %v1750
    %1769 = vmatprep.subr.mxu0 0.0
    %1770 = vmatpush1.msra.mxu0 %v1751
    %1771 = vmatprep.subr.mxu0 0.0
    %1772 = vmatpush1.msra.mxu0 %v1752
    %1773 = vmatprep.subr.mxu0 0.0
    %1774 = vmatpush1.msra.mxu0 0.0
    %1775 = vmatprep.subr.mxu0 0.0
    %1776 = vmatpush1.msra.mxu0 0.0
    %1777 = vmatprep.subr.mxu0 0.0
    %1778 = vmatpush1.msra.mxu0 0.0
    %1779 = vmatprep.subr.mxu0 0.0
    %1780 = vmatpush1.msra.mxu0 0.0
    %1781 = vmatprep.subr.mxu0 0.0
    %1782 = vmatpush1.msra.mxu0 0.0
    %1783 = vmatprep.subr.mxu0 0.0
    %1784 = vmatpush1.msra.mxu0 0.0
    %1785 = vmatprep.subr.mxu0 0.0
    %1786 = vmatpush1.msra.mxu0 0.0
    %1787 = vmatprep.subr.mxu0 0.0
    %1788 = vmatpush1.msra.mxu0 0.0
    %1789 = vmatprep.subr.mxu0 0.0
    %1790 = vmatpush1.msra.mxu0 0.0
    %1791 = vmatprep.subr.mxu0 0.0
    %1792 = vmatpush1.msra.mxu0 0.0
    %1793 = vmatprep.subr.mxu0 0.0
    %1794 = vmatpush1.msra.mxu0 0.0
    %1795 = vmatprep.subr.mxu0 0.0
    %1796 = vmatpush1.msra.mxu0 0.0
    %1797 = vmatprep.subr.mxu0 0.0
    %1798 = vmatpush1.msra.mxu0 0.0
    %1799 = vmatprep.subr.mxu0 0.0
    %1800 = vmatpush1.msra.mxu0 0.0
    %1801 = vmatprep.subr.mxu0 0.0
    %1802 = vmatpush1.msra.mxu0 0.0
    %1803 = vmatprep.subr.mxu0 0.0
    %1804 = vmatpush1.msra.mxu0 0.0
    %1805 = vmatprep.subr.mxu0 0.0
    %1806 = vmatpush1.msra.mxu0 0.0
    %1807 = vmatprep.subr.mxu0 0.0
    %1808 = vmatpush1.msra.mxu0 0.0
    %1809 = vmatprep.subr.mxu0 0.0
    %1810 = vmatpush1.msra.mxu0 0.0
    %1811 = vmatprep.subr.mxu0 0.0
    %1812 = vmatpush1.msra.mxu0 0.0
    %1813 = vmatprep.subr.mxu0 0.0
    %1814 = vmatpush1.msra.mxu0 0.0
    %1815 = vmatprep.subr.mxu0 0.0
    %1816 = vmatpush1.msra.mxu0 0.0
    %1817 = vmatprep.subr.mxu0 0.0
    %1818 = vmatpush1.msra.mxu0 0.0
    %1819 = vmatprep.subr.mxu0 0.0
    %1820 = vmatpush1.msra.mxu0 0.0
    %1821 = vmatprep.subr.mxu0 0.0
    %1822 = vmatpush1.msra.mxu0 0.0
    %1823 = vmatprep.subr.mxu0 0.0
    %1824 = vmatpush1.msra.mxu0 0.0
    %1825 = vmatprep.subr.mxu0 0.0
    %1826 = vmatpush1.msra.mxu0 0.0
    %1827 = vmatprep.subr.mxu0 0.0
    %1828 = vmatpush1.msra.mxu0 0.0
    %1829 = vmatprep.mubr.f32.mxu0 0.0
    %1830 = vmatmul.mubr.f32.gmra.mrb[0].mxu0 %v1754
    %v1831 = vpop.f32.mrb[0].mxu0
    %v1832 = vadd.f32 0.0, %v1831
    %v1833 = vpop.f32.mrb[0].mxu0
    %1834 = vmatprep.mubr.f32.mxu0 0.0
    %1835 = vmatmul.mubr.f32.gmra.mrb[0].mxu0 %v1757
    %v1836 = vpop.f32.mrb[0].mxu0
    %v1837 = vadd.f32 0.0, %v1836
    %v1838 = vpop.f32.mrb[0].mxu0
    %1839 = vmatprep.mubr.f32.mxu0 0.0
    %1840 = vmatmul.mubr.f32.gmra.mrb[0].mxu0 %v1760
    %v1841 = vpop.f32.mrb[0].mxu0
    %v1842 = vadd.f32 0.0, %v1841
    %v1843 = vpop.f32.mrb[0].mxu0
    %1844 = vmatprep.mubr.f32.mxu0 0.0
    %1845 = vmatmul.mubr.f32.gmra.mrb[0].mxu0 %v1763
    %v1846 = vpop.f32.mrb[0].mxu0
    %v1847 = vadd.f32 0.0, %v1846
    %v1848 = vpop.f32.mrb[0].mxu0
    %1849 = vdwg.mxu0
    %v1850 = vadd.f32 %v1731, %v1832
    %v1851 = vadd.f32 %v1736, %v1837
    %v1852 = vadd.f32 %v1741, %v1842
    %v1853 = vadd.f32 %v1746, %v1847
    %v1854 = vld [vmem:[%s37] sm:$0x1]
    %v1856 = vlaneseq
    %v1857 = vshrl.u32 %v1856, 7
    %v1858 = vsub.s32 0, %v1857
    %v1859 = vrot.slane %v1854, %v1858
    %v1861 = vadd.f32 %v1850, %v1859
    %v1862 = vadd.f32 %v1851, %v1859
    %v1863 = vadd.f32 %v1852, %v1859
    %v1864 = vadd.f32 %v1853, %v1859
    %v1865 = vmul.f32 %v1861, %v1861
    %v1866 = vmul.f32 %v1862, %v1862
    %v1867 = vmul.f32 %v1863, %v1863
    %v1868 = vmul.f32 %v1864, %v1864
    %v1869 = vsel %vm257, %v1865, 0.0
    %1870 = vadd.xlane.f32.xlu0 %v1869
    %v1871 = vpop.xlane.xlu0 %1870
    %v1872 = vsel %vm257, %v1866, 0.0
    %1873 = vadd.xlane.f32.xlu0 %v1872
    %v1874 = vpop.xlane.xlu0 %1873
    %v1875 = vsel %vm257, %v1867, 0.0
    %1876 = vadd.xlane.f32.xlu0 %v1875
    %v1877 = vpop.xlane.xlu0 %1876
    %v1878 = vsel %vm257, %v1868, 0.0
    %1879 = vadd.xlane.f32.xlu0 %v1878
    %v1880 = vpop.xlane.xlu0 %1879
    %v1881 = vmax.f32 %v1871, 1e-24
    %v1882 = vmax.f32 %v1874, 1e-24
    %v1883 = vmax.f32 %v1877, 1e-24
    %v1884 = vmax.f32 %v1880, 1e-24
    %v1885 = vrsqrt.pop %v1881
    %v1886 = vrsqrt.pop %v1882
    %v1887 = vrsqrt.pop %v1883
    %v1888 = vrsqrt.pop %v1884
    %v1889 = vmul.f32 %v1861, %v1885
    %v1890 = vmul.f32 %v1862, %v1886
    %v1891 = vmul.f32 %v1863, %v1887
    %v1892 = vmul.f32 %v1864, %v1888
    %v1893 = vtanh.pop %v1889
    %v1894 = vtanh.pop %v1890
    %v1895 = vtanh.pop %v1891
    %v1896 = vtanh.pop %v1892
    %1901 = vrot.lane.b32.xlu0 %v1893, 16
    %v1902 = vpop.permute.xlu0 %1901
    %1903 = vrot.lane.b32.xlu0 %v1894, 16
    %v1904 = vpop.permute.xlu0 %1903
    %1905 = vrot.lane.b32.xlu0 %v1895, 16
    %v1906 = vpop.permute.xlu0 %1905
    %1907 = vrot.lane.b32.xlu0 %v1896, 16
    %v1908 = vpop.permute.xlu0 %1907
    %v1913 = vsel %vm257, %v1543, %v1902
    %v1914 = vsel %vm257, %v1544, %v1904
    %v1915 = vsel %vm257, %v1545, %v1906
    %v1916 = vsel %vm257, %v1546, %v1908
    %1917 = vst.msk [vmem:[#allocation4] sm:$0xff] %vm155, %v1913
    %1918 = vst.msk [vmem:[#allocation4 + $0x8] sm:$0xff] %vm155, %v1914
    %1919 = vst.msk [vmem:[#allocation4 + $0x10] sm:$0xff] %vm155, %v1915
    %1920 = vst.msk [vmem:[#allocation4 + $0x18] sm:$0xff] %vm155, %v1916
    %v1921 = vld [vmem:[%s45] sm:$0xff]
    %v1922 = vld [vmem:[%s45 + $0x8] sm:$0xff]
    %v1923 = vld [vmem:[%s45 + $0x10] sm:$0xf]
    %v1925 = vsel %vm155, %v1921, 0
    %v1928 = vsel %vm155, %v1922, 0
    %v1931 = vsel %vm155, %v1923, 0
    %1933 = vmatprep.subr.mxu0 0.0
    %1934 = vmatpush1.msra.mxu0 %v1913
    %1935 = vmatprep.subr.mxu0 0.0
    %1936 = vmatpush1.msra.mxu0 %v1914
    %1937 = vmatprep.subr.mxu0 0.0
    %1938 = vmatpush1.msra.mxu0 %v1915
    %1939 = vmatprep.subr.mxu0 0.0
    %1940 = vmatpush1.msra.mxu0 %v1916
    %1941 = vmatprep.subr.mxu0 0.0
    %1942 = vmatpush1.msra.mxu0 0.0
    %1943 = vmatprep.subr.mxu0 0.0
    %1944 = vmatpush1.msra.mxu0 0.0
    %1945 = vmatprep.subr.mxu0 0.0
    %1946 = vmatpush1.msra.mxu0 0.0
    %1947 = vmatprep.subr.mxu0 0.0
    %1948 = vmatpush1.msra.mxu0 0.0
    %1949 = vmatprep.subr.mxu0 0.0
    %1950 = vmatpush1.msra.mxu0 0.0
    %1951 = vmatprep.subr.mxu0 0.0
    %1952 = vmatpush1.msra.mxu0 0.0
    %1953 = vmatprep.subr.mxu0 0.0
    %1954 = vmatpush1.msra.mxu0 0.0
    %1955 = vmatprep.subr.mxu0 0.0
    %1956 = vmatpush1.msra.mxu0 0.0
    %1957 = vmatprep.subr.mxu0 0.0
    %1958 = vmatpush1.msra.mxu0 0.0
    %1959 = vmatprep.subr.mxu0 0.0
    %1960 = vmatpush1.msra.mxu0 0.0
    %1961 = vmatprep.subr.mxu0 0.0
    %1962 = vmatpush1.msra.mxu0 0.0
    %1963 = vmatprep.subr.mxu0 0.0
    %1964 = vmatpush1.msra.mxu0 0.0
    %1965 = vmatprep.subr.mxu0 0.0
    %1966 = vmatpush1.msra.mxu0 0.0
    %1967 = vmatprep.subr.mxu0 0.0
    %1968 = vmatpush1.msra.mxu0 0.0
    %1969 = vmatprep.subr.mxu0 0.0
    %1970 = vmatpush1.msra.mxu0 0.0
    %1971 = vmatprep.subr.mxu0 0.0
    %1972 = vmatpush1.msra.mxu0 0.0
    %1973 = vmatprep.subr.mxu0 0.0
    %1974 = vmatpush1.msra.mxu0 0.0
    %1975 = vmatprep.subr.mxu0 0.0
    %1976 = vmatpush1.msra.mxu0 0.0
    %1977 = vmatprep.subr.mxu0 0.0
    %1978 = vmatpush1.msra.mxu0 0.0
    %1979 = vmatprep.subr.mxu0 0.0
    %1980 = vmatpush1.msra.mxu0 0.0
    %1981 = vmatprep.subr.mxu0 0.0
    %1982 = vmatpush1.msra.mxu0 0.0
    %1983 = vmatprep.subr.mxu0 0.0
    %1984 = vmatpush1.msra.mxu0 0.0
    %1985 = vmatprep.subr.mxu0 0.0
    %1986 = vmatpush1.msra.mxu0 0.0
    %1987 = vmatprep.subr.mxu0 0.0
    %1988 = vmatpush1.msra.mxu0 0.0
    %1989 = vmatprep.subr.mxu0 0.0
    %1990 = vmatpush1.msra.mxu0 0.0
    %1991 = vmatprep.subr.mxu0 0.0
    %1992 = vmatpush1.msra.mxu0 0.0
    %1993 = vmatprep.subr.mxu0 0.0
    %1994 = vmatpush1.msra.mxu0 0.0
    %1995 = vmatprep.subr.mxu0 0.0
    %1996 = vmatpush1.msra.mxu0 0.0
    %1997 = vmatprep.mubr.f32.mxu0 0.0
    %1998 = vmatmul.mubr.f32.gmra.mrb[0].mxu0 %v1925
    %v1999 = vpop.f32.mrb[0].mxu0
    %v2000 = vadd.f32 0.0, %v1999
    %v2001 = vpop.f32.mrb[0].mxu0
    %2002 = vmatprep.mubr.f32.mxu0 0.0
    %2003 = vmatmul.mubr.f32.gmra.mrb[0].mxu0 %v1928
    %v2004 = vpop.f32.mrb[0].mxu0
    %v2005 = vadd.f32 0.0, %v2004
    %v2006 = vpop.f32.mrb[0].mxu0
    %2007 = vmatprep.mubr.f32.mxu0 0.0
    %2008 = vmatmul.mubr.f32.gmra.mrb[0].mxu0 %v1931
    %v2009 = vpop.f32.mrb[0].mxu0
    %v2010 = vadd.f32 0.0, %v2009
    %v2011 = vpop.f32.mrb[0].mxu0
    %2012 = vdwg.mxu0
    %v2013 = vld [vmem:[%s47] sm:$0xff]
    %v2014 = vld [vmem:[%s47 + $0x8] sm:$0xff]
    %v2015 = vld [vmem:[%s47 + $0x10] sm:$0xf]
    %v2017 = vsel %vm155, %v2013, 0
    %v2020 = vsel %vm155, %v2014, 0
    %v2023 = vsel %vm155, %v2015, 0
    %2025 = vmatprep.subr.mxu0 0.0
    %2026 = vmatpush1.msra.mxu0 %v1913
    %2027 = vmatprep.subr.mxu0 0.0
    %2028 = vmatpush1.msra.mxu0 %v1914
    %2029 = vmatprep.subr.mxu0 0.0
    %2030 = vmatpush1.msra.mxu0 %v1915
    %2031 = vmatprep.subr.mxu0 0.0
    %2032 = vmatpush1.msra.mxu0 %v1916
    %2033 = vmatprep.subr.mxu0 0.0
    %2034 = vmatpush1.msra.mxu0 0.0
    %2035 = vmatprep.subr.mxu0 0.0
    %2036 = vmatpush1.msra.mxu0 0.0
    %2037 = vmatprep.subr.mxu0 0.0
    %2038 = vmatpush1.msra.mxu0 0.0
    %2039 = vmatprep.subr.mxu0 0.0
    %2040 = vmatpush1.msra.mxu0 0.0
    %2041 = vmatprep.subr.mxu0 0.0
    %2042 = vmatpush1.msra.mxu0 0.0
    %2043 = vmatprep.subr.mxu0 0.0
    %2044 = vmatpush1.msra.mxu0 0.0
    %2045 = vmatprep.subr.mxu0 0.0
    %2046 = vmatpush1.msra.mxu0 0.0
    %2047 = vmatprep.subr.mxu0 0.0
    %2048 = vmatpush1.msra.mxu0 0.0
    %2049 = vmatprep.subr.mxu0 0.0
    %2050 = vmatpush1.msra.mxu0 0.0
    %2051 = vmatprep.subr.mxu0 0.0
    %2052 = vmatpush1.msra.mxu0 0.0
    %2053 = vmatprep.subr.mxu0 0.0
    %2054 = vmatpush1.msra.mxu0 0.0
    %2055 = vmatprep.subr.mxu0 0.0
    %2056 = vmatpush1.msra.mxu0 0.0
    %2057 = vmatprep.subr.mxu0 0.0
    %2058 = vmatpush1.msra.mxu0 0.0
    %2059 = vmatprep.subr.mxu0 0.0
    %2060 = vmatpush1.msra.mxu0 0.0
    %2061 = vmatprep.subr.mxu0 0.0
    %2062 = vmatpush1.msra.mxu0 0.0
    %2063 = vmatprep.subr.mxu0 0.0
    %2064 = vmatpush1.msra.mxu0 0.0
    %2065 = vmatprep.subr.mxu0 0.0
    %2066 = vmatpush1.msra.mxu0 0.0
    %2067 = vmatprep.subr.mxu0 0.0
    %2068 = vmatpush1.msra.mxu0 0.0
    %2069 = vmatprep.subr.mxu0 0.0
    %2070 = vmatpush1.msra.mxu0 0.0
    %2071 = vmatprep.subr.mxu0 0.0
    %2072 = vmatpush1.msra.mxu0 0.0
    %2073 = vmatprep.subr.mxu0 0.0
    %2074 = vmatpush1.msra.mxu0 0.0
    %2075 = vmatprep.subr.mxu0 0.0
    %2076 = vmatpush1.msra.mxu0 0.0
    %2077 = vmatprep.subr.mxu0 0.0
    %2078 = vmatpush1.msra.mxu0 0.0
    %2079 = vmatprep.subr.mxu0 0.0
    %2080 = vmatpush1.msra.mxu0 0.0
    %2081 = vmatprep.subr.mxu0 0.0
    %2082 = vmatpush1.msra.mxu0 0.0
    %2083 = vmatprep.subr.mxu0 0.0
    %2084 = vmatpush1.msra.mxu0 0.0
    %2085 = vmatprep.subr.mxu0 0.0
    %2086 = vmatpush1.msra.mxu0 0.0
    %2087 = vmatprep.subr.mxu0 0.0
    %2088 = vmatpush1.msra.mxu0 0.0
    %2089 = vmatprep.mubr.f32.mxu0 0.0
    %2090 = vmatmul.mubr.f32.gmra.mrb[0].mxu0 %v2017
    %v2091 = vpop.f32.mrb[0].mxu0
    %v2092 = vadd.f32 0.0, %v2091
    %v2093 = vpop.f32.mrb[0].mxu0
    %2094 = vmatprep.mubr.f32.mxu0 0.0
    %2095 = vmatmul.mubr.f32.gmra.mrb[0].mxu0 %v2020
    %v2096 = vpop.f32.mrb[0].mxu0
    %v2097 = vadd.f32 0.0, %v2096
    %v2098 = vpop.f32.mrb[0].mxu0
    %2099 = vmatprep.mubr.f32.mxu0 0.0
    %2100 = vmatmul.mubr.f32.gmra.mrb[0].mxu0 %v2023
    %v2101 = vpop.f32.mrb[0].mxu0
    %v2102 = vadd.f32 0.0, %v2101
    %v2103 = vpop.f32.mrb[0].mxu0
    %2104 = vdwg.mxu0
    %v2105 = vld [vmem:[%s49] sm:$0xff]
    %v2106 = vld [vmem:[%s49 + $0x8] sm:$0xff]
    %v2107 = vld [vmem:[%s49 + $0x10] sm:$0xf]
    %v2109 = vsel %vm155, %v2105, 0
    %v2112 = vsel %vm155, %v2106, 0
    %v2115 = vsel %vm155, %v2107, 0
    %2117 = vmatprep.subr.mxu0 0.0
    %2118 = vmatpush1.msra.mxu0 %v1913
    %2119 = vmatprep.subr.mxu0 0.0
    %2120 = vmatpush1.msra.mxu0 %v1914
    %2121 = vmatprep.subr.mxu0 0.0
    %2122 = vmatpush1.msra.mxu0 %v1915
    %2123 = vmatprep.subr.mxu0 0.0
    %2124 = vmatpush1.msra.mxu0 %v1916
    %2125 = vmatprep.subr.mxu0 0.0
    %2126 = vmatpush1.msra.mxu0 0.0
    %2127 = vmatprep.subr.mxu0 0.0
    %2128 = vmatpush1.msra.mxu0 0.0
    %2129 = vmatprep.subr.mxu0 0.0
    %2130 = vmatpush1.msra.mxu0 0.0
    %2131 = vmatprep.subr.mxu0 0.0
    %2132 = vmatpush1.msra.mxu0 0.0
    %2133 = vmatprep.subr.mxu0 0.0
    %2134 = vmatpush1.msra.mxu0 0.0
    %2135 = vmatprep.subr.mxu0 0.0
    %2136 = vmatpush1.msra.mxu0 0.0
    %2137 = vmatprep.subr.mxu0 0.0
    %2138 = vmatpush1.msra.mxu0 0.0
    %2139 = vmatprep.subr.mxu0 0.0
    %2140 = vmatpush1.msra.mxu0 0.0
    %2141 = vmatprep.subr.mxu0 0.0
    %2142 = vmatpush1.msra.mxu0 0.0
    %2143 = vmatprep.subr.mxu0 0.0
    %2144 = vmatpush1.msra.mxu0 0.0
    %2145 = vmatprep.subr.mxu0 0.0
    %2146 = vmatpush1.msra.mxu0 0.0
    %2147 = vmatprep.subr.mxu0 0.0
    %2148 = vmatpush1.msra.mxu0 0.0
    %2149 = vmatprep.subr.mxu0 0.0
    %2150 = vmatpush1.msra.mxu0 0.0
    %2151 = vmatprep.subr.mxu0 0.0
    %2152 = vmatpush1.msra.mxu0 0.0
    %2153 = vmatprep.subr.mxu0 0.0
    %2154 = vmatpush1.msra.mxu0 0.0
    %2155 = vmatprep.subr.mxu0 0.0
    %2156 = vmatpush1.msra.mxu0 0.0
    %2157 = vmatprep.subr.mxu0 0.0
    %2158 = vmatpush1.msra.mxu0 0.0
    %2159 = vmatprep.subr.mxu0 0.0
    %2160 = vmatpush1.msra.mxu0 0.0
    %2161 = vmatprep.subr.mxu0 0.0
    %2162 = vmatpush1.msra.mxu0 0.0
    %2163 = vmatprep.subr.mxu0 0.0
    %2164 = vmatpush1.msra.mxu0 0.0
    %2165 = vmatprep.subr.mxu0 0.0
    %2166 = vmatpush1.msra.mxu0 0.0
    %2167 = vmatprep.subr.mxu0 0.0
    %2168 = vmatpush1.msra.mxu0 0.0
    %2169 = vmatprep.subr.mxu0 0.0
    %2170 = vmatpush1.msra.mxu0 0.0
    %2171 = vmatprep.subr.mxu0 0.0
    %2172 = vmatpush1.msra.mxu0 0.0
    %2173 = vmatprep.subr.mxu0 0.0
    %2174 = vmatpush1.msra.mxu0 0.0
    %2175 = vmatprep.subr.mxu0 0.0
    %2176 = vmatpush1.msra.mxu0 0.0
    %2177 = vmatprep.subr.mxu0 0.0
    %2178 = vmatpush1.msra.mxu0 0.0
    %2179 = vmatprep.subr.mxu0 0.0
    %2180 = vmatpush1.msra.mxu0 0.0
    %2181 = vmatprep.mubr.f32.mxu0 0.0
    %2182 = vmatmul.mubr.f32.gmra.mrb[0].mxu0 %v2109
    %v2183 = vpop.f32.mrb[0].mxu0
    %v2184 = vadd.f32 0.0, %v2183
    %v2185 = vpop.f32.mrb[0].mxu0
    %2186 = vmatprep.mubr.f32.mxu0 0.0
    %2187 = vmatmul.mubr.f32.gmra.mrb[0].mxu0 %v2112
    %v2188 = vpop.f32.mrb[0].mxu0
    %v2189 = vadd.f32 0.0, %v2188
    %v2190 = vpop.f32.mrb[0].mxu0
    %2191 = vmatprep.mubr.f32.mxu0 0.0
    %2192 = vmatmul.mubr.f32.gmra.mrb[0].mxu0 %v2115
    %v2193 = vpop.f32.mrb[0].mxu0
    %v2194 = vadd.f32 0.0, %v2193
    %v2195 = vpop.f32.mrb[0].mxu0
    %2196 = vdwg.mxu0
    %v2197 = vld [vmem:[%s51] sm:$0xff]
    %v2198 = vld [vmem:[%s51 + $0x8] sm:$0xff]
    %v2200 = vsel %vm155, %v2197, 0
    %v2203 = vsel %vm155, %v2198, 0
    %2205 = vmatprep.subr.mxu0 0.0
    %2206 = vmatpush1.msra.mxu0 %v1913
    %2207 = vmatprep.subr.mxu0 0.0
    %2208 = vmatpush1.msra.mxu0 %v1914
    %2209 = vmatprep.subr.mxu0 0.0
    %2210 = vmatpush1.msra.mxu0 %v1915
    %2211 = vmatprep.subr.mxu0 0.0
    %2212 = vmatpush1.msra.mxu0 %v1916
    %2213 = vmatprep.subr.mxu0 0.0
    %2214 = vmatpush1.msra.mxu0 0.0
    %2215 = vmatprep.subr.mxu0 0.0
    %2216 = vmatpush1.msra.mxu0 0.0
    %2217 = vmatprep.subr.mxu0 0.0
    %2218 = vmatpush1.msra.mxu0 0.0
    %2219 = vmatprep.subr.mxu0 0.0
    %2220 = vmatpush1.msra.mxu0 0.0
    %2221 = vmatprep.subr.mxu0 0.0
    %2222 = vmatpush1.msra.mxu0 0.0
    %2223 = vmatprep.subr.mxu0 0.0
    %2224 = vmatpush1.msra.mxu0 0.0
    %2225 = vmatprep.subr.mxu0 0.0
    %2226 = vmatpush1.msra.mxu0 0.0
    %2227 = vmatprep.subr.mxu0 0.0
    %2228 = vmatpush1.msra.mxu0 0.0
    %2229 = vmatprep.subr.mxu0 0.0
    %2230 = vmatpush1.msra.mxu0 0.0
    %2231 = vmatprep.subr.mxu0 0.0
    %2232 = vmatpush1.msra.mxu0 0.0
    %2233 = vmatprep.subr.mxu0 0.0
    %2234 = vmatpush1.msra.mxu0 0.0
    %2235 = vmatprep.subr.mxu0 0.0
    %2236 = vmatpush1.msra.mxu0 0.0
    %2237 = vmatprep.subr.mxu0 0.0
    %2238 = vmatpush1.msra.mxu0 0.0
    %2239 = vmatprep.subr.mxu0 0.0
    %2240 = vmatpush1.msra.mxu0 0.0
    %2241 = vmatprep.subr.mxu0 0.0
    %2242 = vmatpush1.msra.mxu0 0.0
    %2243 = vmatprep.subr.mxu0 0.0
    %2244 = vmatpush1.msra.mxu0 0.0
    %2245 = vmatprep.subr.mxu0 0.0
    %2246 = vmatpush1.msra.mxu0 0.0
    %2247 = vmatprep.subr.mxu0 0.0
    %2248 = vmatpush1.msra.mxu0 0.0
    %2249 = vmatprep.subr.mxu0 0.0
    %2250 = vmatpush1.msra.mxu0 0.0
    %2251 = vmatprep.subr.mxu0 0.0
    %2252 = vmatpush1.msra.mxu0 0.0
    %2253 = vmatprep.subr.mxu0 0.0
    %2254 = vmatpush1.msra.mxu0 0.0
    %2255 = vmatprep.subr.mxu0 0.0
    %2256 = vmatpush1.msra.mxu0 0.0
    %2257 = vmatprep.subr.mxu0 0.0
    %2258 = vmatpush1.msra.mxu0 0.0
    %2259 = vmatprep.subr.mxu0 0.0
    %2260 = vmatpush1.msra.mxu0 0.0
    %2261 = vmatprep.subr.mxu0 0.0
    %2262 = vmatpush1.msra.mxu0 0.0
    %2263 = vmatprep.subr.mxu0 0.0
    %2264 = vmatpush1.msra.mxu0 0.0
    %2265 = vmatprep.subr.mxu0 0.0
    %2266 = vmatpush1.msra.mxu0 0.0
    %2267 = vmatprep.subr.mxu0 0.0
    %2268 = vmatpush1.msra.mxu0 0.0
    %2269 = vmatprep.mubr.f32.mxu0 0.0
    %2270 = vmatmul.mubr.f32.gmra.mrb[0].mxu0 %v2200
    %v2271 = vpop.f32.mrb[0].mxu0
    %v2272 = vadd.f32 0.0, %v2271
    %v2273 = vpop.f32.mrb[0].mxu0
    %2274 = vmatprep.mubr.f32.mxu0 0.0
    %2275 = vmatmul.mubr.f32.gmra.mrb[0].mxu0 %v2203
    %v2276 = vpop.f32.mrb[0].mxu0
    %v2277 = vadd.f32 0.0, %v2276
    %v2278 = vpop.f32.mrb[0].mxu0
    %2279 = vdwg.mxu0
    %v2280 = vld [vmem:[%s53] sm:$0xff]
    %v2281 = vld [vmem:[%s53 + $0x8] sm:$0xff]
    %v2283 = vsel %vm155, %v2280, 0
    %v2286 = vsel %vm155, %v2281, 0
    %2288 = vmatprep.subr.mxu0 0.0
    %2289 = vmatpush1.msra.mxu0 %v1913
    %2290 = vmatprep.subr.mxu0 0.0
    %2291 = vmatpush1.msra.mxu0 %v1914
    %2292 = vmatprep.subr.mxu0 0.0
    %2293 = vmatpush1.msra.mxu0 %v1915
    %2294 = vmatprep.subr.mxu0 0.0
    %2295 = vmatpush1.msra.mxu0 %v1916
    %2296 = vmatprep.subr.mxu0 0.0
    %2297 = vmatpush1.msra.mxu0 0.0
    %2298 = vmatprep.subr.mxu0 0.0
    %2299 = vmatpush1.msra.mxu0 0.0
    %2300 = vmatprep.subr.mxu0 0.0
    %2301 = vmatpush1.msra.mxu0 0.0
    %2302 = vmatprep.subr.mxu0 0.0
    %2303 = vmatpush1.msra.mxu0 0.0
    %2304 = vmatprep.subr.mxu0 0.0
    %2305 = vmatpush1.msra.mxu0 0.0
    %2306 = vmatprep.subr.mxu0 0.0
    %2307 = vmatpush1.msra.mxu0 0.0
    %2308 = vmatprep.subr.mxu0 0.0
    %2309 = vmatpush1.msra.mxu0 0.0
    %2310 = vmatprep.subr.mxu0 0.0
    %2311 = vmatpush1.msra.mxu0 0.0
    %2312 = vmatprep.subr.mxu0 0.0
    %2313 = vmatpush1.msra.mxu0 0.0
    %2314 = vmatprep.subr.mxu0 0.0
    %2315 = vmatpush1.msra.mxu0 0.0
    %2316 = vmatprep.subr.mxu0 0.0
    %2317 = vmatpush1.msra.mxu0 0.0
    %2318 = vmatprep.subr.mxu0 0.0
    %2319 = vmatpush1.msra.mxu0 0.0
    %2320 = vmatprep.subr.mxu0 0.0
    %2321 = vmatpush1.msra.mxu0 0.0
    %2322 = vmatprep.subr.mxu0 0.0
    %2323 = vmatpush1.msra.mxu0 0.0
    %2324 = vmatprep.subr.mxu0 0.0
    %2325 = vmatpush1.msra.mxu0 0.0
    %2326 = vmatprep.subr.mxu0 0.0
    %2327 = vmatpush1.msra.mxu0 0.0
    %2328 = vmatprep.subr.mxu0 0.0
    %2329 = vmatpush1.msra.mxu0 0.0
    %2330 = vmatprep.subr.mxu0 0.0
    %2331 = vmatpush1.msra.mxu0 0.0
    %2332 = vmatprep.subr.mxu0 0.0
    %2333 = vmatpush1.msra.mxu0 0.0
    %2334 = vmatprep.subr.mxu0 0.0
    %2335 = vmatpush1.msra.mxu0 0.0
    %2336 = vmatprep.subr.mxu0 0.0
    %2337 = vmatpush1.msra.mxu0 0.0
    %2338 = vmatprep.subr.mxu0 0.0
    %2339 = vmatpush1.msra.mxu0 0.0
    %2340 = vmatprep.subr.mxu0 0.0
    %2341 = vmatpush1.msra.mxu0 0.0
    %2342 = vmatprep.subr.mxu0 0.0
    %2343 = vmatpush1.msra.mxu0 0.0
    %2344 = vmatprep.subr.mxu0 0.0
    %2345 = vmatpush1.msra.mxu0 0.0
    %2346 = vmatprep.subr.mxu0 0.0
    %2347 = vmatpush1.msra.mxu0 0.0
    %2348 = vmatprep.subr.mxu0 0.0
    %2349 = vmatpush1.msra.mxu0 0.0
    %2350 = vmatprep.subr.mxu0 0.0
    %2351 = vmatpush1.msra.mxu0 0.0
    %2352 = vmatprep.mubr.f32.mxu0 0.0
    %2353 = vmatmul.mubr.f32.gmra.mrb[0].mxu0 %v2283
    %v2354 = vpop.f32.mrb[0].mxu0
    %v2355 = vadd.f32 0.0, %v2354
    %v2356 = vpop.f32.mrb[0].mxu0
    %2357 = vmatprep.mubr.f32.mxu0 0.0
    %2358 = vmatmul.mubr.f32.gmra.mrb[0].mxu0 %v2286
    %v2359 = vpop.f32.mrb[0].mxu0
    %v2360 = vadd.f32 0.0, %v2359
    %v2361 = vpop.f32.mrb[0].mxu0
    %2362 = vdwg.mxu0
    %v2363 = vld [vmem:[%s55] sm:$0xff]
    %v2364 = vld [vmem:[%s55 + $0x8] sm:$0xff]
    %v2366 = vsel %vm155, %v2363, 0
    %v2369 = vsel %vm155, %v2364, 0
    %2371 = vmatprep.subr.mxu0 0.0
    %2372 = vmatpush1.msra.mxu0 %v1913
    %2373 = vmatprep.subr.mxu0 0.0
    %2374 = vmatpush1.msra.mxu0 %v1914
    %2375 = vmatprep.subr.mxu0 0.0
    %2376 = vmatpush1.msra.mxu0 %v1915
    %2377 = vmatprep.subr.mxu0 0.0
    %2378 = vmatpush1.msra.mxu0 %v1916
    %2379 = vmatprep.subr.mxu0 0.0
    %2380 = vmatpush1.msra.mxu0 0.0
    %2381 = vmatprep.subr.mxu0 0.0
    %2382 = vmatpush1.msra.mxu0 0.0
    %2383 = vmatprep.subr.mxu0 0.0
    %2384 = vmatpush1.msra.mxu0 0.0
    %2385 = vmatprep.subr.mxu0 0.0
    %2386 = vmatpush1.msra.mxu0 0.0
    %2387 = vmatprep.subr.mxu0 0.0
    %2388 = vmatpush1.msra.mxu0 0.0
    %2389 = vmatprep.subr.mxu0 0.0
    %2390 = vmatpush1.msra.mxu0 0.0
    %2391 = vmatprep.subr.mxu0 0.0
    %2392 = vmatpush1.msra.mxu0 0.0
    %2393 = vmatprep.subr.mxu0 0.0
    %2394 = vmatpush1.msra.mxu0 0.0
    %2395 = vmatprep.subr.mxu0 0.0
    %2396 = vmatpush1.msra.mxu0 0.0
    %2397 = vmatprep.subr.mxu0 0.0
    %2398 = vmatpush1.msra.mxu0 0.0
    %2399 = vmatprep.subr.mxu0 0.0
    %2400 = vmatpush1.msra.mxu0 0.0
    %2401 = vmatprep.subr.mxu0 0.0
    %2402 = vmatpush1.msra.mxu0 0.0
    %2403 = vmatprep.subr.mxu0 0.0
    %2404 = vmatpush1.msra.mxu0 0.0
    %2405 = vmatprep.subr.mxu0 0.0
    %2406 = vmatpush1.msra.mxu0 0.0
    %2407 = vmatprep.subr.mxu0 0.0
    %2408 = vmatpush1.msra.mxu0 0.0
    %2409 = vmatprep.subr.mxu0 0.0
    %2410 = vmatpush1.msra.mxu0 0.0
    %2411 = vmatprep.subr.mxu0 0.0
    %2412 = vmatpush1.msra.mxu0 0.0
    %2413 = vmatprep.subr.mxu0 0.0
    %2414 = vmatpush1.msra.mxu0 0.0
    %2415 = vmatprep.subr.mxu0 0.0
    %2416 = vmatpush1.msra.mxu0 0.0
    %2417 = vmatprep.subr.mxu0 0.0
    %2418 = vmatpush1.msra.mxu0 0.0
    %2419 = vmatprep.subr.mxu0 0.0
    %2420 = vmatpush1.msra.mxu0 0.0
    %2421 = vmatprep.subr.mxu0 0.0
    %2422 = vmatpush1.msra.mxu0 0.0
    %2423 = vmatprep.subr.mxu0 0.0
    %2424 = vmatpush1.msra.mxu0 0.0
    %2425 = vmatprep.subr.mxu0 0.0
    %2426 = vmatpush1.msra.mxu0 0.0
    %2427 = vmatprep.subr.mxu0 0.0
    %2428 = vmatpush1.msra.mxu0 0.0
    %2429 = vmatprep.subr.mxu0 0.0
    %2430 = vmatpush1.msra.mxu0 0.0
    %2431 = vmatprep.subr.mxu0 0.0
    %2432 = vmatpush1.msra.mxu0 0.0
    %2433 = vmatprep.subr.mxu0 0.0
    %2434 = vmatpush1.msra.mxu0 0.0
    %2435 = vmatprep.mubr.f32.mxu0 0.0
    %2436 = vmatmul.mubr.f32.gmra.mrb[0].mxu0 %v2366
    %v2437 = vpop.f32.mrb[0].mxu0
    %v2438 = vadd.f32 0.0, %v2437
    %v2439 = vpop.f32.mrb[0].mxu0
    %2440 = vmatprep.mubr.f32.mxu0 0.0
    %2441 = vmatmul.mubr.f32.gmra.mrb[0].mxu0 %v2369
    %v2442 = vpop.f32.mrb[0].mxu0
    %v2443 = vadd.f32 0.0, %v2442
    %v2444 = vpop.f32.mrb[0].mxu0
    %2445 = vdwg.mxu0
    %v2446 = vsub.f32 %v2000, %v2092
    %v2447 = vsub.f32 %v2005, %v2097
    %v2448 = vsub.f32 %v2010, %v2102
    %v2449 = vmul.f32 %v2446, %v2446
    %v2450 = vmul.f32 %v2447, %v2447
    %v2451 = vmul.f32 %v2448, %v2448
    %v2452 = vsel %vm155, %v2449, 0.0
    %2453 = vadd.xlane.f32.xlu0 %v2452
    %v2454 = vpop.xlane.xlu0 %2453
    %v2455 = vsel %vm155, %v2450, 0.0
    %2456 = vadd.xlane.f32.xlu0 %v2455
    %v2457 = vpop.xlane.xlu0 %2456
    %vm2458 = vcmask 257024
    %v2459 = vsel %vm2458, %v2451, 0.0
    %2460 = vadd.xlane.f32.xlu0 %v2459
    %v2461 = vpop.xlane.xlu0 %2460
    %v2462 = vsub.f32 %v2000, %v2184
    %v2463 = vsub.f32 %v2005, %v2189
    %v2464 = vsub.f32 %v2010, %v2194
    %v2465 = vmul.f32 %v2462, %v2462
    %v2466 = vmul.f32 %v2463, %v2463
    %v2467 = vmul.f32 %v2464, %v2464
    %v2468 = vsel %vm155, %v2465, 0.0
    %2469 = vadd.xlane.f32.xlu0 %v2468
    %v2470 = vpop.xlane.xlu0 %2469
    %v2471 = vsel %vm155, %v2466, 0.0
    %2472 = vadd.xlane.f32.xlu0 %v2471
    %v2473 = vpop.xlane.xlu0 %2472
    %v2474 = vsel %vm2458, %v2467, 0.0
    %2475 = vadd.xlane.f32.xlu0 %v2474
    %v2476 = vpop.xlane.xlu0 %2475
    %v2477 = vsub.f32 %v2454, %v2470
    %v2478 = vsub.f32 %v2457, %v2473
    %v2479 = vsub.f32 %v2461, %v2476
    %v2480 = vmax.f32 %v2477, 0.0
    %v2481 = vmax.f32 %v2478, 0.0
    %v2482 = vmax.f32 %v2479, 0.0
    %v2483 = vsub.f32 %v2272, %v2438
    %v2484 = vsub.f32 %v2277, %v2443
    %v2485 = vmul.f32 %v2483, %v2483
    %v2486 = vmul.f32 %v2484, %v2484
    %v2487 = vsel %vm155, %v2485, 0.0
    %2488 = vadd.xlane.f32.xlu0 %v2487
    %v2489 = vpop.xlane.xlu0 %2488
    %v2490 = vsel %vm155, %v2486, 0.0
    %2491 = vadd.xlane.f32.xlu0 %v2490
    %v2492 = vpop.xlane.xlu0 %2491
    %v2493 = vsub.f32 %v2272, %v2355
    %v2494 = vsub.f32 %v2277, %v2360
    %v2495 = vmul.f32 %v2493, %v2493
    %v2496 = vmul.f32 %v2494, %v2494
    %v2497 = vsel %vm155, %v2495, 0.0
    %2498 = vadd.xlane.f32.xlu0 %v2497
    %v2499 = vpop.xlane.xlu0 %2498
    %v2500 = vsel %vm155, %v2496, 0.0
    %2501 = vadd.xlane.f32.xlu0 %v2500
    %v2502 = vpop.xlane.xlu0 %2501
    %v2503 = vsub.f32 %v2489, %v2499
    %v2504 = vsub.f32 %v2492, %v2502
    %v2505 = vmax.f32 %v2503, 0.0
    %v2506 = vmax.f32 %v2504, 0.0
    %v2507 = vadd.f32 %v2480, %v2481
    %vm2508 = vcmask 1043456
    %v2509 = vsel %vm2508, %v2482, 0.0
    %v2510 = vadd.f32 %v2507, %v2509
    %v2511 = vrot.slane %v2510, 4
    %v2512 = vadd.f32 %v2510, %v2511
    %v2513 = vrot.slane %v2512, 2
    %v2514 = vadd.f32 %v2512, %v2513
    %v2515 = vrot.slane %v2514, 1
    %v2516 = vadd.f32 %v2514, %v2515
    %v2517 = vrcp.pop 20.0
    %v2518 = vmul.f32 %v2516, %v2517
    %v2519 = vadd.f32 %v2505, %v2506
    %v2520 = vrot.slane %v2519, 4
    %v2521 = vadd.f32 %v2519, %v2520
    %v2522 = vrot.slane %v2521, 2
    %v2523 = vadd.f32 %v2521, %v2522
    %v2524 = vrot.slane %v2523, 1
    %v2525 = vadd.f32 %v2523, %v2524
    %v2526 = vrcp.pop 16.0
    %v2527 = vmul.f32 %v2525, %v2526
    %v2528 = vld [vmem:[%s39] sm:$0xff]
    %v2529 = vld [vmem:[%s39 + $0x8] sm:$0xff]
    %v2530 = vld [vmem:[%s39 + $0x10] sm:$0xff]
    %v2531 = vld [vmem:[%s39 + $0x18] sm:$0xff]
    %v2532 = vld [vmem:[%s41] sm:$0xff]
    %v2533 = vld [vmem:[%s41 + $0x8] sm:$0xff]
    %v2534 = vld [vmem:[%s41 + $0x10] sm:$0xff]
    %v2535 = vld [vmem:[%s41 + $0x18] sm:$0xff]
    %v2536 = vld [vmem:[%s43] sm:$0x1]
    %v2538 = vsel %vm155, %v2092, 0
    %v2541 = vsel %vm155, %v2097, 0
    %v2544 = vsel %vm155, %v2102, 0
    %2546 = vmatprep.subr.mxu0 0.0
    %2547 = vmatpush1.msra.mxu0 %v2532
    %2548 = vmatprep.subr.mxu0 0.0
    %2549 = vmatpush1.msra.mxu0 %v2533
    %2550 = vmatprep.subr.mxu0 0.0
    %2551 = vmatpush1.msra.mxu0 %v2534
    %2552 = vmatprep.subr.mxu0 0.0
    %2553 = vmatpush1.msra.mxu0 %v2535
    %2554 = vmatprep.subr.mxu0 0.0
    %2555 = vmatpush1.msra.mxu0 0.0
    %2556 = vmatprep.subr.mxu0 0.0
    %2557 = vmatpush1.msra.mxu0 0.0
    %2558 = vmatprep.subr.mxu0 0.0
    %2559 = vmatpush1.msra.mxu0 0.0
    %2560 = vmatprep.subr.mxu0 0.0
    %2561 = vmatpush1.msra.mxu0 0.0
    %2562 = vmatprep.subr.mxu0 0.0
    %2563 = vmatpush1.msra.mxu0 0.0
    %2564 = vmatprep.subr.mxu0 0.0
    %2565 = vmatpush1.msra.mxu0 0.0
    %2566 = vmatprep.subr.mxu0 0.0
    %2567 = vmatpush1.msra.mxu0 0.0
    %2568 = vmatprep.subr.mxu0 0.0
    %2569 = vmatpush1.msra.mxu0 0.0
    %2570 = vmatprep.subr.mxu0 0.0
    %2571 = vmatpush1.msra.mxu0 0.0
    %2572 = vmatprep.subr.mxu0 0.0
    %2573 = vmatpush1.msra.mxu0 0.0
    %2574 = vmatprep.subr.mxu0 0.0
    %2575 = vmatpush1.msra.mxu0 0.0
    %2576 = vmatprep.subr.mxu0 0.0
    %2577 = vmatpush1.msra.mxu0 0.0
    %2578 = vmatprep.subr.mxu0 0.0
    %2579 = vmatpush1.msra.mxu0 0.0
    %2580 = vmatprep.subr.mxu0 0.0
    %2581 = vmatpush1.msra.mxu0 0.0
    %2582 = vmatprep.subr.mxu0 0.0
    %2583 = vmatpush1.msra.mxu0 0.0
    %2584 = vmatprep.subr.mxu0 0.0
    %2585 = vmatpush1.msra.mxu0 0.0
    %2586 = vmatprep.subr.mxu0 0.0
    %2587 = vmatpush1.msra.mxu0 0.0
    %2588 = vmatprep.subr.mxu0 0.0
    %2589 = vmatpush1.msra.mxu0 0.0
    %2590 = vmatprep.subr.mxu0 0.0
    %2591 = vmatpush1.msra.mxu0 0.0
    %2592 = vmatprep.subr.mxu0 0.0
    %2593 = vmatpush1.msra.mxu0 0.0
    %2594 = vmatprep.subr.mxu0 0.0
    %2595 = vmatpush1.msra.mxu0 0.0
    %2596 = vmatprep.subr.mxu0 0.0
    %2597 = vmatpush1.msra.mxu0 0.0
    %2598 = vmatprep.subr.mxu0 0.0
    %2599 = vmatpush1.msra.mxu0 0.0
    %2600 = vmatprep.subr.mxu0 0.0
    %2601 = vmatpush1.msra.mxu0 0.0
    %2602 = vmatprep.subr.mxu0 0.0
    %2603 = vmatpush1.msra.mxu0 0.0
    %2604 = vmatprep.subr.mxu0 0.0
    %2605 = vmatpush1.msra.mxu0 0.0
    %2606 = vmatprep.subr.mxu0 0.0
    %2607 = vmatpush1.msra.mxu0 0.0
    %2608 = vmatprep.subr.mxu0 0.0
    %2609 = vmatpush1.msra.mxu0 0.0
    %2610 = vmatprep.mubr.f32.mxu0 0.0
    %2611 = vmatmul.mubr.f32.gmra.mrb[0].mxu0 %v2538
    %v2612 = vpop.f32.mrb[0].mxu0
    %v2613 = vadd.f32 0.0, %v2612
    %v2614 = vpop.f32.mrb[0].mxu0
    %2615 = vmatprep.mubr.f32.mxu0 0.0
    %2616 = vmatmul.mubr.f32.gmra.mrb[0].mxu0 %v2541
    %v2617 = vpop.f32.mrb[0].mxu0
    %v2618 = vadd.f32 0.0, %v2617
    %v2619 = vpop.f32.mrb[0].mxu0
    %2620 = vmatprep.mubr.f32.mxu0 0.0
    %2621 = vmatmul.mubr.f32.gmra.mrb[0].mxu0 %v2544
    %v2622 = vpop.f32.mrb[0].mxu0
    %v2623 = vadd.f32 0.0, %v2622
    %v2624 = vpop.f32.mrb[0].mxu0
    %2625 = vdwg.mxu0
    %v2627 = vsel %vm155, %v2000, 0
    %v2630 = vsel %vm155, %v2005, 0
    %v2633 = vsel %vm155, %v2010, 0
    %2635 = vmatprep.subr.mxu0 0.0
    %2636 = vmatpush1.msra.mxu0 %v2528
    %2637 = vmatprep.subr.mxu0 0.0
    %2638 = vmatpush1.msra.mxu0 %v2529
    %2639 = vmatprep.subr.mxu0 0.0
    %2640 = vmatpush1.msra.mxu0 %v2530
    %2641 = vmatprep.subr.mxu0 0.0
    %2642 = vmatpush1.msra.mxu0 %v2531
    %2643 = vmatprep.subr.mxu0 0.0
    %2644 = vmatpush1.msra.mxu0 0.0
    %2645 = vmatprep.subr.mxu0 0.0
    %2646 = vmatpush1.msra.mxu0 0.0
    %2647 = vmatprep.subr.mxu0 0.0
    %2648 = vmatpush1.msra.mxu0 0.0
    %2649 = vmatprep.subr.mxu0 0.0
    %2650 = vmatpush1.msra.mxu0 0.0
    %2651 = vmatprep.subr.mxu0 0.0
    %2652 = vmatpush1.msra.mxu0 0.0
    %2653 = vmatprep.subr.mxu0 0.0
    %2654 = vmatpush1.msra.mxu0 0.0
    %2655 = vmatprep.subr.mxu0 0.0
    %2656 = vmatpush1.msra.mxu0 0.0
    %2657 = vmatprep.subr.mxu0 0.0
    %2658 = vmatpush1.msra.mxu0 0.0
    %2659 = vmatprep.subr.mxu0 0.0
    %2660 = vmatpush1.msra.mxu0 0.0
    %2661 = vmatprep.subr.mxu0 0.0
    %2662 = vmatpush1.msra.mxu0 0.0
    %2663 = vmatprep.subr.mxu0 0.0
    %2664 = vmatpush1.msra.mxu0 0.0
    %2665 = vmatprep.subr.mxu0 0.0
    %2666 = vmatpush1.msra.mxu0 0.0
    %2667 = vmatprep.subr.mxu0 0.0
    %2668 = vmatpush1.msra.mxu0 0.0
    %2669 = vmatprep.subr.mxu0 0.0
    %2670 = vmatpush1.msra.mxu0 0.0
    %2671 = vmatprep.subr.mxu0 0.0
    %2672 = vmatpush1.msra.mxu0 0.0
    %2673 = vmatprep.subr.mxu0 0.0
    %2674 = vmatpush1.msra.mxu0 0.0
    %2675 = vmatprep.subr.mxu0 0.0
    %2676 = vmatpush1.msra.mxu0 0.0
    %2677 = vmatprep.subr.mxu0 0.0
    %2678 = vmatpush1.msra.mxu0 0.0
    %2679 = vmatprep.subr.mxu0 0.0
    %2680 = vmatpush1.msra.mxu0 0.0
    %2681 = vmatprep.subr.mxu0 0.0
    %2682 = vmatpush1.msra.mxu0 0.0
    %2683 = vmatprep.subr.mxu0 0.0
    %2684 = vmatpush1.msra.mxu0 0.0
    %2685 = vmatprep.subr.mxu0 0.0
    %2686 = vmatpush1.msra.mxu0 0.0
    %2687 = vmatprep.subr.mxu0 0.0
    %2688 = vmatpush1.msra.mxu0 0.0
    %2689 = vmatprep.subr.mxu0 0.0
    %2690 = vmatpush1.msra.mxu0 0.0
    %2691 = vmatprep.subr.mxu0 0.0
    %2692 = vmatpush1.msra.mxu0 0.0
    %2693 = vmatprep.subr.mxu0 0.0
    %2694 = vmatpush1.msra.mxu0 0.0
    %2695 = vmatprep.subr.mxu0 0.0
    %2696 = vmatpush1.msra.mxu0 0.0
    %2697 = vmatprep.subr.mxu0 0.0
    %2698 = vmatpush1.msra.mxu0 0.0
    %2699 = vmatprep.mubr.f32.mxu0 0.0
    %2700 = vmatmul.mubr.f32.gmra.mrb[0].mxu0 %v2627
    %v2701 = vpop.f32.mrb[0].mxu0
    %v2702 = vadd.f32 %v2613, %v2701
    %v2703 = vpop.f32.mrb[0].mxu0
    %2704 = vmatprep.mubr.f32.mxu0 0.0
    %2705 = vmatmul.mubr.f32.gmra.mrb[0].mxu0 %v2630
    %v2706 = vpop.f32.mrb[0].mxu0
    %v2707 = vadd.f32 %v2618, %v2706
    %v2708 = vpop.f32.mrb[0].mxu0
    %2709 = vmatprep.mubr.f32.mxu0 0.0
    %2710 = vmatmul.mubr.f32.gmra.mrb[0].mxu0 %v2633
    %v2711 = vpop.f32.mrb[0].mxu0
    %v2712 = vadd.f32 %v2623, %v2711
    %v2713 = vpop.f32.mrb[0].mxu0
    %2714 = vdwg.mxu0
    %v2716 = vlaneseq
    %v2717 = vshrl.u32 %v2716, 7
    %v2718 = vsub.s32 0, %v2717
    %v2719 = vrot.slane %v2536, %v2718
    %v2721 = vadd.f32 %v2702, %v2719
    %v2722 = vadd.f32 %v2707, %v2719
    %v2723 = vadd.f32 %v2712, %v2719
    %vm2724 = vcmask 23552
    %v2725 = vsel %vm2724, %v2721, -inf
    %2726 = vmax.xlane.f32.xlu0 %v2725
    %v2727 = vpop.xlane.xlu0 %2726
    %v2728 = vsel %vm2724, %v2722, -inf
    %2729 = vmax.xlane.f32.xlu0 %v2728
    %v2730 = vpop.xlane.xlu0 %2729
    %vm2731 = vcmask 19456
    %v2732 = vsel %vm2731, %v2723, -inf
    %2733 = vmax.xlane.f32.xlu0 %v2732
    %v2734 = vpop.xlane.xlu0 %2733
    %v2735 = vsub.f32 %v2721, %v2727
    %v2736 = vsub.f32 %v2722, %v2730
    %v2737 = vsub.f32 %v2723, %v2734
    %v2738 = vmul.f32 %v2735, 1.442695
    %v2739 = vpow.pop %v2738
    %v2740 = vmul.f32 %v2736, 1.442695
    %v2741 = vpow.pop %v2740
    %v2742 = vmul.f32 %v2737, 1.442695
    %v2743 = vpow.pop %v2742
    %v2744 = vsel %vm2724, %v2739, 0.0
    %2745 = vadd.xlane.f32.xlu0 %v2744
    %v2746 = vpop.xlane.xlu0 %2745
    %v2747 = vsel %vm2724, %v2741, 0.0
    %2748 = vadd.xlane.f32.xlu0 %v2747
    %v2749 = vpop.xlane.xlu0 %2748
    %v2750 = vsel %vm2731, %v2743, 0.0
    %2751 = vadd.xlane.f32.xlu0 %v2750
    %v2752 = vpop.xlane.xlu0 %2751
    %v2753 = vlog2.pop %v2746
    %v2754 = vmul.f32 %v2753, 0.6931472
    %v2755 = vlog2.pop %v2749
    %v2756 = vmul.f32 %v2755, 0.6931472
    %v2757 = vlog2.pop %v2752
    %v2758 = vmul.f32 %v2757, 0.6931472
    %v2759 = vsub.f32 %v2735, %v2754
    %v2760 = vsub.f32 %v2736, %v2756
    %v2761 = vsub.f32 %v2737, %v2758
    %v2762 = vld [vmem:[%s57] sm:$0xff]
    %v2763 = vld [vmem:[%s57 + $0x8] sm:$0xff]
    %v2764 = vld [vmem:[%s57 + $0x10] sm:$0xf]
    %v2765 = vmul.f32 %v2762, %v2759
    %v2766 = vmul.f32 %v2763, %v2760
    %v2767 = vmul.f32 %v2764, %v2761
    %v2768 = vsel %vm2724, %v2765, 0.0
    %2769 = vadd.xlane.f32.xlu0 %v2768
    %v2770 = vpop.xlane.xlu0 %2769
    %v2771 = vsel %vm2724, %v2766, 0.0
    %2772 = vadd.xlane.f32.xlu0 %v2771
    %v2773 = vpop.xlane.xlu0 %2772
    %v2774 = vsel %vm2731, %v2767, 0.0
    %2775 = vadd.xlane.f32.xlu0 %v2774
    %v2776 = vpop.xlane.xlu0 %2775
    %v2777 = vsub.f32 0.0, %v2770
    %v2778 = vsub.f32 0.0, %v2773
    %v2779 = vsub.f32 0.0, %v2776
    %v2780 = vadd.f32 %v2777, %v2778
    %v2781 = vsel %vm2508, %v2779, 0.0
    %v2782 = vadd.f32 %v2780, %v2781
    %v2783 = vrot.slane %v2782, 4
    %v2784 = vadd.f32 %v2782, %v2783
    %v2785 = vrot.slane %v2784, 2
    %v2786 = vadd.f32 %v2784, %v2785
    %v2787 = vrot.slane %v2786, 1
    %v2788 = vadd.f32 %v2786, %v2787
    %v2790 = vsel %vm155, %v2355, 0
    %v2793 = vsel %vm155, %v2360, 0
    %2795 = vmatprep.subr.mxu0 0.0
    %2796 = vmatpush1.msra.mxu0 %v2532
    %2797 = vmatprep.subr.mxu0 0.0
    %2798 = vmatpush1.msra.mxu0 %v2533
    %2799 = vmatprep.subr.mxu0 0.0
    %2800 = vmatpush1.msra.mxu0 %v2534
    %2801 = vmatprep.subr.mxu0 0.0
    %2802 = vmatpush1.msra.mxu0 %v2535
    %2803 = vmatprep.subr.mxu0 0.0
    %2804 = vmatpush1.msra.mxu0 0.0
    %2805 = vmatprep.subr.mxu0 0.0
    %2806 = vmatpush1.msra.mxu0 0.0
    %2807 = vmatprep.subr.mxu0 0.0
    %2808 = vmatpush1.msra.mxu0 0.0
    %2809 = vmatprep.subr.mxu0 0.0
    %2810 = vmatpush1.msra.mxu0 0.0
    %2811 = vmatprep.subr.mxu0 0.0
    %2812 = vmatpush1.msra.mxu0 0.0
    %2813 = vmatprep.subr.mxu0 0.0
    %2814 = vmatpush1.msra.mxu0 0.0
    %2815 = vmatprep.subr.mxu0 0.0
    %2816 = vmatpush1.msra.mxu0 0.0
    %2817 = vmatprep.subr.mxu0 0.0
    %2818 = vmatpush1.msra.mxu0 0.0
    %2819 = vmatprep.subr.mxu0 0.0
    %2820 = vmatpush1.msra.mxu0 0.0
    %2821 = vmatprep.subr.mxu0 0.0
    %2822 = vmatpush1.msra.mxu0 0.0
    %2823 = vmatprep.subr.mxu0 0.0
    %2824 = vmatpush1.msra.mxu0 0.0
    %2825 = vmatprep.subr.mxu0 0.0
    %2826 = vmatpush1.msra.mxu0 0.0
    %2827 = vmatprep.subr.mxu0 0.0
    %2828 = vmatpush1.msra.mxu0 0.0
    %2829 = vmatprep.subr.mxu0 0.0
    %2830 = vmatpush1.msra.mxu0 0.0
    %2831 = vmatprep.subr.mxu0 0.0
    %2832 = vmatpush1.msra.mxu0 0.0
    %2833 = vmatprep.subr.mxu0 0.0
    %2834 = vmatpush1.msra.mxu0 0.0
    %2835 = vmatprep.subr.mxu0 0.0
    %2836 = vmatpush1.msra.mxu0 0.0
    %2837 = vmatprep.subr.mxu0 0.0
    %2838 = vmatpush1.msra.mxu0 0.0
    %2839 = vmatprep.subr.mxu0 0.0
    %2840 = vmatpush1.msra.mxu0 0.0
    %2841 = vmatprep.subr.mxu0 0.0
    %2842 = vmatpush1.msra.mxu0 0.0
    %2843 = vmatprep.subr.mxu0 0.0
    %2844 = vmatpush1.msra.mxu0 0.0
    %2845 = vmatprep.subr.mxu0 0.0
    %2846 = vmatpush1.msra.mxu0 0.0
    %2847 = vmatprep.subr.mxu0 0.0
    %2848 = vmatpush1.msra.mxu0 0.0
    %2849 = vmatprep.subr.mxu0 0.0
    %2850 = vmatpush1.msra.mxu0 0.0
    %2851 = vmatprep.subr.mxu0 0.0
    %2852 = vmatpush1.msra.mxu0 0.0
    %2853 = vmatprep.subr.mxu0 0.0
    %2854 = vmatpush1.msra.mxu0 0.0
    %2855 = vmatprep.subr.mxu0 0.0
    %2856 = vmatpush1.msra.mxu0 0.0
    %2857 = vmatprep.subr.mxu0 0.0
    %2858 = vmatpush1.msra.mxu0 0.0
    %2859 = vmatprep.mubr.f32.mxu0 0.0
    %2860 = vmatmul.mubr.f32.gmra.mrb[0].mxu0 %v2790
    %v2861 = vpop.f32.mrb[0].mxu0
    %v2862 = vadd.f32 0.0, %v2861
    %v2863 = vpop.f32.mrb[0].mxu0
    %2864 = vmatprep.mubr.f32.mxu0 0.0
    %2865 = vmatmul.mubr.f32.gmra.mrb[0].mxu0 %v2793
    %v2866 = vpop.f32.mrb[0].mxu0
    %v2867 = vadd.f32 0.0, %v2866
    %v2868 = vpop.f32.mrb[0].mxu0
    %2869 = vdwg.mxu0
    %v2871 = vsel %vm155, %v2272, 0
    %v2874 = vsel %vm155, %v2277, 0
    %2876 = vmatprep.subr.mxu0 0.0
    %2877 = vmatpush1.msra.mxu0 %v2528
    %2878 = vmatprep.subr.mxu0 0.0
    %2879 = vmatpush1.msra.mxu0 %v2529
    %2880 = vmatprep.subr.mxu0 0.0
    %2881 = vmatpush1.msra.mxu0 %v2530
    %2882 = vmatprep.subr.mxu0 0.0
    %2883 = vmatpush1.msra.mxu0 %v2531
    %2884 = vmatprep.subr.mxu0 0.0
    %2885 = vmatpush1.msra.mxu0 0.0
    %2886 = vmatprep.subr.mxu0 0.0
    %2887 = vmatpush1.msra.mxu0 0.0
    %2888 = vmatprep.subr.mxu0 0.0
    %2889 = vmatpush1.msra.mxu0 0.0
    %2890 = vmatprep.subr.mxu0 0.0
    %2891 = vmatpush1.msra.mxu0 0.0
    %2892 = vmatprep.subr.mxu0 0.0
    %2893 = vmatpush1.msra.mxu0 0.0
    %2894 = vmatprep.subr.mxu0 0.0
    %2895 = vmatpush1.msra.mxu0 0.0
    %2896 = vmatprep.subr.mxu0 0.0
    %2897 = vmatpush1.msra.mxu0 0.0
    %2898 = vmatprep.subr.mxu0 0.0
    %2899 = vmatpush1.msra.mxu0 0.0
    %2900 = vmatprep.subr.mxu0 0.0
    %2901 = vmatpush1.msra.mxu0 0.0
    %2902 = vmatprep.subr.mxu0 0.0
    %2903 = vmatpush1.msra.mxu0 0.0
    %2904 = vmatprep.subr.mxu0 0.0
    %2905 = vmatpush1.msra.mxu0 0.0
    %2906 = vmatprep.subr.mxu0 0.0
    %2907 = vmatpush1.msra.mxu0 0.0
    %2908 = vmatprep.subr.mxu0 0.0
    %2909 = vmatpush1.msra.mxu0 0.0
    %2910 = vmatprep.subr.mxu0 0.0
    %2911 = vmatpush1.msra.mxu0 0.0
    %2912 = vmatprep.subr.mxu0 0.0
    %2913 = vmatpush1.msra.mxu0 0.0
    %2914 = vmatprep.subr.mxu0 0.0
    %2915 = vmatpush1.msra.mxu0 0.0
    %2916 = vmatprep.subr.mxu0 0.0
    %2917 = vmatpush1.msra.mxu0 0.0
    %2918 = vmatprep.subr.mxu0 0.0
    %2919 = vmatpush1.msra.mxu0 0.0
    %2920 = vmatprep.subr.mxu0 0.0
    %2921 = vmatpush1.msra.mxu0 0.0
    %2922 = vmatprep.subr.mxu0 0.0
    %2923 = vmatpush1.msra.mxu0 0.0
    %2924 = vmatprep.subr.mxu0 0.0
    %2925 = vmatpush1.msra.mxu0 0.0
    %2926 = vmatprep.subr.mxu0 0.0
    %2927 = vmatpush1.msra.mxu0 0.0
    %2928 = vmatprep.subr.mxu0 0.0
    %2929 = vmatpush1.msra.mxu0 0.0
    %2930 = vmatprep.subr.mxu0 0.0
    %2931 = vmatpush1.msra.mxu0 0.0
    %2932 = vmatprep.subr.mxu0 0.0
    %2933 = vmatpush1.msra.mxu0 0.0
    %2934 = vmatprep.subr.mxu0 0.0
    %2935 = vmatpush1.msra.mxu0 0.0
    %2936 = vmatprep.subr.mxu0 0.0
    %2937 = vmatpush1.msra.mxu0 0.0
    %2938 = vmatprep.subr.mxu0 0.0
    %2939 = vmatpush1.msra.mxu0 0.0
    %2940 = vmatprep.mubr.f32.mxu0 0.0
    %2941 = vmatmul.mubr.f32.gmra.mrb[0].mxu0 %v2871
    %v2942 = vpop.f32.mrb[0].mxu0
    %v2943 = vadd.f32 %v2862, %v2942
    %v2944 = vpop.f32.mrb[0].mxu0
    %2945 = vmatprep.mubr.f32.mxu0 0.0
    %2946 = vmatmul.mubr.f32.gmra.mrb[0].mxu0 %v2874
    %v2947 = vpop.f32.mrb[0].mxu0
    %v2948 = vadd.f32 %v2867, %v2947
    %v2949 = vpop.f32.mrb[0].mxu0
    %2950 = vdwg.mxu0
    %v2951 = vadd.f32 %v2943, %v2719
    %v2952 = vadd.f32 %v2948, %v2719
    %v2953 = vsel %vm2724, %v2951, -inf
    %2954 = vmax.xlane.f32.xlu0 %v2953
    %v2955 = vpop.xlane.xlu0 %2954
    %v2956 = vsel %vm2724, %v2952, -inf
    %2957 = vmax.xlane.f32.xlu0 %v2956
    %v2958 = vpop.xlane.xlu0 %2957
    %v2959 = vsub.f32 %v2951, %v2955
    %v2960 = vsub.f32 %v2952, %v2958
    %v2961 = vmul.f32 %v2959, 1.442695
    %v2962 = vpow.pop %v2961
    %v2963 = vmul.f32 %v2960, 1.442695
    %v2964 = vpow.pop %v2963
    %v2965 = vsel %vm2724, %v2962, 0.0
    %2966 = vadd.xlane.f32.xlu0 %v2965
    %v2967 = vpop.xlane.xlu0 %2966
    %v2968 = vsel %vm2724, %v2964, 0.0
    %2969 = vadd.xlane.f32.xlu0 %v2968
    %v2970 = vpop.xlane.xlu0 %2969
    %v2971 = vlog2.pop %v2967
    %v2972 = vmul.f32 %v2971, 0.6931472
    %v2973 = vlog2.pop %v2970
    %v2974 = vmul.f32 %v2973, 0.6931472
    %v2975 = vsub.f32 %v2959, %v2972
    %v2976 = vsub.f32 %v2960, %v2974
    %v2977 = vld [vmem:[%s59] sm:$0xff]
    %v2978 = vld [vmem:[%s59 + $0x8] sm:$0xff]
    %v2979 = vmul.f32 %v2977, %v2975
    %v2980 = vmul.f32 %v2978, %v2976
    %v2981 = vsel %vm2724, %v2979, 0.0
    %2982 = vadd.xlane.f32.xlu0 %v2981
    %v2983 = vpop.xlane.xlu0 %2982
    %v2984 = vsel %vm2724, %v2980, 0.0
    %2985 = vadd.xlane.f32.xlu0 %v2984
    %v2986 = vpop.xlane.xlu0 %2985
    %v2987 = vsub.f32 0.0, %v2983
    %v2988 = vsub.f32 0.0, %v2986
    %v2989 = vadd.f32 %v2987, %v2988
    %v2990 = vrot.slane %v2989, 4
    %v2991 = vadd.f32 %v2989, %v2990
    %v2992 = vrot.slane %v2991, 2
    %v2993 = vadd.f32 %v2991, %v2992
    %v2994 = vrot.slane %v2993, 1
    %v2995 = vadd.f32 %v2993, %v2994
    %v2996 = vadd.f32 %v2788, %v2995
    %v2998 = vsel %vm155, %v2438, 0
    %v3001 = vsel %vm155, %v2443, 0
    %3003 = vmatprep.subr.mxu0 0.0
    %3004 = vmatpush1.msra.mxu0 %v2532
    %3005 = vmatprep.subr.mxu0 0.0
    %3006 = vmatpush1.msra.mxu0 %v2533
    %3007 = vmatprep.subr.mxu0 0.0
    %3008 = vmatpush1.msra.mxu0 %v2534
    %3009 = vmatprep.subr.mxu0 0.0
    %3010 = vmatpush1.msra.mxu0 %v2535
    %3011 = vmatprep.subr.mxu0 0.0
    %3012 = vmatpush1.msra.mxu0 0.0
    %3013 = vmatprep.subr.mxu0 0.0
    %3014 = vmatpush1.msra.mxu0 0.0
    %3015 = vmatprep.subr.mxu0 0.0
    %3016 = vmatpush1.msra.mxu0 0.0
    %3017 = vmatprep.subr.mxu0 0.0
    %3018 = vmatpush1.msra.mxu0 0.0
    %3019 = vmatprep.subr.mxu0 0.0
    %3020 = vmatpush1.msra.mxu0 0.0
    %3021 = vmatprep.subr.mxu0 0.0
    %3022 = vmatpush1.msra.mxu0 0.0
    %3023 = vmatprep.subr.mxu0 0.0
    %3024 = vmatpush1.msra.mxu0 0.0
    %3025 = vmatprep.subr.mxu0 0.0
    %3026 = vmatpush1.msra.mxu0 0.0
    %3027 = vmatprep.subr.mxu0 0.0
    %3028 = vmatpush1.msra.mxu0 0.0
    %3029 = vmatprep.subr.mxu0 0.0
    %3030 = vmatpush1.msra.mxu0 0.0
    %3031 = vmatprep.subr.mxu0 0.0
    %3032 = vmatpush1.msra.mxu0 0.0
    %3033 = vmatprep.subr.mxu0 0.0
    %3034 = vmatpush1.msra.mxu0 0.0
    %3035 = vmatprep.subr.mxu0 0.0
    %3036 = vmatpush1.msra.mxu0 0.0
    %3037 = vmatprep.subr.mxu0 0.0
    %3038 = vmatpush1.msra.mxu0 0.0
    %3039 = vmatprep.subr.mxu0 0.0
    %3040 = vmatpush1.msra.mxu0 0.0
    %3041 = vmatprep.subr.mxu0 0.0
    %3042 = vmatpush1.msra.mxu0 0.0
    %3043 = vmatprep.subr.mxu0 0.0
    %3044 = vmatpush1.msra.mxu0 0.0
    %3045 = vmatprep.subr.mxu0 0.0
    %3046 = vmatpush1.msra.mxu0 0.0
    %3047 = vmatprep.subr.mxu0 0.0
    %3048 = vmatpush1.msra.mxu0 0.0
    %3049 = vmatprep.subr.mxu0 0.0
    %3050 = vmatpush1.msra.mxu0 0.0
    %3051 = vmatprep.subr.mxu0 0.0
    %3052 = vmatpush1.msra.mxu0 0.0
    %3053 = vmatprep.subr.mxu0 0.0
    %3054 = vmatpush1.msra.mxu0 0.0
    %3055 = vmatprep.subr.mxu0 0.0
    %3056 = vmatpush1.msra.mxu0 0.0
    %3057 = vmatprep.subr.mxu0 0.0
    %3058 = vmatpush1.msra.mxu0 0.0
    %3059 = vmatprep.subr.mxu0 0.0
    %3060 = vmatpush1.msra.mxu0 0.0
    %3061 = vmatprep.subr.mxu0 0.0
    %3062 = vmatpush1.msra.mxu0 0.0
    %3063 = vmatprep.subr.mxu0 0.0
    %3064 = vmatpush1.msra.mxu0 0.0
    %3065 = vmatprep.subr.mxu0 0.0
    %3066 = vmatpush1.msra.mxu0 0.0
    %3067 = vmatprep.mubr.f32.mxu0 0.0
    %3068 = vmatmul.mubr.f32.gmra.mrb[0].mxu0 %v2998
    %v3069 = vpop.f32.mrb[0].mxu0
    %v3070 = vadd.f32 0.0, %v3069
    %v3071 = vpop.f32.mrb[0].mxu0
    %3072 = vmatprep.mubr.f32.mxu0 0.0
    %3073 = vmatmul.mubr.f32.gmra.mrb[0].mxu0 %v3001
    %v3074 = vpop.f32.mrb[0].mxu0
    %v3075 = vadd.f32 0.0, %v3074
    %v3076 = vpop.f32.mrb[0].mxu0
    %3077 = vdwg.mxu0
    %3078 = vmatprep.subr.mxu0 0.0
    %3079 = vmatpush1.msra.mxu0 %v2528
    %3080 = vmatprep.subr.mxu0 0.0
    %3081 = vmatpush1.msra.mxu0 %v2529
    %3082 = vmatprep.subr.mxu0 0.0
    %3083 = vmatpush1.msra.mxu0 %v2530
    %3084 = vmatprep.subr.mxu0 0.0
    %3085 = vmatpush1.msra.mxu0 %v2531
    %3086 = vmatprep.subr.mxu0 0.0
    %3087 = vmatpush1.msra.mxu0 0.0
    %3088 = vmatprep.subr.mxu0 0.0
    %3089 = vmatpush1.msra.mxu0 0.0
    %3090 = vmatprep.subr.mxu0 0.0
    %3091 = vmatpush1.msra.mxu0 0.0
    %3092 = vmatprep.subr.mxu0 0.0
    %3093 = vmatpush1.msra.mxu0 0.0
    %3094 = vmatprep.subr.mxu0 0.0
    %3095 = vmatpush1.msra.mxu0 0.0
    %3096 = vmatprep.subr.mxu0 0.0
    %3097 = vmatpush1.msra.mxu0 0.0
    %3098 = vmatprep.subr.mxu0 0.0
    %3099 = vmatpush1.msra.mxu0 0.0
    %3100 = vmatprep.subr.mxu0 0.0
    %3101 = vmatpush1.msra.mxu0 0.0
    %3102 = vmatprep.subr.mxu0 0.0
    %3103 = vmatpush1.msra.mxu0 0.0
    %3104 = vmatprep.subr.mxu0 0.0
    %3105 = vmatpush1.msra.mxu0 0.0
    %3106 = vmatprep.subr.mxu0 0.0
    %3107 = vmatpush1.msra.mxu0 0.0
    %3108 = vmatprep.subr.mxu0 0.0
    %3109 = vmatpush1.msra.mxu0 0.0
    %3110 = vmatprep.subr.mxu0 0.0
    %3111 = vmatpush1.msra.mxu0 0.0
    %3112 = vmatprep.subr.mxu0 0.0
    %3113 = vmatpush1.msra.mxu0 0.0
    %3114 = vmatprep.subr.mxu0 0.0
    %3115 = vmatpush1.msra.mxu0 0.0
    %3116 = vmatprep.subr.mxu0 0.0
    %3117 = vmatpush1.msra.mxu0 0.0
    %3118 = vmatprep.subr.mxu0 0.0
    %3119 = vmatpush1.msra.mxu0 0.0
    %3120 = vmatprep.subr.mxu0 0.0
    %3121 = vmatpush1.msra.mxu0 0.0
    %3122 = vmatprep.subr.mxu0 0.0
    %3123 = vmatpush1.msra.mxu0 0.0
    %3124 = vmatprep.subr.mxu0 0.0
    %3125 = vmatpush1.msra.mxu0 0.0
    %3126 = vmatprep.subr.mxu0 0.0
    %3127 = vmatpush1.msra.mxu0 0.0
    %3128 = vmatprep.subr.mxu0 0.0
    %3129 = vmatpush1.msra.mxu0 0.0
    %3130 = vmatprep.subr.mxu0 0.0
    %3131 = vmatpush1.msra.mxu0 0.0
    %3132 = vmatprep.subr.mxu0 0.0
    %3133 = vmatpush1.msra.mxu0 0.0
    %3134 = vmatprep.subr.mxu0 0.0
    %3135 = vmatpush1.msra.mxu0 0.0
    %3136 = vmatprep.subr.mxu0 0.0
    %3137 = vmatpush1.msra.mxu0 0.0
    %3138 = vmatprep.subr.mxu0 0.0
    %3139 = vmatpush1.msra.mxu0 0.0
    %3140 = vmatprep.subr.mxu0 0.0
    %3141 = vmatpush1.msra.mxu0 0.0
    %3142 = vmatprep.mubr.f32.mxu0 0.0
    %3143 = vmatmul.mubr.f32.gmra.mrb[0].mxu0 %v2871
    %v3144 = vpop.f32.mrb[0].mxu0
    %v3145 = vadd.f32 %v3070, %v3144
    %v3146 = vpop.f32.mrb[0].mxu0
    %3147 = vmatprep.mubr.f32.mxu0 0.0
    %3148 = vmatmul.mubr.f32.gmra.mrb[0].mxu0 %v2874
    %v3149 = vpop.f32.mrb[0].mxu0
    %v3150 = vadd.f32 %v3075, %v3149
    %v3151 = vpop.f32.mrb[0].mxu0
    %3152 = vdwg.mxu0
    %v3153 = vadd.f32 %v3145, %v2719
    %v3154 = vadd.f32 %v3150, %v2719
    %v3155 = vsel %vm2724, %v3153, -inf
    %3156 = vmax.xlane.f32.xlu0 %v3155
    %v3157 = vpop.xlane.xlu0 %3156
    %v3158 = vsel %vm2724, %v3154, -inf
    %3159 = vmax.xlane.f32.xlu0 %v3158
    %v3160 = vpop.xlane.xlu0 %3159
    %v3161 = vsub.f32 %v3153, %v3157
    %v3162 = vsub.f32 %v3154, %v3160
    %v3163 = vmul.f32 %v3161, 1.442695
    %v3164 = vpow.pop %v3163
    %v3165 = vmul.f32 %v3162, 1.442695
    %v3166 = vpow.pop %v3165
    %v3167 = vsel %vm2724, %v3164, 0.0
    %3168 = vadd.xlane.f32.xlu0 %v3167
    %v3169 = vpop.xlane.xlu0 %3168
    %v3170 = vsel %vm2724, %v3166, 0.0
    %3171 = vadd.xlane.f32.xlu0 %v3170
    %v3172 = vpop.xlane.xlu0 %3171
    %v3173 = vlog2.pop %v3169
    %v3174 = vmul.f32 %v3173, 0.6931472
    %v3175 = vlog2.pop %v3172
    %v3176 = vmul.f32 %v3175, 0.6931472
    %v3177 = vsub.f32 %v3161, %v3174
    %v3178 = vsub.f32 %v3162, %v3176
    %v3179 = vld [vmem:[%s61] sm:$0xff]
    %v3180 = vld [vmem:[%s61 + $0x8] sm:$0xff]
    %v3181 = vmul.f32 %v3179, %v3177
    %v3182 = vmul.f32 %v3180, %v3178
    %v3183 = vsel %vm2724, %v3181, 0.0
    %3184 = vadd.xlane.f32.xlu0 %v3183
    %v3185 = vpop.xlane.xlu0 %3184
    %v3186 = vsel %vm2724, %v3182, 0.0
    %3187 = vadd.xlane.f32.xlu0 %v3186
    %v3188 = vpop.xlane.xlu0 %3187
    %v3189 = vsub.f32 0.0, %v3185
    %v3190 = vsub.f32 0.0, %v3188
    %v3191 = vadd.f32 %v3189, %v3190
    %v3192 = vrot.slane %v3191, 4
    %v3193 = vadd.f32 %v3191, %v3192
    %v3194 = vrot.slane %v3193, 2
    %v3195 = vadd.f32 %v3193, %v3194
    %v3196 = vrot.slane %v3195, 1
    %v3197 = vadd.f32 %v3195, %v3196
    %v3198 = vadd.f32 %v2996, %v3197
    %3199 = vmatprep.subr.mxu0 0.0
    %3200 = vmatpush1.msra.mxu0 %v2528
    %3201 = vmatprep.subr.mxu0 0.0
    %3202 = vmatpush1.msra.mxu0 %v2529
    %3203 = vmatprep.subr.mxu0 0.0
    %3204 = vmatpush1.msra.mxu0 %v2530
    %3205 = vmatprep.subr.mxu0 0.0
    %3206 = vmatpush1.msra.mxu0 %v2531
    %3207 = vmatprep.subr.mxu0 0.0
    %3208 = vmatpush1.msra.mxu0 0.0
    %3209 = vmatprep.subr.mxu0 0.0
    %3210 = vmatpush1.msra.mxu0 0.0
    %3211 = vmatprep.subr.mxu0 0.0
    %3212 = vmatpush1.msra.mxu0 0.0
    %3213 = vmatprep.subr.mxu0 0.0
    %3214 = vmatpush1.msra.mxu0 0.0
    %3215 = vmatprep.subr.mxu0 0.0
    %3216 = vmatpush1.msra.mxu0 0.0
    %3217 = vmatprep.subr.mxu0 0.0
    %3218 = vmatpush1.msra.mxu0 0.0
    %3219 = vmatprep.subr.mxu0 0.0
    %3220 = vmatpush1.msra.mxu0 0.0
    %3221 = vmatprep.subr.mxu0 0.0
    %3222 = vmatpush1.msra.mxu0 0.0
    %3223 = vmatprep.subr.mxu0 0.0
    %3224 = vmatpush1.msra.mxu0 0.0
    %3225 = vmatprep.subr.mxu0 0.0
    %3226 = vmatpush1.msra.mxu0 0.0
    %3227 = vmatprep.subr.mxu0 0.0
    %3228 = vmatpush1.msra.mxu0 0.0
    %3229 = vmatprep.subr.mxu0 0.0
    %3230 = vmatpush1.msra.mxu0 0.0
    %3231 = vmatprep.subr.mxu0 0.0
    %3232 = vmatpush1.msra.mxu0 0.0
    %3233 = vmatprep.subr.mxu0 0.0
    %3234 = vmatpush1.msra.mxu0 0.0
    %3235 = vmatprep.subr.mxu0 0.0
    %3236 = vmatpush1.msra.mxu0 0.0
    %3237 = vmatprep.subr.mxu0 0.0
    %3238 = vmatpush1.msra.mxu0 0.0
    %3239 = vmatprep.subr.mxu0 0.0
    %3240 = vmatpush1.msra.mxu0 0.0
    %3241 = vmatprep.subr.mxu0 0.0
    %3242 = vmatpush1.msra.mxu0 0.0
    %3243 = vmatprep.subr.mxu0 0.0
    %3244 = vmatpush1.msra.mxu0 0.0
    %3245 = vmatprep.subr.mxu0 0.0
    %3246 = vmatpush1.msra.mxu0 0.0
    %3247 = vmatprep.subr.mxu0 0.0
    %3248 = vmatpush1.msra.mxu0 0.0
    %3249 = vmatprep.subr.mxu0 0.0
    %3250 = vmatpush1.msra.mxu0 0.0
    %3251 = vmatprep.subr.mxu0 0.0
    %3252 = vmatpush1.msra.mxu0 0.0
    %3253 = vmatprep.subr.mxu0 0.0
    %3254 = vmatpush1.msra.mxu0 0.0
    %3255 = vmatprep.subr.mxu0 0.0
    %3256 = vmatpush1.msra.mxu0 0.0
    %3257 = vmatprep.subr.mxu0 0.0
    %3258 = vmatpush1.msra.mxu0 0.0
    %3259 = vmatprep.subr.mxu0 0.0
    %3260 = vmatpush1.msra.mxu0 0.0
    %3261 = vmatprep.subr.mxu0 0.0
    %3262 = vmatpush1.msra.mxu0 0.0
    %3263 = vmatprep.mubr.f32.mxu0 0.0
    %3264 = vmatmul.mubr.f32.gmra.mrb[0].mxu0 %v2790
    %v3265 = vpop.f32.mrb[0].mxu0
    %v3266 = vadd.f32 %v3070, %v3265
    %v3267 = vpop.f32.mrb[0].mxu0
    %3268 = vmatprep.mubr.f32.mxu0 0.0
    %3269 = vmatmul.mubr.f32.gmra.mrb[0].mxu0 %v2793
    %v3270 = vpop.f32.mrb[0].mxu0
    %v3271 = vadd.f32 %v3075, %v3270
    %v3272 = vpop.f32.mrb[0].mxu0
    %3273 = vdwg.mxu0
    %v3274 = vadd.f32 %v3266, %v2719
    %v3275 = vadd.f32 %v3271, %v2719
    %v3276 = vsel %vm2724, %v3274, -inf
    %3277 = vmax.xlane.f32.xlu0 %v3276
    %v3278 = vpop.xlane.xlu0 %3277
    %v3279 = vsel %vm2724, %v3275, -inf
    %3280 = vmax.xlane.f32.xlu0 %v3279
    %v3281 = vpop.xlane.xlu0 %3280
    %v3282 = vsub.f32 %v3274, %v3278
    %v3283 = vsub.f32 %v3275, %v3281
    %v3284 = vmul.f32 %v3282, 1.442695
    %v3285 = vpow.pop %v3284
    %v3286 = vmul.f32 %v3283, 1.442695
    %v3287 = vpow.pop %v3286
    %v3288 = vsel %vm2724, %v3285, 0.0
    %3289 = vadd.xlane.f32.xlu0 %v3288
    %v3290 = vpop.xlane.xlu0 %3289
    %v3291 = vsel %vm2724, %v3287, 0.0
    %3292 = vadd.xlane.f32.xlu0 %v3291
    %v3293 = vpop.xlane.xlu0 %3292
    %v3294 = vlog2.pop %v3290
    %v3295 = vmul.f32 %v3294, 0.6931472
    %v3296 = vlog2.pop %v3293
    %v3297 = vmul.f32 %v3296, 0.6931472
    %v3298 = vsub.f32 %v3282, %v3295
    %v3299 = vsub.f32 %v3283, %v3297
    %v3300 = vld [vmem:[%s63] sm:$0xff]
    %v3301 = vld [vmem:[%s63 + $0x8] sm:$0xff]
    %v3302 = vmul.f32 %v3300, %v3298
    %v3303 = vmul.f32 %v3301, %v3299
    %v3304 = vsel %vm2724, %v3302, 0.0
    %3305 = vadd.xlane.f32.xlu0 %v3304
    %v3306 = vpop.xlane.xlu0 %3305
    %v3307 = vsel %vm2724, %v3303, 0.0
    %3308 = vadd.xlane.f32.xlu0 %v3307
    %v3309 = vpop.xlane.xlu0 %3308
    %v3310 = vsub.f32 0.0, %v3306
    %v3311 = vsub.f32 0.0, %v3309
    %v3312 = vadd.f32 %v3310, %v3311
    %v3313 = vrot.slane %v3312, 4
    %v3314 = vadd.f32 %v3312, %v3313
    %v3315 = vrot.slane %v3314, 2
    %v3316 = vadd.f32 %v3314, %v3315
    %v3317 = vrot.slane %v3316, 1
    %v3318 = vadd.f32 %v3316, %v3317
    %v3319 = vadd.f32 %v3198, %v3318
    %v3321 = vsel %vm155, %v2184, 0
    %v3324 = vsel %vm155, %v2189, 0
    %v3327 = vsel %vm155, %v2194, 0
    %3329 = vmatprep.subr.mxu0 0.0
    %3330 = vmatpush1.msra.mxu0 %v2532
    %3331 = vmatprep.subr.mxu0 0.0
    %3332 = vmatpush1.msra.mxu0 %v2533
    %3333 = vmatprep.subr.mxu0 0.0
    %3334 = vmatpush1.msra.mxu0 %v2534
    %3335 = vmatprep.subr.mxu0 0.0
    %3336 = vmatpush1.msra.mxu0 %v2535
    %3337 = vmatprep.subr.mxu0 0.0
    %3338 = vmatpush1.msra.mxu0 0.0
    %3339 = vmatprep.subr.mxu0 0.0
    %3340 = vmatpush1.msra.mxu0 0.0
    %3341 = vmatprep.subr.mxu0 0.0
    %3342 = vmatpush1.msra.mxu0 0.0
    %3343 = vmatprep.subr.mxu0 0.0
    %3344 = vmatpush1.msra.mxu0 0.0
    %3345 = vmatprep.subr.mxu0 0.0
    %3346 = vmatpush1.msra.mxu0 0.0
    %3347 = vmatprep.subr.mxu0 0.0
    %3348 = vmatpush1.msra.mxu0 0.0
    %3349 = vmatprep.subr.mxu0 0.0
    %3350 = vmatpush1.msra.mxu0 0.0
    %3351 = vmatprep.subr.mxu0 0.0
    %3352 = vmatpush1.msra.mxu0 0.0
    %3353 = vmatprep.subr.mxu0 0.0
    %3354 = vmatpush1.msra.mxu0 0.0
    %3355 = vmatprep.subr.mxu0 0.0
    %3356 = vmatpush1.msra.mxu0 0.0
    %3357 = vmatprep.subr.mxu0 0.0
    %3358 = vmatpush1.msra.mxu0 0.0
    %3359 = vmatprep.subr.mxu0 0.0
    %3360 = vmatpush1.msra.mxu0 0.0
    %3361 = vmatprep.subr.mxu0 0.0
    %3362 = vmatpush1.msra.mxu0 0.0
    %3363 = vmatprep.subr.mxu0 0.0
    %3364 = vmatpush1.msra.mxu0 0.0
    %3365 = vmatprep.subr.mxu0 0.0
    %3366 = vmatpush1.msra.mxu0 0.0
    %3367 = vmatprep.subr.mxu0 0.0
    %3368 = vmatpush1.msra.mxu0 0.0
    %3369 = vmatprep.subr.mxu0 0.0
    %3370 = vmatpush1.msra.mxu0 0.0
    %3371 = vmatprep.subr.mxu0 0.0
    %3372 = vmatpush1.msra.mxu0 0.0
    %3373 = vmatprep.subr.mxu0 0.0
    %3374 = vmatpush1.msra.mxu0 0.0
    %3375 = vmatprep.subr.mxu0 0.0
    %3376 = vmatpush1.msra.mxu0 0.0
    %3377 = vmatprep.subr.mxu0 0.0
    %3378 = vmatpush1.msra.mxu0 0.0
    %3379 = vmatprep.subr.mxu0 0.0
    %3380 = vmatpush1.msra.mxu0 0.0
    %3381 = vmatprep.subr.mxu0 0.0
    %3382 = vmatpush1.msra.mxu0 0.0
    %3383 = vmatprep.subr.mxu0 0.0
    %3384 = vmatpush1.msra.mxu0 0.0
    %3385 = vmatprep.subr.mxu0 0.0
    %3386 = vmatpush1.msra.mxu0 0.0
    %3387 = vmatprep.subr.mxu0 0.0
    %3388 = vmatpush1.msra.mxu0 0.0
    %3389 = vmatprep.subr.mxu0 0.0
    %3390 = vmatpush1.msra.mxu0 0.0
    %3391 = vmatprep.subr.mxu0 0.0
    %3392 = vmatpush1.msra.mxu0 0.0
    %3393 = vmatprep.mubr.f32.mxu0 0.0
    %3394 = vmatmul.mubr.f32.gmra.mrb[0].mxu0 %v3321
    %v3395 = vpop.f32.mrb[0].mxu0
    %v3396 = vadd.f32 0.0, %v3395
    %v3397 = vpop.f32.mrb[0].mxu0
    %3398 = vmatprep.mubr.f32.mxu0 0.0
    %3399 = vmatmul.mubr.f32.gmra.mrb[0].mxu0 %v3324
    %v3400 = vpop.f32.mrb[0].mxu0
    %v3401 = vadd.f32 0.0, %v3400
    %v3402 = vpop.f32.mrb[0].mxu0
    %3403 = vmatprep.mubr.f32.mxu0 0.0
    %3404 = vmatmul.mubr.f32.gmra.mrb[0].mxu0 %v3327
    %v3405 = vpop.f32.mrb[0].mxu0
    %v3406 = vadd.f32 0.0, %v3405
    %v3407 = vpop.f32.mrb[0].mxu0
    %3408 = vdwg.mxu0
    %3409 = vmatprep.subr.mxu0 0.0
    %3410 = vmatpush1.msra.mxu0 %v2528
    %3411 = vmatprep.subr.mxu0 0.0
    %3412 = vmatpush1.msra.mxu0 %v2529
    %3413 = vmatprep.subr.mxu0 0.0
    %3414 = vmatpush1.msra.mxu0 %v2530
    %3415 = vmatprep.subr.mxu0 0.0
    %3416 = vmatpush1.msra.mxu0 %v2531
    %3417 = vmatprep.subr.mxu0 0.0
    %3418 = vmatpush1.msra.mxu0 0.0
    %3419 = vmatprep.subr.mxu0 0.0
    %3420 = vmatpush1.msra.mxu0 0.0
    %3421 = vmatprep.subr.mxu0 0.0
    %3422 = vmatpush1.msra.mxu0 0.0
    %3423 = vmatprep.subr.mxu0 0.0
    %3424 = vmatpush1.msra.mxu0 0.0
    %3425 = vmatprep.subr.mxu0 0.0
    %3426 = vmatpush1.msra.mxu0 0.0
    %3427 = vmatprep.subr.mxu0 0.0
    %3428 = vmatpush1.msra.mxu0 0.0
    %3429 = vmatprep.subr.mxu0 0.0
    %3430 = vmatpush1.msra.mxu0 0.0
    %3431 = vmatprep.subr.mxu0 0.0
    %3432 = vmatpush1.msra.mxu0 0.0
    %3433 = vmatprep.subr.mxu0 0.0
    %3434 = vmatpush1.msra.mxu0 0.0
    %3435 = vmatprep.subr.mxu0 0.0
    %3436 = vmatpush1.msra.mxu0 0.0
    %3437 = vmatprep.subr.mxu0 0.0
    %3438 = vmatpush1.msra.mxu0 0.0
    %3439 = vmatprep.subr.mxu0 0.0
    %3440 = vmatpush1.msra.mxu0 0.0
    %3441 = vmatprep.subr.mxu0 0.0
    %3442 = vmatpush1.msra.mxu0 0.0
    %3443 = vmatprep.subr.mxu0 0.0
    %3444 = vmatpush1.msra.mxu0 0.0
    %3445 = vmatprep.subr.mxu0 0.0
    %3446 = vmatpush1.msra.mxu0 0.0
    %3447 = vmatprep.subr.mxu0 0.0
    %3448 = vmatpush1.msra.mxu0 0.0
    %3449 = vmatprep.subr.mxu0 0.0
    %3450 = vmatpush1.msra.mxu0 0.0
    %3451 = vmatprep.subr.mxu0 0.0
    %3452 = vmatpush1.msra.mxu0 0.0
    %3453 = vmatprep.subr.mxu0 0.0
    %3454 = vmatpush1.msra.mxu0 0.0
    %3455 = vmatprep.subr.mxu0 0.0
    %3456 = vmatpush1.msra.mxu0 0.0
    %3457 = vmatprep.subr.mxu0 0.0
    %3458 = vmatpush1.msra.mxu0 0.0
    %3459 = vmatprep.subr.mxu0 0.0
    %3460 = vmatpush1.msra.mxu0 0.0
    %3461 = vmatprep.subr.mxu0 0.0
    %3462 = vmatpush1.msra.mxu0 0.0
    %3463 = vmatprep.subr.mxu0 0.0
    %3464 = vmatpush1.msra.mxu0 0.0
    %3465 = vmatprep.subr.mxu0 0.0
    %3466 = vmatpush1.msra.mxu0 0.0
    %3467 = vmatprep.subr.mxu0 0.0
    %3468 = vmatpush1.msra.mxu0 0.0
    %3469 = vmatprep.subr.mxu0 0.0
    %3470 = vmatpush1.msra.mxu0 0.0
    %3471 = vmatprep.subr.mxu0 0.0
    %3472 = vmatpush1.msra.mxu0 0.0
    %3473 = vmatprep.mubr.f32.mxu0 0.0
    %3474 = vmatmul.mubr.f32.gmra.mrb[0].mxu0 %v2627
    %v3475 = vpop.f32.mrb[0].mxu0
    %v3476 = vadd.f32 %v3396, %v3475
    %v3477 = vpop.f32.mrb[0].mxu0
    %3478 = vmatprep.mubr.f32.mxu0 0.0
    %3479 = vmatmul.mubr.f32.gmra.mrb[0].mxu0 %v2630
    %v3480 = vpop.f32.mrb[0].mxu0
    %v3481 = vadd.f32 %v3401, %v3480
    %v3482 = vpop.f32.mrb[0].mxu0
    %3483 = vmatprep.mubr.f32.mxu0 0.0
    %3484 = vmatmul.mubr.f32.gmra.mrb[0].mxu0 %v2633
    %v3485 = vpop.f32.mrb[0].mxu0
    %v3486 = vadd.f32 %v3406, %v3485
    %v3487 = vpop.f32.mrb[0].mxu0
    %3488 = vdwg.mxu0
    %v3489 = vadd.f32 %v3476, %v2719
    %v3490 = vadd.f32 %v3481, %v2719
    %v3491 = vadd.f32 %v3486, %v2719
    %v3492 = vsel %vm2724, %v3489, -inf
    %3493 = vmax.xlane.f32.xlu0 %v3492
    %v3494 = vpop.xlane.xlu0 %3493
    %v3495 = vsel %vm2724, %v3490, -inf
    %3496 = vmax.xlane.f32.xlu0 %v3495
    %v3497 = vpop.xlane.xlu0 %3496
    %v3498 = vsel %vm2731, %v3491, -inf
    %3499 = vmax.xlane.f32.xlu0 %v3498
    %v3500 = vpop.xlane.xlu0 %3499
    %v3501 = vsub.f32 %v3489, %v3494
    %v3502 = vsub.f32 %v3490, %v3497
    %v3503 = vsub.f32 %v3491, %v3500
    %v3504 = vmul.f32 %v3501, 1.442695
    %v3505 = vpow.pop %v3504
    %v3506 = vmul.f32 %v3502, 1.442695
    %v3507 = vpow.pop %v3506
    %v3508 = vmul.f32 %v3503, 1.442695
    %v3509 = vpow.pop %v3508
    %v3510 = vsel %vm2724, %v3505, 0.0
    %3511 = vadd.xlane.f32.xlu0 %v3510
    %v3512 = vpop.xlane.xlu0 %3511
    %v3513 = vsel %vm2724, %v3507, 0.0
    %3514 = vadd.xlane.f32.xlu0 %v3513
    %v3515 = vpop.xlane.xlu0 %3514
    %v3516 = vsel %vm2731, %v3509, 0.0
    %3517 = vadd.xlane.f32.xlu0 %v3516
    %v3518 = vpop.xlane.xlu0 %3517
    %v3519 = vlog2.pop %v3512
    %v3520 = vmul.f32 %v3519, 0.6931472
    %v3521 = vlog2.pop %v3515
    %v3522 = vmul.f32 %v3521, 0.6931472
    %v3523 = vlog2.pop %v3518
    %v3524 = vmul.f32 %v3523, 0.6931472
    %v3525 = vsub.f32 %v3501, %v3520
    %v3526 = vsub.f32 %v3502, %v3522
    %v3527 = vsub.f32 %v3503, %v3524
    %v3528 = vld [vmem:[%s65] sm:$0xff]
    %v3529 = vld [vmem:[%s65 + $0x8] sm:$0xff]
    %v3530 = vld [vmem:[%s65 + $0x10] sm:$0xf]
    %v3531 = vmul.f32 %v3528, %v3525
    %v3532 = vmul.f32 %v3529, %v3526
    %v3533 = vmul.f32 %v3530, %v3527
    %v3534 = vsel %vm2724, %v3531, 0.0
    %3535 = vadd.xlane.f32.xlu0 %v3534
    %v3536 = vpop.xlane.xlu0 %3535
    %v3537 = vsel %vm2724, %v3532, 0.0
    %3538 = vadd.xlane.f32.xlu0 %v3537
    %v3539 = vpop.xlane.xlu0 %3538
    %v3540 = vsel %vm2731, %v3533, 0.0
    %3541 = vadd.xlane.f32.xlu0 %v3540
    %v3542 = vpop.xlane.xlu0 %3541
    %v3543 = vsub.f32 0.0, %v3536
    %v3544 = vsub.f32 0.0, %v3539
    %v3545 = vsub.f32 0.0, %v3542
    %v3546 = vadd.f32 %v3543, %v3544
    %v3547 = vsel %vm2508, %v3545, 0.0
    %v3548 = vadd.f32 %v3546, %v3547
    %v3549 = vrot.slane %v3548, 4
    %v3550 = vadd.f32 %v3548, %v3549
    %v3551 = vrot.slane %v3550, 2
    %v3552 = vadd.f32 %v3550, %v3551
    %v3553 = vrot.slane %v3552, 1
    %v3554 = vadd.f32 %v3552, %v3553
    %v3555 = vadd.f32 %v3319, %v3554
    %3556 = vmatprep.subr.mxu0 0.0
    %3557 = vmatpush1.msra.mxu0 %v2528
    %3558 = vmatprep.subr.mxu0 0.0
    %3559 = vmatpush1.msra.mxu0 %v2529
    %3560 = vmatprep.subr.mxu0 0.0
    %3561 = vmatpush1.msra.mxu0 %v2530
    %3562 = vmatprep.subr.mxu0 0.0
    %3563 = vmatpush1.msra.mxu0 %v2531
    %3564 = vmatprep.subr.mxu0 0.0
    %3565 = vmatpush1.msra.mxu0 0.0
    %3566 = vmatprep.subr.mxu0 0.0
    %3567 = vmatpush1.msra.mxu0 0.0
    %3568 = vmatprep.subr.mxu0 0.0
    %3569 = vmatpush1.msra.mxu0 0.0
    %3570 = vmatprep.subr.mxu0 0.0
    %3571 = vmatpush1.msra.mxu0 0.0
    %3572 = vmatprep.subr.mxu0 0.0
    %3573 = vmatpush1.msra.mxu0 0.0
    %3574 = vmatprep.subr.mxu0 0.0
    %3575 = vmatpush1.msra.mxu0 0.0
    %3576 = vmatprep.subr.mxu0 0.0
    %3577 = vmatpush1.msra.mxu0 0.0
    %3578 = vmatprep.subr.mxu0 0.0
    %3579 = vmatpush1.msra.mxu0 0.0
    %3580 = vmatprep.subr.mxu0 0.0
    %3581 = vmatpush1.msra.mxu0 0.0
    %3582 = vmatprep.subr.mxu0 0.0
    %3583 = vmatpush1.msra.mxu0 0.0
    %3584 = vmatprep.subr.mxu0 0.0
    %3585 = vmatpush1.msra.mxu0 0.0
    %3586 = vmatprep.subr.mxu0 0.0
    %3587 = vmatpush1.msra.mxu0 0.0
    %3588 = vmatprep.subr.mxu0 0.0
    %3589 = vmatpush1.msra.mxu0 0.0
    %3590 = vmatprep.subr.mxu0 0.0
    %3591 = vmatpush1.msra.mxu0 0.0
    %3592 = vmatprep.subr.mxu0 0.0
    %3593 = vmatpush1.msra.mxu0 0.0
    %3594 = vmatprep.subr.mxu0 0.0
    %3595 = vmatpush1.msra.mxu0 0.0
    %3596 = vmatprep.subr.mxu0 0.0
    %3597 = vmatpush1.msra.mxu0 0.0
    %3598 = vmatprep.subr.mxu0 0.0
    %3599 = vmatpush1.msra.mxu0 0.0
    %3600 = vmatprep.subr.mxu0 0.0
    %3601 = vmatpush1.msra.mxu0 0.0
    %3602 = vmatprep.subr.mxu0 0.0
    %3603 = vmatpush1.msra.mxu0 0.0
    %3604 = vmatprep.subr.mxu0 0.0
    %3605 = vmatpush1.msra.mxu0 0.0
    %3606 = vmatprep.subr.mxu0 0.0
    %3607 = vmatpush1.msra.mxu0 0.0
    %3608 = vmatprep.subr.mxu0 0.0
    %3609 = vmatpush1.msra.mxu0 0.0
    %3610 = vmatprep.subr.mxu0 0.0
    %3611 = vmatpush1.msra.mxu0 0.0
    %3612 = vmatprep.subr.mxu0 0.0
    %3613 = vmatpush1.msra.mxu0 0.0
    %3614 = vmatprep.subr.mxu0 0.0
    %3615 = vmatpush1.msra.mxu0 0.0
    %3616 = vmatprep.subr.mxu0 0.0
    %3617 = vmatpush1.msra.mxu0 0.0
    %3618 = vmatprep.subr.mxu0 0.0
    %3619 = vmatpush1.msra.mxu0 0.0
    %3620 = vmatprep.mubr.f32.mxu0 0.0
    %3621 = vmatmul.mubr.f32.gmra.mrb[0].mxu0 %v2538
    %v3622 = vpop.f32.mrb[0].mxu0
    %v3623 = vadd.f32 %v3396, %v3622
    %v3624 = vpop.f32.mrb[0].mxu0
    %3625 = vmatprep.mubr.f32.mxu0 0.0
    %3626 = vmatmul.mubr.f32.gmra.mrb[0].mxu0 %v2541
    %v3627 = vpop.f32.mrb[0].mxu0
    %v3628 = vadd.f32 %v3401, %v3627
    %v3629 = vpop.f32.mrb[0].mxu0
    %3630 = vmatprep.mubr.f32.mxu0 0.0
    %3631 = vmatmul.mubr.f32.gmra.mrb[0].mxu0 %v2544
    %v3632 = vpop.f32.mrb[0].mxu0
    %v3633 = vadd.f32 %v3406, %v3632
    %v3634 = vpop.f32.mrb[0].mxu0
    %3635 = vdwg.mxu0
    %v3636 = vadd.f32 %v3623, %v2719
    %v3637 = vadd.f32 %v3628, %v2719
    %v3638 = vadd.f32 %v3633, %v2719
    %v3639 = vsel %vm2724, %v3636, -inf
    %3640 = vmax.xlane.f32.xlu0 %v3639
    %v3641 = vpop.xlane.xlu0 %3640
    %v3642 = vsel %vm2724, %v3637, -inf
    %3643 = vmax.xlane.f32.xlu0 %v3642
    %v3644 = vpop.xlane.xlu0 %3643
    %v3645 = vsel %vm2731, %v3638, -inf
    %3646 = vmax.xlane.f32.xlu0 %v3645
    %v3647 = vpop.xlane.xlu0 %3646
    %v3648 = vsub.f32 %v3636, %v3641
    %v3649 = vsub.f32 %v3637, %v3644
    %v3650 = vsub.f32 %v3638, %v3647
    %v3651 = vmul.f32 %v3648, 1.442695
    %v3652 = vpow.pop %v3651
    %v3653 = vmul.f32 %v3649, 1.442695
    %v3654 = vpow.pop %v3653
    %v3655 = vmul.f32 %v3650, 1.442695
    %v3656 = vpow.pop %v3655
    %v3657 = vsel %vm2724, %v3652, 0.0
    %3658 = vadd.xlane.f32.xlu0 %v3657
    %v3659 = vpop.xlane.xlu0 %3658
    %v3660 = vsel %vm2724, %v3654, 0.0
    %3661 = vadd.xlane.f32.xlu0 %v3660
    %v3662 = vpop.xlane.xlu0 %3661
    %v3663 = vsel %vm2731, %v3656, 0.0
    %3664 = vadd.xlane.f32.xlu0 %v3663
    %v3665 = vpop.xlane.xlu0 %3664
    %v3666 = vlog2.pop %v3659
    %v3667 = vmul.f32 %v3666, 0.6931472
    %v3668 = vlog2.pop %v3662
    %v3669 = vmul.f32 %v3668, 0.6931472
    %v3670 = vlog2.pop %v3665
    %v3671 = vmul.f32 %v3670, 0.6931472
    %v3672 = vsub.f32 %v3648, %v3667
    %v3673 = vsub.f32 %v3649, %v3669
    %v3674 = vsub.f32 %v3650, %v3671
    %v3675 = vld [vmem:[%s67] sm:$0xff]
    %v3676 = vld [vmem:[%s67 + $0x8] sm:$0xff]
    %v3677 = vld [vmem:[%s67 + $0x10] sm:$0xf]
    %v3678 = vmul.f32 %v3675, %v3672
    %v3679 = vmul.f32 %v3676, %v3673
    %v3680 = vmul.f32 %v3677, %v3674
    %v3681 = vsel %vm2724, %v3678, 0.0
    %3682 = vadd.xlane.f32.xlu0 %v3681
    %v3683 = vpop.xlane.xlu0 %3682
    %v3684 = vsel %vm2724, %v3679, 0.0
    %3685 = vadd.xlane.f32.xlu0 %v3684
    %v3686 = vpop.xlane.xlu0 %3685
    %v3687 = vsel %vm2731, %v3680, 0.0
    %3688 = vadd.xlane.f32.xlu0 %v3687
    %v3689 = vpop.xlane.xlu0 %3688
    %v3690 = vsub.f32 0.0, %v3683
    %v3691 = vsub.f32 0.0, %v3686
    %v3692 = vsub.f32 0.0, %v3689
    %v3693 = vadd.f32 %v3690, %v3691
    %v3694 = vsel %vm2508, %v3692, 0.0
    %v3695 = vadd.f32 %v3693, %v3694
    %v3696 = vrot.slane %v3695, 4
    %v3697 = vadd.f32 %v3695, %v3696
    %v3698 = vrot.slane %v3697, 2
    %v3699 = vadd.f32 %v3697, %v3698
    %v3700 = vrot.slane %v3699, 1
    %v3701 = vadd.f32 %v3699, %v3700
    %v3702 = vadd.f32 %v3555, %v3701
    %v3703 = vrcp.pop 108.0
    %v3704 = vmul.f32 %v3702, %v3703
    %v3705 = vadd.f32 %v2518, %v2527
    %v3706 = vadd.f32 %v3704, %v3705
    %vm3707 = vcmask 0
    %3708 = vst.msk [vmem:[#allocation2] sm:$0x1] %vm3707, %v3706
    // Predicated region
    $region138: #{sgcn_forward.1} parent=1 // pred_check
      _
    $region139: #{sgcn_forward.1} parent=1 // pred_check_branch
      %3710 = sbr.rel (0) target = $region141
    $region140: #{sgcn_forward.1} parent=1 // pred_region
      %s3712 = ssub.s32 16, 16
      %3713 = vsyncadd [#allocation3], %s3712
      %s3715 = sshll.u32 [#allocation2], 4
      %s3716 = int_to_ptr.vmem [resolvable:$true] %s3715
      %3718 = dma.vmem_to_hbm [thread:$0]  %s3716, 16, %s69, [#allocation3]
    $region141: #{sgcn_forward.1} parent=1 // pred_fallthru
      _
    // Predicated region
    $region142: #{sgcn_forward.1} parent=1 // pred_check
      _
    $region143: #{sgcn_forward.1} parent=1 // pred_check_branch
      %3720 = sbr.rel (0) target = $region145
    $region144: #{sgcn_forward.1} parent=1 // pred_region
      %s3722 = ssub.s32 512, 512
      %3723 = vsyncadd [#allocation5], %s3722
      %s3724 = sshll.u32 [#allocation4], 4
      %s3725 = int_to_ptr.vmem [resolvable:$true] %s3724
      %3730 = dma.vmem_to_hbm [thread:$0]  %s3725, 512, %s71, [#allocation5], 128, 128, 8
    $region145: #{sgcn_forward.1} parent=1 // pred_fallthru
      _
    // Predicated region
    $region146: #{sgcn_forward.1} parent=1 // pred_check
      _
    $region147: #{sgcn_forward.1} parent=1 // pred_check_branch
      %3732 = sbr.rel (0) target = $region149
    $region148: #{sgcn_forward.1} parent=1 // pred_region
      %3733 = dma.done [#allocation3], 16
    $region149: #{sgcn_forward.1} parent=1 // pred_fallthru
      _
    // Predicated region
    $region150: #{sgcn_forward.1} parent=1 // pred_check
      _
    $region151: #{sgcn_forward.1} parent=1 // pred_check_branch
      %3735 = sbr.rel (0) target = $region153
    $region152: #{sgcn_forward.1} parent=1 // pred_region
      %3736 = dma.done [#allocation5], 512
    $region153: #{sgcn_forward.1} parent=1 // pred_fallthru
      _
    %3737 = vsyncpa [#allocation3], 1
    %3738 = vsyncpa [#allocation5], 1

</llo_original>
